<compile_context>
chip_gen: v7x
topology: tpu7x:2x2x1
jax: 0.10.0
libtpu: 0.0.40
codegen_flags: <defaults>
</compile_context>

<pallas_src>
import jax
import jax.numpy as jnp
from jax.experimental import pallas as pl
from jax.experimental.pallas import tpu as pltpu

_EPS = 1e-5
_LANE = 128


# ----------------------------------------------------------------------------- kernel
def _down_kernel(x4_ref, w1_ref, b1_ref, w2_ref, b2_ref, w3_ref, b3_ref,
                 ws_ref, bs_ref, g1_ref, be1_ref, g2_ref, be2_ref,
                 g3_ref, be3_ref, gs_ref, bes_ref, o_ref, pad_ref, slab_ref):
    """x4_ref : (4, M2, Ci) bf16   t-th element of every 2x2 window, pixel-major
       w2_ref : (9*Cm, Cm) bf16    fused 3x3 taps, row block t = di*3 + dj
       o_ref  : (M2, Co)   f32
       pad_ref: (N, H2+2, W2+2, Cm) f32 scratch (zero border + conv2 input interior)
       slab_ref: (M2, 9*Cm) bf16 im2col slab."""
    f32, bf16 = jnp.float32, jnp.bfloat16
    N, Hp, Wp, Cm = pad_ref.shape
    H2, W2 = Hp - 2, Wp - 2
    M2 = N * H2 * W2

    def bn(h, g_ref, b_ref):                       # training-mode BatchNorm2d
        mu = jnp.mean(h, axis=0, keepdims=True)
        var = jnp.mean(jnp.square(h - mu), axis=0, keepdims=True)
        return (h - mu) * jax.lax.rsqrt(var + _EPS) * g_ref[...] + b_ref[...]

    def mm(a_bf, w_ref, b_ref):                    # bf16 x bf16 matmul, f32 accumulate
        return jnp.dot(a_bf, w_ref[...], preferred_element_type=f32) + b_ref[...]

    # bilinear x0.5 == exact 2x2 average for even H, W; commuted ahead of the two
    # 1x1 convs (exact: per-pixel affine map commutes with spatial averaging).
    xd = 0.25 * (x4_ref[0].astype(f32) + x4_ref[1].astype(f32)
                 + x4_ref[2].astype(f32) + x4_ref[3].astype(f32))     # (M2, Ci) f32
    xd_bf = xd.astype(bf16)

    # ---- seq1: conv1 (1x1) -> bn1 -> relu -----------------------------------------
    h = jnp.maximum(bn(mm(xd_bf, w1_ref, b1_ref), g1_ref, be1_ref), 0.0)   # (M2, Cm)

    # ---- conv2: 3x3, padding=1, as one fused im2col matmul --------------------------
    # Zero only the 1-pixel border; the interior is fully overwritten every call, so
    # no stale scratch data can leak.
    pad_ref[:, 0:1, :, :] = jnp.zeros((N, 1, Wp, Cm), f32)
    pad_ref[:, Hp - 1:Hp, :, :] = jnp.zeros((N, 1, Wp, Cm), f32)
    pad_ref[:, 1:Hp - 1, 0:1, :] = jnp.zeros((N, H2, 1, Cm), f32)
    pad_ref[:, 1:Hp - 1, Wp - 1:Wp, :] = jnp.zeros((N, H2, 1, Cm), f32)
    pad_ref[:, 1:Hp - 1, 1:Wp - 1, :] = h.reshape(N, H2, W2, Cm)
    taps = [(di, dj) for di in range(3) for dj in range(3)]
    for t, (di, dj) in enumerate(taps):
        win = pad_ref[:, di:di + H2, dj:dj + W2, :].reshape(M2, Cm)
        slab_ref[:, t * Cm:(t + 1) * Cm] = win.astype(bf16)
    h = jnp.maximum(bn(mm(slab_ref[...], w2_ref, b2_ref), g2_ref, be2_ref), 0.0)

    # ---- conv3 (1x1) -> bn3 ----------------------------------------------------------
    h = bn(mm(h.astype(bf16), w3_ref, b3_ref), g3_ref, be3_ref)            # (M2, Co)

    # ---- shortcut: conv_ (1x1) on the pooled input -> bn_ ---------------------------
    s = bn(mm(xd_bf, ws_ref, bs_ref), gs_ref, bes_ref)                     # (M2, Co)

    # ---- residual add + relu (lane-dense (M2, Co) store) ----------------------------
    o_ref[...] = jnp.maximum(h + s, 0.0)


# ----------------------------------------------------------------------------- glue
def _rup(n, m):
    return ((n + m - 1) // m) * m


def _pad_to(a, shape):
    return jnp.pad(a, [(0, t - s) for s, t in zip(a.shape, shape)])


def down_forward(x_nchw, p):
    """Pallas implementation of Down(in_ch, out_ch).forward; x_nchw: (N, Cin, H, W) f32."""
    N, Cin, H, W = x_nchw.shape
    assert H % 2 == 0 and W % 2 == 0, "bilinear x0.5 == 2x2 average only for even H, W"
    H2, W2 = H // 2, W // 2
    M2 = N * H2 * W2
    Cn = p["w1"].shape[1]
    Cout = p["w3"].shape[1]
    Ci, Cm, Co = _rup(Cin, _LANE), _rup(Cn, _LANE), _rup(Cout, _LANE)
    bf16, f32 = jnp.bfloat16, jnp.float32

    # Window-major layout: x4[t] = t-th element of every 2x2 window, flattened to
    # (out_pixels, Cin) and lane-padded to Ci.  This is layout plumbing only -- the
    # 0.25 * (sum of 4) average itself is computed inside the kernel.
    xq = jnp.transpose(x_nchw, (0, 2, 3, 1)).astype(bf16)            # (N, H, W, Cin)
    quads = [xq[:, di::2, dj::2, :].reshape(M2, Cin)
             for di in (0, 1) for dj in (0, 1)]
    x4 = _pad_to(jnp.stack(quads, axis=0), (4, M2, Ci))              # (4, M2, Ci) bf16

    # Weights: zero-padded to lane multiples, bf16.  w2 is fused for the im2col matmul
    # (rows [t*Cm:(t+1)*Cm] hold the padded (Cn, Cn) tap t = di*3 + dj).
    w1 = _pad_to(p["w1"], (Ci, Cm)).astype(bf16)
    w2 = jnp.concatenate([_pad_to(p["w2"][t], (Cm, Cm)) for t in range(9)],
                         axis=0).astype(bf16)                         # (9*Cm, Cm)
    w3 = _pad_to(p["w3"], (Cm, Co)).astype(bf16)
    ws = _pad_to(p["ws"], (Ci, Co)).astype(bf16)

    padv = lambda a, c: _pad_to(a, (1, c)).astype(f32)                # biases / BN params
    b1, g1, be1 = padv(p["b1"], Cm), padv(p["g1"], Cm), padv(p["be1"], Cm)
    b2, g2, be2 = padv(p["b2"], Cm), padv(p["g2"], Cm), padv(p["be2"], Cm)
    b3, g3, be3 = padv(p["b3"], Co), padv(p["g3"], Co), padv(p["be3"], Co)
    bs, gs, bes = padv(p["bs"], Co), padv(p["gs"], Co), padv(p["bes"], Co)

    args = (x4, w1, b1, w2, b2, w3, b3, ws, bs,
            g1, be1, g2, be2, g3, be3, gs, bes)

    vmem = lambda: pl.BlockSpec(memory_space=pltpu.MemorySpace.VMEM)
    out_flat = pl.pallas_call(
        _down_kernel,
        out_shape=jax.ShapeDtypeStruct((M2, Co), f32),
        in_specs=[vmem() for _ in args],
        out_specs=vmem(),
        scratch_shapes=[
            pltpu.VMEM((N, H2 + 2, W2 + 2, Cm), f32),   # zero-bordered map for conv2
            pltpu.VMEM((M2, 9 * Cm), bf16),             # im2col slab
        ],
        compiler_params=pltpu.CompilerParams(vmem_limit_bytes=32 * 1024 * 1024),
    )(*args)

    out = out_flat[:, :Cout].reshape(N, H2, W2, Cout)
    return jnp.transpose(out, (0, 3, 1, 2))             # back to NCHW


# ----------------------------------------------------------------- params & reference
def init_params(key, in_ch, out_ch):
    cn = in_ch  # ResBlock(in_ch, in_ch, out_ch, True): neck channels == in channels
    ks = jax.random.split(key, 16)
    u = lambda k, shp, s=0.35: jax.random.uniform(k, shp, jnp.float32, -s, s)
    return dict(
        w1=u(ks[0], (in_ch, cn)),  b1=u(ks[1], (1, cn)),
        w2=u(ks[2], (9, cn, cn)),  b2=u(ks[3], (1, cn)),
        w3=u(ks[4], (cn, out_ch)), b3=u(ks[5], (1, out_ch)),
        ws=u(ks[6], (in_ch, out_ch)), bs=u(ks[7], (1, out_ch)),
        g1=1.0 + u(ks[8], (1, cn)),      be1=u(ks[9], (1, cn)),
        g2=1.0 + u(ks[10], (1, cn)),     be2=u(ks[11], (1, cn)),
        g3=1.0 + u(ks[12], (1, out_ch)), be3=u(ks[13], (1, out_ch)),
        gs=1.0 + u(ks[14], (1, out_ch)), bes=u(ks[15], (1, out_ch)),
    )


def ref_forward(x_nchw, p):
    """Pure-JAX mirror of the PyTorch Down.forward (NCHW) with the same matmul
    precision (bf16 operands, f32 accumulation).  The bilinear x0.5 downsample is
    applied before conv1 / conv_ instead of after; for 1x1 convs this reordering is
    mathematically exact (a per-pixel affine map commutes with the 2x2 average)."""
    bf16, f32 = jnp.bfloat16, jnp.float32
    Cin, Cn = p["w1"].shape
    Cout = p["w3"].shape[1]
    w1 = jnp.transpose(p["w1"]).reshape(Cn, Cin, 1, 1).astype(bf16)
    w2 = jnp.transpose(p["w2"].reshape(3, 3, Cn, Cn), (3, 2, 0, 1)).astype(bf16)
    w3 = jnp.transpose(p["w3"]).reshape(Cout, Cn, 1, 1).astype(bf16)
    ws = jnp.transpose(p["ws"]).reshape(Cout, Cin, 1, 1).astype(bf16)

    def conv(h, w, b, pad):
        y = jax.lax.conv_general_dilated(
            h.astype(bf16), w, window_strides=(1, 1),
            padding=[(pad, pad), (pad, pad)],
            dimension_numbers=("NCHW", "OIHW", "NCHW"),
            preferred_element_type=f32)
        return y + b.reshape(1, -1, 1, 1)

    def bn(h, g, b):
        mu = jnp.mean(h, axis=(0, 2, 3), keepdims=True)
        var = jnp.mean(jnp.square(h - mu), axis=(0, 2, 3), keepdims=True)
        return ((h - mu) * jax.lax.rsqrt(var + _EPS) * g.reshape(1, -1, 1, 1)
                + b.reshape(1, -1, 1, 1))

    relu = lambda t: jnp.maximum(t, 0.0)

    # bilinear 0.5 (align_corners=False, even dims) == 2x2 average, commuted before
    # the 1x1 convs; same bf16 input quantization and summation order as the kernel.
    xq = x_nchw.astype(bf16).astype(f32)
    xd = 0.25 * (xq[:, :, 0::2, 0::2] + xq[:, :, 0::2, 1::2]
                 + xq[:, :, 1::2, 0::2] + xq[:, :, 1::2, 1::2])

    h = conv(xd, w1, p["b1"].reshape(-1), 0)
    h = relu(bn(h, p["g1"].reshape(-1), p["be1"].reshape(-1)))
    h = conv(h, w2, p["b2"].reshape(-1), 1)
    h = relu(bn(h, p["g2"].reshape(-1), p["be2"].reshape(-1)))
    h = conv(h, w3, p["b3"].reshape(-1), 0)
    h = bn(h, p["g3"].reshape(-1), p["be3"].reshape(-1))

    s = conv(xd, ws, p["bs"].reshape(-1), 0)
    s = bn(s, p["gs"].reshape(-1), p["bes"].reshape(-1))
    return relu(h + s)


# ------------------------------------------------------------------------------ main
if __name__ == "__main__":
    N, IN_CH, OUT_CH, H, W = 2, 4, 8, 16, 16
    key = jax.random.PRNGKey(0)
    kx, kp = jax.random.split(key)
    x = jax.random.normal(kx, (N, IN_CH, H, W), jnp.float32)
    params = init_params(kp, IN_CH, OUT_CH)

    out = jax.block_until_ready(down_forward(x, params))
    assert out.shape == (N, OUT_CH, H // 2, W // 2), out.shape

    ref = jax.block_until_ready(ref_forward(x, params))
    err = float(jnp.max(jnp.abs(out - ref)))
    # Tolerance sized for bf16 matmul operands re-quantized between layers (1 bf16 ulp
    # ~ 0.4% relative) and amplified by training-mode BatchNorm normalization.
    if err < 2e-2:
        print("KERNEL_OK")
    else:
        print(f"numerical mismatch: max_abs_err={err}")
</pallas_src>

<mosaic_0001>
module attributes {stable_mosaic.version = 11 : i64} {
  func.func @_down_kernel(%arg0: memref<4x128x128xbf16, #tpu.memory_space<vmem>>, %arg1: memref<128x128xbf16, #tpu.memory_space<vmem>>, %arg2: memref<1x128xf32, #tpu.memory_space<vmem>>, %arg3: memref<1152x128xbf16, #tpu.memory_space<vmem>>, %arg4: memref<1x128xf32, #tpu.memory_space<vmem>>, %arg5: memref<128x128xbf16, #tpu.memory_space<vmem>>, %arg6: memref<1x128xf32, #tpu.memory_space<vmem>>, %arg7: memref<128x128xbf16, #tpu.memory_space<vmem>>, %arg8: memref<1x128xf32, #tpu.memory_space<vmem>>, %arg9: memref<1x128xf32, #tpu.memory_space<vmem>>, %arg10: memref<1x128xf32, #tpu.memory_space<vmem>>, %arg11: memref<1x128xf32, #tpu.memory_space<vmem>>, %arg12: memref<1x128xf32, #tpu.memory_space<vmem>>, %arg13: memref<1x128xf32, #tpu.memory_space<vmem>>, %arg14: memref<1x128xf32, #tpu.memory_space<vmem>>, %arg15: memref<1x128xf32, #tpu.memory_space<vmem>>, %arg16: memref<1x128xf32, #tpu.memory_space<vmem>>, %arg17: memref<128x128xf32, #tpu.memory_space<vmem>>, %arg18: memref<2x10x10x128xf32, #tpu.memory_space<vmem>>, %arg19: memref<128x1152xbf16, #tpu.memory_space<vmem>>) attributes {dimension_semantics = [], scalar_prefetch = 0 : i64, scratch_operands = 2 : i64, tpu.core_type = #tpu.core_type<tc>} {
    %c0 = arith.constant 0 : index
    %c0_0 = arith.constant 0 : index
    %c0_1 = arith.constant 0 : index
    %0 = vector.load %arg0[%c0, %c0_0, %c0_1] : memref<4x128x128xbf16, #tpu.memory_space<vmem>>, vector<1x128x128xbf16>
    %1 = vector.shape_cast %0 : vector<1x128x128xbf16> to vector<128x128xbf16>
    %2 = arith.extf %1 : vector<128x128xbf16> to vector<128x128xf32>
    %c1 = arith.constant 1 : index
    %c0_2 = arith.constant 0 : index
    %c0_3 = arith.constant 0 : index
    %3 = vector.load %arg0[%c1, %c0_2, %c0_3] : memref<4x128x128xbf16, #tpu.memory_space<vmem>>, vector<1x128x128xbf16>
    %4 = vector.shape_cast %3 : vector<1x128x128xbf16> to vector<128x128xbf16>
    %5 = arith.extf %4 : vector<128x128xbf16> to vector<128x128xf32>
    %6 = arith.addf %2, %5 : vector<128x128xf32>
    %c2 = arith.constant 2 : index
    %c0_4 = arith.constant 0 : index
    %c0_5 = arith.constant 0 : index
    %7 = vector.load %arg0[%c2, %c0_4, %c0_5] : memref<4x128x128xbf16, #tpu.memory_space<vmem>>, vector<1x128x128xbf16>
    %8 = vector.shape_cast %7 : vector<1x128x128xbf16> to vector<128x128xbf16>
    %9 = arith.extf %8 : vector<128x128xbf16> to vector<128x128xf32>
    %10 = arith.addf %6, %9 : vector<128x128xf32>
    %c3 = arith.constant 3 : index
    %c0_6 = arith.constant 0 : index
    %c0_7 = arith.constant 0 : index
    %11 = vector.load %arg0[%c3, %c0_6, %c0_7] : memref<4x128x128xbf16, #tpu.memory_space<vmem>>, vector<1x128x128xbf16>
    %12 = vector.shape_cast %11 : vector<1x128x128xbf16> to vector<128x128xbf16>
    %13 = arith.extf %12 : vector<128x128xbf16> to vector<128x128xf32>
    %14 = arith.addf %10, %13 : vector<128x128xf32>
    %cst = arith.constant 2.500000e-01 : f32
    %15 = vector.broadcast %cst : f32 to vector<128x128xf32>
    %16 = arith.mulf %15, %14 : vector<128x128xf32>
    %17 = arith.truncf %16 : vector<128x128xf32> to vector<128x128xbf16>
    %c0_8 = arith.constant 0 : index
    %c0_9 = arith.constant 0 : index
    %18 = vector.load %arg1[%c0_8, %c0_9] : memref<128x128xbf16, #tpu.memory_space<vmem>>, vector<128x128xbf16>
    %cst_10 = arith.constant dense<0.000000e+00> : vector<128x128xf32>
    %19 = tpu.matmul %17, %18, %cst_10 {dimension_numbers = #tpu.dot_dimension_numbers<[1], [0], [0], [1], [0, 0, 1, 1], [], []>} : vector<128x128xbf16>, vector<128x128xbf16>, vector<128x128xf32> -> vector<128x128xf32>
    %c0_11 = arith.constant 0 : index
    %c0_12 = arith.constant 0 : index
    %20 = vector.load %arg2[%c0_11, %c0_12] : memref<1x128xf32, #tpu.memory_space<vmem>>, vector<1x128xf32>
    %21 = vector.broadcast %20 : vector<1x128xf32> to vector<128x128xf32>
    %22 = arith.addf %19, %21 : vector<128x128xf32>
    %cst_13 = arith.constant dense<0.000000e+00> : vector<128xf32>
    %23 = vector.multi_reduction <add>, %22, %cst_13 [0] : vector<128x128xf32> to vector<128xf32>
    %24 = vector.shape_cast %23 : vector<128xf32> to vector<1x128xf32>
    %cst_14 = arith.constant 1.280000e+02 : f32
    %25 = vector.broadcast %cst_14 : f32 to vector<1x128xf32>
    %26 = arith.divf %24, %25 : vector<1x128xf32>
    %27 = vector.broadcast %26 : vector<1x128xf32> to vector<128x128xf32>
    %28 = arith.subf %22, %27 : vector<128x128xf32>
    %29 = arith.mulf %28, %28 : vector<128x128xf32>
    %cst_15 = arith.constant dense<0.000000e+00> : vector<128xf32>
    %30 = vector.multi_reduction <add>, %29, %cst_15 [0] : vector<128x128xf32> to vector<128xf32>
    %31 = vector.shape_cast %30 : vector<128xf32> to vector<1x128xf32>
    %cst_16 = arith.constant 1.280000e+02 : f32
    %32 = vector.broadcast %cst_16 : f32 to vector<1x128xf32>
    %33 = arith.divf %31, %32 : vector<1x128xf32>
    %34 = vector.broadcast %26 : vector<1x128xf32> to vector<128x128xf32>
    %35 = arith.subf %22, %34 : vector<128x128xf32>
    %cst_17 = arith.constant 9.99999974E-6 : f32
    %36 = vector.broadcast %cst_17 : f32 to vector<1x128xf32>
    %37 = arith.addf %33, %36 : vector<1x128xf32>
    %38 = math.rsqrt %37 : vector<1x128xf32>
    %39 = vector.broadcast %38 : vector<1x128xf32> to vector<128x128xf32>
    %40 = arith.mulf %35, %39 : vector<128x128xf32>
    %c0_18 = arith.constant 0 : index
    %c0_19 = arith.constant 0 : index
    %41 = vector.load %arg9[%c0_18, %c0_19] : memref<1x128xf32, #tpu.memory_space<vmem>>, vector<1x128xf32>
    %42 = vector.broadcast %41 : vector<1x128xf32> to vector<128x128xf32>
    %43 = arith.mulf %40, %42 : vector<128x128xf32>
    %c0_20 = arith.constant 0 : index
    %c0_21 = arith.constant 0 : index
    %44 = vector.load %arg10[%c0_20, %c0_21] : memref<1x128xf32, #tpu.memory_space<vmem>>, vector<1x128xf32>
    %45 = vector.broadcast %44 : vector<1x128xf32> to vector<128x128xf32>
    %46 = arith.addf %43, %45 : vector<128x128xf32>
    %cst_22 = arith.constant 0.000000e+00 : f32
    %47 = vector.broadcast %cst_22 : f32 to vector<128x128xf32>
    %48 = arith.maximumf %46, %47 : vector<128x128xf32>
    %cst_23 = arith.constant 0.000000e+00 : f32
    %49 = vector.broadcast %cst_23 : f32 to vector<2x1x10x128xf32>
    %c0_24 = arith.constant 0 : index
    %c0_25 = arith.constant 0 : index
    %c0_26 = arith.constant 0 : index
    %c0_27 = arith.constant 0 : index
    %50 = vector.load %arg18[%c0_24, %c0_25, %c0_26, %c0_27] : memref<2x10x10x128xf32, #tpu.memory_space<vmem>>, vector<2x1x10x128xf32>
    tpu.vector_store %arg18[%c0_24, %c0_25, %c0_26, %c0_27], %49 {strides = array<i32>} : memref<2x10x10x128xf32, #tpu.memory_space<vmem>>, vector<2x1x10x128xf32>,
    %cst_28 = arith.constant 0.000000e+00 : f32
    %51 = vector.broadcast %cst_28 : f32 to vector<2x1x10x128xf32>
    %c0_29 = arith.constant 0 : index
    %c9 = arith.constant 9 : index
    %c0_30 = arith.constant 0 : index
    %c0_31 = arith.constant 0 : index
    %52 = vector.load %arg18[%c0_29, %c9, %c0_30, %c0_31] : memref<2x10x10x128xf32, #tpu.memory_space<vmem>>, vector<2x1x10x128xf32>
    tpu.vector_store %arg18[%c0_29, %c9, %c0_30, %c0_31], %51 {strides = array<i32>} : memref<2x10x10x128xf32, #tpu.memory_space<vmem>>, vector<2x1x10x128xf32>,
    %cst_32 = arith.constant 0.000000e+00 : f32
    %53 = vector.broadcast %cst_32 : f32 to vector<2x8x1x128xf32>
    %c0_33 = arith.constant 0 : index
    %c1_34 = arith.constant 1 : index
    %c0_35 = arith.constant 0 : index
    %c0_36 = arith.constant 0 : index
    %54 = vector.load %arg18[%c0_33, %c1_34, %c0_35, %c0_36] : memref<2x10x10x128xf32, #tpu.memory_space<vmem>>, vector<2x8x1x128xf32>
    tpu.vector_store %arg18[%c0_33, %c1_34, %c0_35, %c0_36], %53 {strides = array<i32>} : memref<2x10x10x128xf32, #tpu.memory_space<vmem>>, vector<2x8x1x128xf32>,
    %cst_37 = arith.constant 0.000000e+00 : f32
    %55 = vector.broadcast %cst_37 : f32 to vector<2x8x1x128xf32>
    %c0_38 = arith.constant 0 : index
    %c1_39 = arith.constant 1 : index
    %c9_40 = arith.constant 9 : index
    %c0_41 = arith.constant 0 : index
    %56 = vector.load %arg18[%c0_38, %c1_39, %c9_40, %c0_41] : memref<2x10x10x128xf32, #tpu.memory_space<vmem>>, vector<2x8x1x128xf32>
    tpu.vector_store %arg18[%c0_38, %c1_39, %c9_40, %c0_41], %55 {strides = array<i32>} : memref<2x10x10x128xf32, #tpu.memory_space<vmem>>, vector<2x8x1x128xf32>,
    %57 = vector.shape_cast %48 : vector<128x128xf32> to vector<2x8x8x128xf32>
    %c0_42 = arith.constant 0 : index
    %c1_43 = arith.constant 1 : index
    %c1_44 = arith.constant 1 : index
    %c0_45 = arith.constant 0 : index
    %58 = vector.load %arg18[%c0_42, %c1_43, %c1_44, %c0_45] : memref<2x10x10x128xf32, #tpu.memory_space<vmem>>, vector<2x8x8x128xf32>
    tpu.vector_store %arg18[%c0_42, %c1_43, %c1_44, %c0_45], %57 {strides = array<i32>} : memref<2x10x10x128xf32, #tpu.memory_space<vmem>>, vector<2x8x8x128xf32>,
    %c0_46 = arith.constant 0 : index
    %c0_47 = arith.constant 0 : index
    %c0_48 = arith.constant 0 : index
    %c0_49 = arith.constant 0 : index
    %59 = vector.load %arg18[%c0_46, %c0_47, %c0_48, %c0_49] : memref<2x10x10x128xf32, #tpu.memory_space<vmem>>, vector<2x8x8x128xf32>
    %60 = vector.shape_cast %59 : vector<2x8x8x128xf32> to vector<128x128xf32>
    %61 = arith.truncf %60 : vector<128x128xf32> to vector<128x128xbf16>
    %c0_50 = arith.constant 0 : index
    %c0_51 = arith.constant 0 : index
    %62 = vector.load %arg19[%c0_50, %c0_51] : memref<128x1152xbf16, #tpu.memory_space<vmem>>, vector<128x128xbf16>
    tpu.vector_store %arg19[%c0_50, %c0_51], %61 {strides = array<i32>} : memref<128x1152xbf16, #tpu.memory_space<vmem>>, vector<128x128xbf16>,
    %c0_52 = arith.constant 0 : index
    %c0_53 = arith.constant 0 : index
    %c1_54 = arith.constant 1 : index
    %c0_55 = arith.constant 0 : index
    %63 = vector.load %arg18[%c0_52, %c0_53, %c1_54, %c0_55] : memref<2x10x10x128xf32, #tpu.memory_space<vmem>>, vector<2x8x8x128xf32>
    %64 = vector.shape_cast %63 : vector<2x8x8x128xf32> to vector<128x128xf32>
    %65 = arith.truncf %64 : vector<128x128xf32> to vector<128x128xbf16>
    %c0_56 = arith.constant 0 : index
    %c128 = arith.constant 128 : index
    %66 = vector.load %arg19[%c0_56, %c128] : memref<128x1152xbf16, #tpu.memory_space<vmem>>, vector<128x128xbf16>
    tpu.vector_store %arg19[%c0_56, %c128], %65 {strides = array<i32>} : memref<128x1152xbf16, #tpu.memory_space<vmem>>, vector<128x128xbf16>,
    %c0_57 = arith.constant 0 : index
    %c0_58 = arith.constant 0 : index
    %c2_59 = arith.constant 2 : index
    %c0_60 = arith.constant 0 : index
    %67 = vector.load %arg18[%c0_57, %c0_58, %c2_59, %c0_60] : memref<2x10x10x128xf32, #tpu.memory_space<vmem>>, vector<2x8x8x128xf32>
    %68 = vector.shape_cast %67 : vector<2x8x8x128xf32> to vector<128x128xf32>
    %69 = arith.truncf %68 : vector<128x128xf32> to vector<128x128xbf16>
    %c0_61 = arith.constant 0 : index
    %c256 = arith.constant 256 : index
    %70 = vector.load %arg19[%c0_61, %c256] : memref<128x1152xbf16, #tpu.memory_space<vmem>>, vector<128x128xbf16>
    tpu.vector_store %arg19[%c0_61, %c256], %69 {strides = array<i32>} : memref<128x1152xbf16, #tpu.memory_space<vmem>>, vector<128x128xbf16>,
    %c0_62 = arith.constant 0 : index
    %c1_63 = arith.constant 1 : index
    %c0_64 = arith.constant 0 : index
    %c0_65 = arith.constant 0 : index
    %71 = vector.load %arg18[%c0_62, %c1_63, %c0_64, %c0_65] : memref<2x10x10x128xf32, #tpu.memory_space<vmem>>, vector<2x8x8x128xf32>
    %72 = vector.shape_cast %71 : vector<2x8x8x128xf32> to vector<128x128xf32>
    %73 = arith.truncf %72 : vector<128x128xf32> to vector<128x128xbf16>
    %c0_66 = arith.constant 0 : index
    %c384 = arith.constant 384 : index
    %74 = vector.load %arg19[%c0_66, %c384] : memref<128x1152xbf16, #tpu.memory_space<vmem>>, vector<128x128xbf16>
    tpu.vector_store %arg19[%c0_66, %c384], %73 {strides = array<i32>} : memref<128x1152xbf16, #tpu.memory_space<vmem>>, vector<128x128xbf16>,
    %c0_67 = arith.constant 0 : index
    %c1_68 = arith.constant 1 : index
    %c1_69 = arith.constant 1 : index
    %c0_70 = arith.constant 0 : index
    %75 = vector.load %arg18[%c0_67, %c1_68, %c1_69, %c0_70] : memref<2x10x10x128xf32, #tpu.memory_space<vmem>>, vector<2x8x8x128xf32>
    %76 = vector.shape_cast %75 : vector<2x8x8x128xf32> to vector<128x128xf32>
    %77 = arith.truncf %76 : vector<128x128xf32> to vector<128x128xbf16>
    %c0_71 = arith.constant 0 : index
    %c512 = arith.constant 512 : index
    %78 = vector.load %arg19[%c0_71, %c512] : memref<128x1152xbf16, #tpu.memory_space<vmem>>, vector<128x128xbf16>
    tpu.vector_store %arg19[%c0_71, %c512], %77 {strides = array<i32>} : memref<128x1152xbf16, #tpu.memory_space<vmem>>, vector<128x128xbf16>,
    %c0_72 = arith.constant 0 : index
    %c1_73 = arith.constant 1 : index
    %c2_74 = arith.constant 2 : index
    %c0_75 = arith.constant 0 : index
    %79 = vector.load %arg18[%c0_72, %c1_73, %c2_74, %c0_75] : memref<2x10x10x128xf32, #tpu.memory_space<vmem>>, vector<2x8x8x128xf32>
    %80 = vector.shape_cast %79 : vector<2x8x8x128xf32> to vector<128x128xf32>
    %81 = arith.truncf %80 : vector<128x128xf32> to vector<128x128xbf16>
    %c0_76 = arith.constant 0 : index
    %c640 = arith.constant 640 : index
    %82 = vector.load %arg19[%c0_76, %c640] : memref<128x1152xbf16, #tpu.memory_space<vmem>>, vector<128x128xbf16>
    tpu.vector_store %arg19[%c0_76, %c640], %81 {strides = array<i32>} : memref<128x1152xbf16, #tpu.memory_space<vmem>>, vector<128x128xbf16>,
    %c0_77 = arith.constant 0 : index
    %c2_78 = arith.constant 2 : index
    %c0_79 = arith.constant 0 : index
    %c0_80 = arith.constant 0 : index
    %83 = vector.load %arg18[%c0_77, %c2_78, %c0_79, %c0_80] : memref<2x10x10x128xf32, #tpu.memory_space<vmem>>, vector<2x8x8x128xf32>
    %84 = vector.shape_cast %83 : vector<2x8x8x128xf32> to vector<128x128xf32>
    %85 = arith.truncf %84 : vector<128x128xf32> to vector<128x128xbf16>
    %c0_81 = arith.constant 0 : index
    %c768 = arith.constant 768 : index
    %86 = vector.load %arg19[%c0_81, %c768] : memref<128x1152xbf16, #tpu.memory_space<vmem>>, vector<128x128xbf16>
    tpu.vector_store %arg19[%c0_81, %c768], %85 {strides = array<i32>} : memref<128x1152xbf16, #tpu.memory_space<vmem>>, vector<128x128xbf16>,
    %c0_82 = arith.constant 0 : index
    %c2_83 = arith.constant 2 : index
    %c1_84 = arith.constant 1 : index
    %c0_85 = arith.constant 0 : index
    %87 = vector.load %arg18[%c0_82, %c2_83, %c1_84, %c0_85] : memref<2x10x10x128xf32, #tpu.memory_space<vmem>>, vector<2x8x8x128xf32>
    %88 = vector.shape_cast %87 : vector<2x8x8x128xf32> to vector<128x128xf32>
    %89 = arith.truncf %88 : vector<128x128xf32> to vector<128x128xbf16>
    %c0_86 = arith.constant 0 : index
    %c896 = arith.constant 896 : index
    %90 = vector.load %arg19[%c0_86, %c896] : memref<128x1152xbf16, #tpu.memory_space<vmem>>, vector<128x128xbf16>
    tpu.vector_store %arg19[%c0_86, %c896], %89 {strides = array<i32>} : memref<128x1152xbf16, #tpu.memory_space<vmem>>, vector<128x128xbf16>,
    %c0_87 = arith.constant 0 : index
    %c2_88 = arith.constant 2 : index
    %c2_89 = arith.constant 2 : index
    %c0_90 = arith.constant 0 : index
    %91 = vector.load %arg18[%c0_87, %c2_88, %c2_89, %c0_90] : memref<2x10x10x128xf32, #tpu.memory_space<vmem>>, vector<2x8x8x128xf32>
    %92 = vector.shape_cast %91 : vector<2x8x8x128xf32> to vector<128x128xf32>
    %93 = arith.truncf %92 : vector<128x128xf32> to vector<128x128xbf16>
    %c0_91 = arith.constant 0 : index
    %c1024 = arith.constant 1024 : index
    %94 = vector.load %arg19[%c0_91, %c1024] : memref<128x1152xbf16, #tpu.memory_space<vmem>>, vector<128x128xbf16>
    tpu.vector_store %arg19[%c0_91, %c1024], %93 {strides = array<i32>} : memref<128x1152xbf16, #tpu.memory_space<vmem>>, vector<128x128xbf16>,
    %c0_92 = arith.constant 0 : index
    %c0_93 = arith.constant 0 : index
    %95 = vector.load %arg19[%c0_92, %c0_93] : memref<128x1152xbf16, #tpu.memory_space<vmem>>, vector<128x1152xbf16>
    %c0_94 = arith.constant 0 : index
    %c0_95 = arith.constant 0 : index
    %96 = vector.load %arg3[%c0_94, %c0_95] : memref<1152x128xbf16, #tpu.memory_space<vmem>>, vector<1152x128xbf16>
    %cst_96 = arith.constant dense<0.000000e+00> : vector<128x128xf32>
    %97 = tpu.matmul %95, %96, %cst_96 {dimension_numbers = #tpu.dot_dimension_numbers<[1], [0], [0], [1], [0, 0, 1, 1], [], []>} : vector<128x1152xbf16>, vector<1152x128xbf16>, vector<128x128xf32> -> vector<128x128xf32>
    %c0_97 = arith.constant 0 : index
    %c0_98 = arith.constant 0 : index
    %98 = vector.load %arg4[%c0_97, %c0_98] : memref<1x128xf32, #tpu.memory_space<vmem>>, vector<1x128xf32>
    %99 = vector.broadcast %98 : vector<1x128xf32> to vector<128x128xf32>
    %100 = arith.addf %97, %99 : vector<128x128xf32>
    %cst_99 = arith.constant dense<0.000000e+00> : vector<128xf32>
    %101 = vector.multi_reduction <add>, %100, %cst_99 [0] : vector<128x128xf32> to vector<128xf32>
    %102 = vector.shape_cast %101 : vector<128xf32> to vector<1x128xf32>
    %cst_100 = arith.constant 1.280000e+02 : f32
    %103 = vector.broadcast %cst_100 : f32 to vector<1x128xf32>
    %104 = arith.divf %102, %103 : vector<1x128xf32>
    %105 = vector.broadcast %104 : vector<1x128xf32> to vector<128x128xf32>
    %106 = arith.subf %100, %105 : vector<128x128xf32>
    %107 = arith.mulf %106, %106 : vector<128x128xf32>
    %cst_101 = arith.constant dense<0.000000e+00> : vector<128xf32>
    %108 = vector.multi_reduction <add>, %107, %cst_101 [0] : vector<128x128xf32> to vector<128xf32>
    %109 = vector.shape_cast %108 : vector<128xf32> to vector<1x128xf32>
    %cst_102 = arith.constant 1.280000e+02 : f32
    %110 = vector.broadcast %cst_102 : f32 to vector<1x128xf32>
    %111 = arith.divf %109, %110 : vector<1x128xf32>
    %112 = vector.broadcast %104 : vector<1x128xf32> to vector<128x128xf32>
    %113 = arith.subf %100, %112 : vector<128x128xf32>
    %cst_103 = arith.constant 9.99999974E-6 : f32
    %114 = vector.broadcast %cst_103 : f32 to vector<1x128xf32>
    %115 = arith.addf %111, %114 : vector<1x128xf32>
    %116 = math.rsqrt %115 : vector<1x128xf32>
    %117 = vector.broadcast %116 : vector<1x128xf32> to vector<128x128xf32>
    %118 = arith.mulf %113, %117 : vector<128x128xf32>
    %c0_104 = arith.constant 0 : index
    %c0_105 = arith.constant 0 : index
    %119 = vector.load %arg11[%c0_104, %c0_105] : memref<1x128xf32, #tpu.memory_space<vmem>>, vector<1x128xf32>
    %120 = vector.broadcast %119 : vector<1x128xf32> to vector<128x128xf32>
    %121 = arith.mulf %118, %120 : vector<128x128xf32>
    %c0_106 = arith.constant 0 : index
    %c0_107 = arith.constant 0 : index
    %122 = vector.load %arg12[%c0_106, %c0_107] : memref<1x128xf32, #tpu.memory_space<vmem>>, vector<1x128xf32>
    %123 = vector.broadcast %122 : vector<1x128xf32> to vector<128x128xf32>
    %124 = arith.addf %121, %123 : vector<128x128xf32>
    %cst_108 = arith.constant 0.000000e+00 : f32
    %125 = vector.broadcast %cst_108 : f32 to vector<128x128xf32>
    %126 = arith.maximumf %124, %125 : vector<128x128xf32>
    %127 = arith.truncf %126 : vector<128x128xf32> to vector<128x128xbf16>
    %c0_109 = arith.constant 0 : index
    %c0_110 = arith.constant 0 : index
    %128 = vector.load %arg5[%c0_109, %c0_110] : memref<128x128xbf16, #tpu.memory_space<vmem>>, vector<128x128xbf16>
    %cst_111 = arith.constant dense<0.000000e+00> : vector<128x128xf32>
    %129 = tpu.matmul %127, %128, %cst_111 {dimension_numbers = #tpu.dot_dimension_numbers<[1], [0], [0], [1], [0, 0, 1, 1], [], []>} : vector<128x128xbf16>, vector<128x128xbf16>, vector<128x128xf32> -> vector<128x128xf32>
    %c0_112 = arith.constant 0 : index
    %c0_113 = arith.constant 0 : index
    %130 = vector.load %arg6[%c0_112, %c0_113] : memref<1x128xf32, #tpu.memory_space<vmem>>, vector<1x128xf32>
    %131 = vector.broadcast %130 : vector<1x128xf32> to vector<128x128xf32>
    %132 = arith.addf %129, %131 : vector<128x128xf32>
    %cst_114 = arith.constant dense<0.000000e+00> : vector<128xf32>
    %133 = vector.multi_reduction <add>, %132, %cst_114 [0] : vector<128x128xf32> to vector<128xf32>
    %134 = vector.shape_cast %133 : vector<128xf32> to vector<1x128xf32>
    %cst_115 = arith.constant 1.280000e+02 : f32
    %135 = vector.broadcast %cst_115 : f32 to vector<1x128xf32>
    %136 = arith.divf %134, %135 : vector<1x128xf32>
    %137 = vector.broadcast %136 : vector<1x128xf32> to vector<128x128xf32>
    %138 = arith.subf %132, %137 : vector<128x128xf32>
    %139 = arith.mulf %138, %138 : vector<128x128xf32>
    %cst_116 = arith.constant dense<0.000000e+00> : vector<128xf32>
    %140 = vector.multi_reduction <add>, %139, %cst_116 [0] : vector<128x128xf32> to vector<128xf32>
    %141 = vector.shape_cast %140 : vector<128xf32> to vector<1x128xf32>
    %cst_117 = arith.constant 1.280000e+02 : f32
    %142 = vector.broadcast %cst_117 : f32 to vector<1x128xf32>
    %143 = arith.divf %141, %142 : vector<1x128xf32>
    %144 = vector.broadcast %136 : vector<1x128xf32> to vector<128x128xf32>
    %145 = arith.subf %132, %144 : vector<128x128xf32>
    %cst_118 = arith.constant 9.99999974E-6 : f32
    %146 = vector.broadcast %cst_118 : f32 to vector<1x128xf32>
    %147 = arith.addf %143, %146 : vector<1x128xf32>
    %148 = math.rsqrt %147 : vector<1x128xf32>
    %149 = vector.broadcast %148 : vector<1x128xf32> to vector<128x128xf32>
    %150 = arith.mulf %145, %149 : vector<128x128xf32>
    %c0_119 = arith.constant 0 : index
    %c0_120 = arith.constant 0 : index
    %151 = vector.load %arg13[%c0_119, %c0_120] : memref<1x128xf32, #tpu.memory_space<vmem>>, vector<1x128xf32>
    %152 = vector.broadcast %151 : vector<1x128xf32> to vector<128x128xf32>
    %153 = arith.mulf %150, %152 : vector<128x128xf32>
    %c0_121 = arith.constant 0 : index
    %c0_122 = arith.constant 0 : index
    %154 = vector.load %arg14[%c0_121, %c0_122] : memref<1x128xf32, #tpu.memory_space<vmem>>, vector<1x128xf32>
    %155 = vector.broadcast %154 : vector<1x128xf32> to vector<128x128xf32>
    %156 = arith.addf %153, %155 : vector<128x128xf32>
    %c0_123 = arith.constant 0 : index
    %c0_124 = arith.constant 0 : index
    %157 = vector.load %arg7[%c0_123, %c0_124] : memref<128x128xbf16, #tpu.memory_space<vmem>>, vector<128x128xbf16>
    %cst_125 = arith.constant dense<0.000000e+00> : vector<128x128xf32>
    %158 = tpu.matmul %17, %157, %cst_125 {dimension_numbers = #tpu.dot_dimension_numbers<[1], [0], [0], [1], [0, 0, 1, 1], [], []>} : vector<128x128xbf16>, vector<128x128xbf16>, vector<128x128xf32> -> vector<128x128xf32>
    %c0_126 = arith.constant 0 : index
    %c0_127 = arith.constant 0 : index
    %159 = vector.load %arg8[%c0_126, %c0_127] : memref<1x128xf32, #tpu.memory_space<vmem>>, vector<1x128xf32>
    %160 = vector.broadcast %159 : vector<1x128xf32> to vector<128x128xf32>
    %161 = arith.addf %158, %160 : vector<128x128xf32>
    %cst_128 = arith.constant dense<0.000000e+00> : vector<128xf32>
    %162 = vector.multi_reduction <add>, %161, %cst_128 [0] : vector<128x128xf32> to vector<128xf32>
    %163 = vector.shape_cast %162 : vector<128xf32> to vector<1x128xf32>
    %cst_129 = arith.constant 1.280000e+02 : f32
    %164 = vector.broadcast %cst_129 : f32 to vector<1x128xf32>
    %165 = arith.divf %163, %164 : vector<1x128xf32>
    %166 = vector.broadcast %165 : vector<1x128xf32> to vector<128x128xf32>
    %167 = arith.subf %161, %166 : vector<128x128xf32>
    %168 = arith.mulf %167, %167 : vector<128x128xf32>
    %cst_130 = arith.constant dense<0.000000e+00> : vector<128xf32>
    %169 = vector.multi_reduction <add>, %168, %cst_130 [0] : vector<128x128xf32> to vector<128xf32>
    %170 = vector.shape_cast %169 : vector<128xf32> to vector<1x128xf32>
    %cst_131 = arith.constant 1.280000e+02 : f32
    %171 = vector.broadcast %cst_131 : f32 to vector<1x128xf32>
    %172 = arith.divf %170, %171 : vector<1x128xf32>
    %173 = vector.broadcast %165 : vector<1x128xf32> to vector<128x128xf32>
    %174 = arith.subf %161, %173 : vector<128x128xf32>
    %cst_132 = arith.constant 9.99999974E-6 : f32
    %175 = vector.broadcast %cst_132 : f32 to vector<1x128xf32>
    %176 = arith.addf %172, %175 : vector<1x128xf32>
    %177 = math.rsqrt %176 : vector<1x128xf32>
    %178 = vector.broadcast %177 : vector<1x128xf32> to vector<128x128xf32>
    %179 = arith.mulf %174, %178 : vector<128x128xf32>
    %c0_133 = arith.constant 0 : index
    %c0_134 = arith.constant 0 : index
    %180 = vector.load %arg15[%c0_133, %c0_134] : memref<1x128xf32, #tpu.memory_space<vmem>>, vector<1x128xf32>
    %181 = vector.broadcast %180 : vector<1x128xf32> to vector<128x128xf32>
    %182 = arith.mulf %179, %181 : vector<128x128xf32>
    %c0_135 = arith.constant 0 : index
    %c0_136 = arith.constant 0 : index
    %183 = vector.load %arg16[%c0_135, %c0_136] : memref<1x128xf32, #tpu.memory_space<vmem>>, vector<1x128xf32>
    %184 = vector.broadcast %183 : vector<1x128xf32> to vector<128x128xf32>
    %185 = arith.addf %182, %184 : vector<128x128xf32>
    %186 = arith.addf %156, %185 : vector<128x128xf32>
    %cst_137 = arith.constant 0.000000e+00 : f32
    %187 = vector.broadcast %cst_137 : f32 to vector<128x128xf32>
    %188 = arith.maximumf %186, %187 : vector<128x128xf32>
    %c0_138 = arith.constant 0 : index
    %c0_139 = arith.constant 0 : index
    %189 = vector.load %arg17[%c0_138, %c0_139] : memref<128x128xf32, #tpu.memory_space<vmem>>, vector<128x128xf32>
    tpu.vector_store %arg17[%c0_138, %c0_139], %188 {strides = array<i32>} : memref<128x128xf32, #tpu.memory_space<vmem>>, vector<128x128xf32>,
    return
  }
}

</mosaic_0001>

<llo_original>
// kernel: tpu_custom_call.1
$region0: #{tpu_custom_call.1}
  #allocation0 [shape = 'u32[]', space=smem, size = 0x4, offset = 0x4, fixed_abs, tag = 'smem constant byte address 0x4 - core index']
  #allocation1 [shape = 'u32[144,128]{1,0:T(1,128)}', space=vmem, size = 0x12000, scoped, tag = 'internal scratch']
  #allocation2 [shape = 'f32[2,10,10,128]{3,2,1,0:T(8,128)}', space=vmem, size = 0x28000, scoped, tag = 'scratch operand']
  #allocation3 [shape = 'bf16[128,1152]{1,0:T(16,128)(2,1)}', space=vmem, size = 0x48000, scoped, tag = 'scratch operand']
  %s0 = inlined_call_operand.hbm [shape: bf16[4,128,128], index: 0, kind: input, shape index: {}]
  %s1 = inlined_call_operand.hbm [shape: bf16[128,128], index: 1, kind: input, shape index: {}]
  %s2 = inlined_call_operand.vmem [shape: f32[1,128], index: 2, kind: input, shape index: {}]
  %s3 = inlined_call_operand.hbm [shape: bf16[1152,128], index: 3, kind: input, shape index: {}]
  %s4 = inlined_call_operand.vmem [shape: f32[1,128], index: 4, kind: input, shape index: {}]
  %s5 = inlined_call_operand.hbm [shape: bf16[128,128], index: 5, kind: input, shape index: {}]
  %s6 = inlined_call_operand.vmem [shape: f32[1,128], index: 6, kind: input, shape index: {}]
  %s7 = inlined_call_operand.hbm [shape: bf16[128,128], index: 7, kind: input, shape index: {}]
  %s8 = inlined_call_operand.vmem [shape: f32[1,128], index: 8, kind: input, shape index: {}]
  %s9 = inlined_call_operand.vmem [shape: f32[1,128], index: 9, kind: input, shape index: {}]
  %s10 = inlined_call_operand.vmem [shape: f32[1,128], index: 10, kind: input, shape index: {}]
  %s11 = inlined_call_operand.vmem [shape: f32[1,128], index: 11, kind: input, shape index: {}]
  %s12 = inlined_call_operand.vmem [shape: f32[1,128], index: 12, kind: input, shape index: {}]
  %s13 = inlined_call_operand.vmem [shape: f32[1,128], index: 13, kind: input, shape index: {}]
  %s14 = inlined_call_operand.vmem [shape: f32[1,128], index: 14, kind: input, shape index: {}]
  %s15 = inlined_call_operand.vmem [shape: f32[1,128], index: 15, kind: input, shape index: {}]
  %s16 = inlined_call_operand.vmem [shape: f32[1,128], index: 16, kind: input, shape index: {}]
  %s17 = inlined_call_operand.hbm [shape: f32[128,128], index: 17, kind: output, shape index: {}]
  %s18 = sld [smem:[#allocation0]]
  $region98: #{tpu_custom_call.1} parent=0
    _
  %s20 = ssub.s32 1, %s18
  %s21 = scalar_select 0, %s20, %s18
  $region1: #{tpu_custom_call.1} parent=0
    #allocation4 [shape = 'u8[131072]{0}', space=vmem, size = 0x20000, scoped, tag = 'input window, operand 0, single buffered']
    #allocation5 [shape = 's32[1]{0}', space=sflag, size = 0x4, scoped, tag = 'scoped memory for tpu_custom_call.1']
    #allocation6 [shape = 's32[1]{0}', space=sflag, size = 0x4, scoped, tag = 'scoped memory for tpu_custom_call.1']
    #allocation7 [shape = 'u8[32768]{0}', space=vmem, size = 0x8000, scoped, tag = 'input window, operand 1, single buffered']
    #allocation8 [shape = 's32[1]{0}', space=sflag, size = 0x4, scoped, tag = 'scoped memory for tpu_custom_call.1']
    #allocation9 [shape = 'u8[294912]{0}', space=vmem, size = 0x48000, scoped, tag = 'input window, operand 3, single buffered']
    #allocation10 [shape = 'u8[32768]{0}', space=vmem, size = 0x8000, scoped, tag = 'input window, operand 5, single buffered']
    #allocation11 [shape = 's32[1]{0}', space=sflag, size = 0x4, scoped, tag = 'scoped memory for tpu_custom_call.1']
    #allocation12 [shape = 'u8[32768]{0}', space=vmem, size = 0x8000, scoped, tag = 'input window, operand 7, single buffered']
    #allocation13 [shape = 'u8[65536]{0}', space=vmem, size = 0x10000, scoped, tag = 'output window, operand 0, single buffered']
    %22 = vsyncpa [#allocation5], 0
    %23 = vsyncpa [#allocation8], 0
    %24 = vsyncpa [#allocation11], 0
    %25 = vsyncpa [#allocation6], 0
    // Predicated region
    $region2: #{tpu_custom_call.1} parent=1 // pred_check
      _
    $region3: #{tpu_custom_call.1} parent=1 // pred_check_branch
      %27 = sbr.rel (0) target = $region5
    $region4: #{tpu_custom_call.1} parent=1 // pred_region
      %s29 = ssub.s32 4096, 4096
      %30 = vsyncadd [#allocation5], %s29
      %s31 = sshll.u32 [#allocation4], 4
      %s32 = int_to_ptr.vmem [resolvable:$true] %s31
      %37 = dma.hbm_to_vmem [thread:$0]  %s0, 4096, %s32, [#allocation5], 64, 64, 4
    $region5: #{tpu_custom_call.1} parent=1 // pred_fallthru
      _
    // Predicated region
    $region6: #{tpu_custom_call.1} parent=1 // pred_check
      _
    $region7: #{tpu_custom_call.1} parent=1 // pred_check_branch
      %39 = sbr.rel (0) target = $region9
    $region8: #{tpu_custom_call.1} parent=1 // pred_region
      %s41 = ssub.s32 1024, 1024
      %42 = vsyncadd [#allocation8], %s41
      %s43 = sshll.u32 [#allocation7], 4
      %s44 = int_to_ptr.vmem [resolvable:$true] %s43
      %49 = dma.hbm_to_vmem [thread:$0]  %s1, 1024, %s44, [#allocation8], 64, 64, 4
    $region9: #{tpu_custom_call.1} parent=1 // pred_fallthru
      _
    // Predicated region
    $region10: #{tpu_custom_call.1} parent=1 // pred_check
      _
    $region11: #{tpu_custom_call.1} parent=1 // pred_check_branch
      %51 = sbr.rel (0) target = $region13
    $region12: #{tpu_custom_call.1} parent=1 // pred_region
      _
    $region13: #{tpu_custom_call.1} parent=1 // pred_fallthru
      _
    // Predicated region
    $region14: #{tpu_custom_call.1} parent=1 // pred_check
      _
    $region15: #{tpu_custom_call.1} parent=1 // pred_check_branch
      %53 = sbr.rel (0) target = $region17
    $region16: #{tpu_custom_call.1} parent=1 // pred_region
      %s55 = ssub.s32 9216, 9216
      %56 = vsyncadd [#allocation8], %s55
      %s57 = sshll.u32 [#allocation9], 4
      %s58 = int_to_ptr.vmem [resolvable:$true] %s57
      %63 = dma.hbm_to_vmem [thread:$0]  %s3, 9216, %s58, [#allocation8], 64, 64, 4
    $region17: #{tpu_custom_call.1} parent=1 // pred_fallthru
      _
    // Predicated region
    $region18: #{tpu_custom_call.1} parent=1 // pred_check
      _
    $region19: #{tpu_custom_call.1} parent=1 // pred_check_branch
      %65 = sbr.rel (0) target = $region21
    $region20: #{tpu_custom_call.1} parent=1 // pred_region
      _
    $region21: #{tpu_custom_call.1} parent=1 // pred_fallthru
      _
    // Predicated region
    $region22: #{tpu_custom_call.1} parent=1 // pred_check
      _
    $region23: #{tpu_custom_call.1} parent=1 // pred_check_branch
      %67 = sbr.rel (0) target = $region25
    $region24: #{tpu_custom_call.1} parent=1 // pred_region
      %s69 = ssub.s32 1024, 1024
      %70 = vsyncadd [#allocation11], %s69
      %s71 = sshll.u32 [#allocation10], 4
      %s72 = int_to_ptr.vmem [resolvable:$true] %s71
      %77 = dma.hbm_to_vmem [thread:$0]  %s5, 1024, %s72, [#allocation11], 64, 64, 4
    $region25: #{tpu_custom_call.1} parent=1 // pred_fallthru
      _
    // Predicated region
    $region26: #{tpu_custom_call.1} parent=1 // pred_check
      _
    $region27: #{tpu_custom_call.1} parent=1 // pred_check_branch
      %79 = sbr.rel (0) target = $region29
    $region28: #{tpu_custom_call.1} parent=1 // pred_region
      _
    $region29: #{tpu_custom_call.1} parent=1 // pred_fallthru
      _
    // Predicated region
    $region30: #{tpu_custom_call.1} parent=1 // pred_check
      _
    $region31: #{tpu_custom_call.1} parent=1 // pred_check_branch
      %81 = sbr.rel (0) target = $region33
    $region32: #{tpu_custom_call.1} parent=1 // pred_region
      %s83 = ssub.s32 1024, 1024
      %84 = vsyncadd [#allocation11], %s83
      %s85 = sshll.u32 [#allocation12], 4
      %s86 = int_to_ptr.vmem [resolvable:$true] %s85
      %91 = dma.hbm_to_vmem [thread:$0]  %s7, 1024, %s86, [#allocation11], 64, 64, 4
    $region33: #{tpu_custom_call.1} parent=1 // pred_fallthru
      _
    // Predicated region
    $region34: #{tpu_custom_call.1} parent=1 // pred_check
      _
    $region35: #{tpu_custom_call.1} parent=1 // pred_check_branch
      %93 = sbr.rel (0) target = $region37
    $region36: #{tpu_custom_call.1} parent=1 // pred_region
      _
    $region37: #{tpu_custom_call.1} parent=1 // pred_fallthru
      _
    // Predicated region
    $region38: #{tpu_custom_call.1} parent=1 // pred_check
      _
    $region39: #{tpu_custom_call.1} parent=1 // pred_check_branch
      %95 = sbr.rel (0) target = $region41
    $region40: #{tpu_custom_call.1} parent=1 // pred_region
      _
    $region41: #{tpu_custom_call.1} parent=1 // pred_fallthru
      _
    // Predicated region
    $region42: #{tpu_custom_call.1} parent=1 // pred_check
      _
    $region43: #{tpu_custom_call.1} parent=1 // pred_check_branch
      %97 = sbr.rel (0) target = $region45
    $region44: #{tpu_custom_call.1} parent=1 // pred_region
      _
    $region45: #{tpu_custom_call.1} parent=1 // pred_fallthru
      _
    // Predicated region
    $region46: #{tpu_custom_call.1} parent=1 // pred_check
      _
    $region47: #{tpu_custom_call.1} parent=1 // pred_check_branch
      %99 = sbr.rel (0) target = $region49
    $region48: #{tpu_custom_call.1} parent=1 // pred_region
      _
    $region49: #{tpu_custom_call.1} parent=1 // pred_fallthru
      _
    // Predicated region
    $region50: #{tpu_custom_call.1} parent=1 // pred_check
      _
    $region51: #{tpu_custom_call.1} parent=1 // pred_check_branch
      %101 = sbr.rel (0) target = $region53
    $region52: #{tpu_custom_call.1} parent=1 // pred_region
      _
    $region53: #{tpu_custom_call.1} parent=1 // pred_fallthru
      _
    // Predicated region
    $region54: #{tpu_custom_call.1} parent=1 // pred_check
      _
    $region55: #{tpu_custom_call.1} parent=1 // pred_check_branch
      %103 = sbr.rel (0) target = $region57
    $region56: #{tpu_custom_call.1} parent=1 // pred_region
      _
    $region57: #{tpu_custom_call.1} parent=1 // pred_fallthru
      _
    // Predicated region
    $region58: #{tpu_custom_call.1} parent=1 // pred_check
      _
    $region59: #{tpu_custom_call.1} parent=1 // pred_check_branch
      %105 = sbr.rel (0) target = $region61
    $region60: #{tpu_custom_call.1} parent=1 // pred_region
      _
    $region61: #{tpu_custom_call.1} parent=1 // pred_fallthru
      _
    // Predicated region
    $region62: #{tpu_custom_call.1} parent=1 // pred_check
      _
    $region63: #{tpu_custom_call.1} parent=1 // pred_check_branch
      %107 = sbr.rel (0) target = $region65
    $region64: #{tpu_custom_call.1} parent=1 // pred_region
      _
    $region65: #{tpu_custom_call.1} parent=1 // pred_fallthru
      _
    // Predicated region
    $region66: #{tpu_custom_call.1} parent=1 // pred_check
      _
    $region67: #{tpu_custom_call.1} parent=1 // pred_check_branch
      %109 = sbr.rel (0) target = $region69
    $region68: #{tpu_custom_call.1} parent=1 // pred_region
      _
    $region69: #{tpu_custom_call.1} parent=1 // pred_fallthru
      _
    // Predicated region
    $region70: #{tpu_custom_call.1} parent=1 // pred_check
      _
    $region71: #{tpu_custom_call.1} parent=1 // pred_check_branch
      %111 = sbr.rel (0) target = $region73
    $region72: #{tpu_custom_call.1} parent=1 // pred_region
      %112 = dma.done [#allocation5], 4096
    $region73: #{tpu_custom_call.1} parent=1 // pred_fallthru
      _
    // Predicated region
    $region74: #{tpu_custom_call.1} parent=1 // pred_check
      _
    $region75: #{tpu_custom_call.1} parent=1 // pred_check_branch
      %114 = sbr.rel (0) target = $region77
    $region76: #{tpu_custom_call.1} parent=1 // pred_region
      %115 = dma.done [#allocation8], 1024
    $region77: #{tpu_custom_call.1} parent=1 // pred_fallthru
      _
    // Predicated region
    $region78: #{tpu_custom_call.1} parent=1 // pred_check
      _
    $region79: #{tpu_custom_call.1} parent=1 // pred_check_branch
      %117 = sbr.rel (0) target = $region81
    $region80: #{tpu_custom_call.1} parent=1 // pred_region
      %118 = dma.done [#allocation8], 9216
    $region81: #{tpu_custom_call.1} parent=1 // pred_fallthru
      _
    // Predicated region
    $region82: #{tpu_custom_call.1} parent=1 // pred_check
      _
    $region83: #{tpu_custom_call.1} parent=1 // pred_check_branch
      %120 = sbr.rel (0) target = $region85
    $region84: #{tpu_custom_call.1} parent=1 // pred_region
      %121 = dma.done [#allocation11], 1024
    $region85: #{tpu_custom_call.1} parent=1 // pred_fallthru
      _
    // Predicated region
    $region86: #{tpu_custom_call.1} parent=1 // pred_check
      _
    $region87: #{tpu_custom_call.1} parent=1 // pred_check_branch
      %123 = sbr.rel (0) target = $region89
    $region88: #{tpu_custom_call.1} parent=1 // pred_region
      %124 = dma.done [#allocation11], 1024
    $region89: #{tpu_custom_call.1} parent=1 // pred_fallthru
      _
    %v126 = vld [vmem:[#allocation4] sm:$0xf]
    %v127 = vld [vmem:[#allocation4 + $0x4] sm:$0xf]
    %v128 = vld [vmem:[#allocation4 + $0x8] sm:$0xf]
    %v129 = vld [vmem:[#allocation4 + $0xc] sm:$0xf]
    %v130 = vld [vmem:[#allocation4 + $0x10] sm:$0xf]
    %v131 = vld [vmem:[#allocation4 + $0x14] sm:$0xf]
    %v132 = vld [vmem:[#allocation4 + $0x18] sm:$0xf]
    %v133 = vld [vmem:[#allocation4 + $0x1c] sm:$0xf]
    %v134 = vld [vmem:[#allocation4 + $0x20] sm:$0xf]
    %v135 = vld [vmem:[#allocation4 + $0x24] sm:$0xf]
    %v136 = vld [vmem:[#allocation4 + $0x28] sm:$0xf]
    %v137 = vld [vmem:[#allocation4 + $0x2c] sm:$0xf]
    %v138 = vld [vmem:[#allocation4 + $0x30] sm:$0xf]
    %v139 = vld [vmem:[#allocation4 + $0x34] sm:$0xf]
    %v140 = vld [vmem:[#allocation4 + $0x38] sm:$0xf]
    %v141 = vld [vmem:[#allocation4 + $0x3c] sm:$0xf]
    %v142 = vunpack.c.l.bf16 %v126
    %v143 = vunpack.c.l.bf16 %v127
    %v144 = vunpack.c.l.bf16 %v128
    %v145 = vunpack.c.l.bf16 %v129
    %v146 = vunpack.c.l.bf16 %v130
    %v147 = vunpack.c.l.bf16 %v131
    %v148 = vunpack.c.l.bf16 %v132
    %v149 = vunpack.c.l.bf16 %v133
    %v150 = vunpack.c.l.bf16 %v134
    %v151 = vunpack.c.l.bf16 %v135
    %v152 = vunpack.c.l.bf16 %v136
    %v153 = vunpack.c.l.bf16 %v137
    %v154 = vunpack.c.l.bf16 %v138
    %v155 = vunpack.c.l.bf16 %v139
    %v156 = vunpack.c.l.bf16 %v140
    %v157 = vunpack.c.l.bf16 %v141
    %s158 = scalar_lea.vmem [#allocation4], 64
    %v159 = vld [vmem:[%s158] sm:$0xf]
    %v160 = vld [vmem:[%s158 + $0x4] sm:$0xf]
    %v161 = vld [vmem:[%s158 + $0x8] sm:$0xf]
    %v162 = vld [vmem:[%s158 + $0xc] sm:$0xf]
    %v163 = vld [vmem:[%s158 + $0x10] sm:$0xf]
    %v164 = vld [vmem:[%s158 + $0x14] sm:$0xf]
    %v165 = vld [vmem:[%s158 + $0x18] sm:$0xf]
    %v166 = vld [vmem:[%s158 + $0x1c] sm:$0xf]
    %v167 = vld [vmem:[%s158 + $0x20] sm:$0xf]
    %v168 = vld [vmem:[%s158 + $0x24] sm:$0xf]
    %v169 = vld [vmem:[%s158 + $0x28] sm:$0xf]
    %v170 = vld [vmem:[%s158 + $0x2c] sm:$0xf]
    %v171 = vld [vmem:[%s158 + $0x30] sm:$0xf]
    %v172 = vld [vmem:[%s158 + $0x34] sm:$0xf]
    %v173 = vld [vmem:[%s158 + $0x38] sm:$0xf]
    %v174 = vld [vmem:[%s158 + $0x3c] sm:$0xf]
    %v175 = vunpack.c.l.bf16 %v159
    %v176 = vunpack.c.l.bf16 %v160
    %v177 = vunpack.c.l.bf16 %v161
    %v178 = vunpack.c.l.bf16 %v162
    %v179 = vunpack.c.l.bf16 %v163
    %v180 = vunpack.c.l.bf16 %v164
    %v181 = vunpack.c.l.bf16 %v165
    %v182 = vunpack.c.l.bf16 %v166
    %v183 = vunpack.c.l.bf16 %v167
    %v184 = vunpack.c.l.bf16 %v168
    %v185 = vunpack.c.l.bf16 %v169
    %v186 = vunpack.c.l.bf16 %v170
    %v187 = vunpack.c.l.bf16 %v171
    %v188 = vunpack.c.l.bf16 %v172
    %v189 = vunpack.c.l.bf16 %v173
    %v190 = vunpack.c.l.bf16 %v174
    %v191 = vadd.f32 %v142, %v175
    %v192 = vadd.f32 %v143, %v176
    %v193 = vadd.f32 %v144, %v177
    %v194 = vadd.f32 %v145, %v178
    %v195 = vadd.f32 %v146, %v179
    %v196 = vadd.f32 %v147, %v180
    %v197 = vadd.f32 %v148, %v181
    %v198 = vadd.f32 %v149, %v182
    %v199 = vadd.f32 %v150, %v183
    %v200 = vadd.f32 %v151, %v184
    %v201 = vadd.f32 %v152, %v185
    %v202 = vadd.f32 %v153, %v186
    %v203 = vadd.f32 %v154, %v187
    %v204 = vadd.f32 %v155, %v188
    %v205 = vadd.f32 %v156, %v189
    %v206 = vadd.f32 %v157, %v190
    %s207 = scalar_lea.vmem [#allocation4], 128
    %v208 = vld [vmem:[%s207] sm:$0xf]
    %v209 = vld [vmem:[%s207 + $0x4] sm:$0xf]
    %v210 = vld [vmem:[%s207 + $0x8] sm:$0xf]
    %v211 = vld [vmem:[%s207 + $0xc] sm:$0xf]
    %v212 = vld [vmem:[%s207 + $0x10] sm:$0xf]
    %v213 = vld [vmem:[%s207 + $0x14] sm:$0xf]
    %v214 = vld [vmem:[%s207 + $0x18] sm:$0xf]
    %v215 = vld [vmem:[%s207 + $0x1c] sm:$0xf]
    %v216 = vld [vmem:[%s207 + $0x20] sm:$0xf]
    %v217 = vld [vmem:[%s207 + $0x24] sm:$0xf]
    %v218 = vld [vmem:[%s207 + $0x28] sm:$0xf]
    %v219 = vld [vmem:[%s207 + $0x2c] sm:$0xf]
    %v220 = vld [vmem:[%s207 + $0x30] sm:$0xf]
    %v221 = vld [vmem:[%s207 + $0x34] sm:$0xf]
    %v222 = vld [vmem:[%s207 + $0x38] sm:$0xf]
    %v223 = vld [vmem:[%s207 + $0x3c] sm:$0xf]
    %v224 = vunpack.c.l.bf16 %v208
    %v225 = vunpack.c.l.bf16 %v209
    %v226 = vunpack.c.l.bf16 %v210
    %v227 = vunpack.c.l.bf16 %v211
    %v228 = vunpack.c.l.bf16 %v212
    %v229 = vunpack.c.l.bf16 %v213
    %v230 = vunpack.c.l.bf16 %v214
    %v231 = vunpack.c.l.bf16 %v215
    %v232 = vunpack.c.l.bf16 %v216
    %v233 = vunpack.c.l.bf16 %v217
    %v234 = vunpack.c.l.bf16 %v218
    %v235 = vunpack.c.l.bf16 %v219
    %v236 = vunpack.c.l.bf16 %v220
    %v237 = vunpack.c.l.bf16 %v221
    %v238 = vunpack.c.l.bf16 %v222
    %v239 = vunpack.c.l.bf16 %v223
    %v240 = vadd.f32 %v191, %v224
    %v241 = vadd.f32 %v192, %v225
    %v242 = vadd.f32 %v193, %v226
    %v243 = vadd.f32 %v194, %v227
    %v244 = vadd.f32 %v195, %v228
    %v245 = vadd.f32 %v196, %v229
    %v246 = vadd.f32 %v197, %v230
    %v247 = vadd.f32 %v198, %v231
    %v248 = vadd.f32 %v199, %v232
    %v249 = vadd.f32 %v200, %v233
    %v250 = vadd.f32 %v201, %v234
    %v251 = vadd.f32 %v202, %v235
    %v252 = vadd.f32 %v203, %v236
    %v253 = vadd.f32 %v204, %v237
    %v254 = vadd.f32 %v205, %v238
    %v255 = vadd.f32 %v206, %v239
    %s256 = scalar_lea.vmem [#allocation4], 192
    %v257 = vld [vmem:[%s256] sm:$0xf]
    %v258 = vld [vmem:[%s256 + $0x4] sm:$0xf]
    %v259 = vld [vmem:[%s256 + $0x8] sm:$0xf]
    %v260 = vld [vmem:[%s256 + $0xc] sm:$0xf]
    %v261 = vld [vmem:[%s256 + $0x10] sm:$0xf]
    %v262 = vld [vmem:[%s256 + $0x14] sm:$0xf]
    %v263 = vld [vmem:[%s256 + $0x18] sm:$0xf]
    %v264 = vld [vmem:[%s256 + $0x1c] sm:$0xf]
    %v265 = vld [vmem:[%s256 + $0x20] sm:$0xf]
    %v266 = vld [vmem:[%s256 + $0x24] sm:$0xf]
    %v267 = vld [vmem:[%s256 + $0x28] sm:$0xf]
    %v268 = vld [vmem:[%s256 + $0x2c] sm:$0xf]
    %v269 = vld [vmem:[%s256 + $0x30] sm:$0xf]
    %v270 = vld [vmem:[%s256 + $0x34] sm:$0xf]
    %v271 = vld [vmem:[%s256 + $0x38] sm:$0xf]
    %v272 = vld [vmem:[%s256 + $0x3c] sm:$0xf]
    %v273 = vunpack.c.l.bf16 %v257
    %v274 = vunpack.c.l.bf16 %v258
    %v275 = vunpack.c.l.bf16 %v259
    %v276 = vunpack.c.l.bf16 %v260
    %v277 = vunpack.c.l.bf16 %v261
    %v278 = vunpack.c.l.bf16 %v262
    %v279 = vunpack.c.l.bf16 %v263
    %v280 = vunpack.c.l.bf16 %v264
    %v281 = vunpack.c.l.bf16 %v265
    %v282 = vunpack.c.l.bf16 %v266
    %v283 = vunpack.c.l.bf16 %v267
    %v284 = vunpack.c.l.bf16 %v268
    %v285 = vunpack.c.l.bf16 %v269
    %v286 = vunpack.c.l.bf16 %v270
    %v287 = vunpack.c.l.bf16 %v271
    %v288 = vunpack.c.l.bf16 %v272
    %v289 = vadd.f32 %v240, %v273
    %v290 = vadd.f32 %v241, %v274
    %v291 = vadd.f32 %v242, %v275
    %v292 = vadd.f32 %v243, %v276
    %v293 = vadd.f32 %v244, %v277
    %v294 = vadd.f32 %v245, %v278
    %v295 = vadd.f32 %v246, %v279
    %v296 = vadd.f32 %v247, %v280
    %v297 = vadd.f32 %v248, %v281
    %v298 = vadd.f32 %v249, %v282
    %v299 = vadd.f32 %v250, %v283
    %v300 = vadd.f32 %v251, %v284
    %v301 = vadd.f32 %v252, %v285
    %v302 = vadd.f32 %v253, %v286
    %v303 = vadd.f32 %v254, %v287
    %v304 = vadd.f32 %v255, %v288
    %v305 = vmul.f32 %v289, 0.25
    %v306 = vmul.f32 %v290, 0.25
    %v307 = vmul.f32 %v291, 0.25
    %v308 = vmul.f32 %v292, 0.25
    %v309 = vmul.f32 %v293, 0.25
    %v310 = vmul.f32 %v294, 0.25
    %v311 = vmul.f32 %v295, 0.25
    %v312 = vmul.f32 %v296, 0.25
    %v313 = vmul.f32 %v297, 0.25
    %v314 = vmul.f32 %v298, 0.25
    %v315 = vmul.f32 %v299, 0.25
    %v316 = vmul.f32 %v300, 0.25
    %v317 = vmul.f32 %v301, 0.25
    %v318 = vmul.f32 %v302, 0.25
    %v319 = vmul.f32 %v303, 0.25
    %v320 = vmul.f32 %v304, 0.25
    %v321 = vpack.c.bf16 %v306, %v305
    %v322 = vpack.c.bf16 %v308, %v307
    %v323 = vpack.c.bf16 %v310, %v309
    %v324 = vpack.c.bf16 %v312, %v311
    %v325 = vpack.c.bf16 %v314, %v313
    %v326 = vpack.c.bf16 %v316, %v315
    %v327 = vpack.c.bf16 %v318, %v317
    %v328 = vpack.c.bf16 %v320, %v319
    %v329 = vld [vmem:[#allocation7] sm:$0xf]
    %v330 = vld [vmem:[#allocation7 + $0x4] sm:$0xf]
    %v331 = vld [vmem:[#allocation7 + $0x8] sm:$0xf]
    %v332 = vld [vmem:[#allocation7 + $0xc] sm:$0xf]
    %v333 = vld [vmem:[#allocation7 + $0x10] sm:$0xf]
    %v334 = vld [vmem:[#allocation7 + $0x14] sm:$0xf]
    %v335 = vld [vmem:[#allocation7 + $0x18] sm:$0xf]
    %v336 = vld [vmem:[#allocation7 + $0x1c] sm:$0xf]
    %v337 = vld [vmem:[#allocation7 + $0x20] sm:$0xf]
    %v338 = vld [vmem:[#allocation7 + $0x24] sm:$0xf]
    %v339 = vld [vmem:[#allocation7 + $0x28] sm:$0xf]
    %v340 = vld [vmem:[#allocation7 + $0x2c] sm:$0xf]
    %v341 = vld [vmem:[#allocation7 + $0x30] sm:$0xf]
    %v342 = vld [vmem:[#allocation7 + $0x34] sm:$0xf]
    %v343 = vld [vmem:[#allocation7 + $0x38] sm:$0xf]
    %v344 = vld [vmem:[#allocation7 + $0x3c] sm:$0xf]
    %v345 = vld [vmem:[%s2] sm:$0x1]
    %v347 = vlaneseq
    %v348 = vshrl.u32 %v347, 7
    %v349 = vsub.s32 0, %v348
    %v350 = vrot.slane %v345, %v349
    %v368 = vunpack.c.l.b16 %v329
    %v369 = vunpack.c.l.b16 %v330
    %v370 = vunpack.c.l.b16 %v331
    %v371 = vunpack.c.l.b16 %v332
    %v372 = vunpack.c.l.b16 %v333
    %v373 = vunpack.c.l.b16 %v334
    %v374 = vunpack.c.l.b16 %v335
    %v375 = vunpack.c.l.b16 %v336
    %v376 = vunpack.c.l.b16 %v337
    %v377 = vunpack.c.l.b16 %v338
    %v378 = vunpack.c.l.b16 %v339
    %v379 = vunpack.c.l.b16 %v340
    %v380 = vunpack.c.l.b16 %v341
    %v381 = vunpack.c.l.b16 %v342
    %v382 = vunpack.c.l.b16 %v343
    %v383 = vunpack.c.l.b16 %v344
    %v384 = vpack.c.b16 %v369, %v368
    %v385 = vpack.c.b16 %v371, %v370
    %v386 = vpack.c.b16 %v373, %v372
    %v387 = vpack.c.b16 %v375, %v374
    %v388 = vpack.c.b16 %v377, %v376
    %v389 = vpack.c.b16 %v379, %v378
    %v390 = vpack.c.b16 %v381, %v380
    %v391 = vpack.c.b16 %v383, %v382
    %400 = vmatprep.subr.bf16.mxu0 0
    %401 = vmatpush1.bf16.msra.mxu0 %v384
    %402 = vmatprep.subr.bf16.mxu0 0
    %403 = vmatpush1.bf16.msra.mxu0 %v385
    %404 = vmatprep.subr.bf16.mxu0 0
    %405 = vmatpush1.bf16.msra.mxu0 %v386
    %406 = vmatprep.subr.bf16.mxu0 0
    %407 = vmatpush1.bf16.msra.mxu0 %v387
    %408 = vmatprep.subr.bf16.mxu0 0
    %409 = vmatpush1.bf16.msra.mxu0 %v388
    %410 = vmatprep.subr.bf16.mxu0 0
    %411 = vmatpush1.bf16.msra.mxu0 %v389
    %412 = vmatprep.subr.bf16.mxu0 0
    %413 = vmatpush1.bf16.msra.mxu0 %v390
    %414 = vmatprep.subr.bf16.mxu0 0
    %415 = vmatpush1.bf16.msra.mxu0 %v391
    %416 = vmatprep.subr.bf16.mxu0 0
    %417 = vmatpush1.bf16.msra.mxu0 0
    %418 = vmatprep.subr.bf16.mxu0 0
    %419 = vmatpush1.bf16.msra.mxu0 0
    %420 = vmatprep.subr.bf16.mxu0 0
    %421 = vmatpush1.bf16.msra.mxu0 0
    %422 = vmatprep.subr.bf16.mxu0 0
    %423 = vmatpush1.bf16.msra.mxu0 0
    %424 = vmatprep.subr.bf16.mxu0 0
    %425 = vmatpush1.bf16.msra.mxu0 0
    %426 = vmatprep.subr.bf16.mxu0 0
    %427 = vmatpush1.bf16.msra.mxu0 0
    %428 = vmatprep.subr.bf16.mxu0 0
    %429 = vmatpush1.bf16.msra.mxu0 0
    %430 = vmatprep.subr.bf16.mxu0 0
    %431 = vmatpush1.bf16.msra.mxu0 0
    %432 = vmatprep.mubr.bf16.mxu0 0
    %433 = vmatmul.mubr.bf16.gmra.mrb[0].mxu0 %v321
    %v434 = vpop.f32.mrb[0].mxu0
    %v435 = vadd.f32 %v350, %v434
    %v436 = vpop.f32.mrb[0].mxu0
    %v437 = vpop.f32.mrb[0].mxu0
    %v438 = vadd.f32 %v350, %v437
    %v439 = vpop.f32.mrb[0].mxu0
    %440 = vmatprep.mubr.bf16.mxu0 0
    %441 = vmatmul.mubr.bf16.gmra.mrb[0].mxu0 %v322
    %v442 = vpop.f32.mrb[0].mxu0
    %v443 = vadd.f32 %v350, %v442
    %v444 = vpop.f32.mrb[0].mxu0
    %v445 = vpop.f32.mrb[0].mxu0
    %v446 = vadd.f32 %v350, %v445
    %v447 = vpop.f32.mrb[0].mxu0
    %448 = vmatprep.mubr.bf16.mxu0 0
    %449 = vmatmul.mubr.bf16.gmra.mrb[0].mxu0 %v323
    %v450 = vpop.f32.mrb[0].mxu0
    %v451 = vadd.f32 %v350, %v450
    %v452 = vpop.f32.mrb[0].mxu0
    %v453 = vpop.f32.mrb[0].mxu0
    %v454 = vadd.f32 %v350, %v453
    %v455 = vpop.f32.mrb[0].mxu0
    %456 = vmatprep.mubr.bf16.mxu0 0
    %457 = vmatmul.mubr.bf16.gmra.mrb[0].mxu0 %v324
    %v458 = vpop.f32.mrb[0].mxu0
    %v459 = vadd.f32 %v350, %v458
    %v460 = vpop.f32.mrb[0].mxu0
    %v461 = vpop.f32.mrb[0].mxu0
    %v462 = vadd.f32 %v350, %v461
    %v463 = vpop.f32.mrb[0].mxu0
    %464 = vmatprep.mubr.bf16.mxu0 0
    %465 = vmatmul.mubr.bf16.gmra.mrb[0].mxu0 %v325
    %v466 = vpop.f32.mrb[0].mxu0
    %v467 = vadd.f32 %v350, %v466
    %v468 = vpop.f32.mrb[0].mxu0
    %v469 = vpop.f32.mrb[0].mxu0
    %v470 = vadd.f32 %v350, %v469
    %v471 = vpop.f32.mrb[0].mxu0
    %472 = vmatprep.mubr.bf16.mxu0 0
    %473 = vmatmul.mubr.bf16.gmra.mrb[0].mxu0 %v326
    %v474 = vpop.f32.mrb[0].mxu0
    %v475 = vadd.f32 %v350, %v474
    %v476 = vpop.f32.mrb[0].mxu0
    %v477 = vpop.f32.mrb[0].mxu0
    %v478 = vadd.f32 %v350, %v477
    %v479 = vpop.f32.mrb[0].mxu0
    %480 = vmatprep.mubr.bf16.mxu0 0
    %481 = vmatmul.mubr.bf16.gmra.mrb[0].mxu0 %v327
    %v482 = vpop.f32.mrb[0].mxu0
    %v483 = vadd.f32 %v350, %v482
    %v484 = vpop.f32.mrb[0].mxu0
    %v485 = vpop.f32.mrb[0].mxu0
    %v486 = vadd.f32 %v350, %v485
    %v487 = vpop.f32.mrb[0].mxu0
    %488 = vmatprep.mubr.bf16.mxu0 0
    %489 = vmatmul.mubr.bf16.gmra.mrb[0].mxu0 %v328
    %v490 = vpop.f32.mrb[0].mxu0
    %v491 = vadd.f32 %v350, %v490
    %v492 = vpop.f32.mrb[0].mxu0
    %v493 = vpop.f32.mrb[0].mxu0
    %v494 = vadd.f32 %v350, %v493
    %v495 = vpop.f32.mrb[0].mxu0
    %496 = vdwg.mxu0
    %v497 = vadd.f32 %v435, %v438
    %v498 = vadd.f32 %v497, %v443
    %v499 = vadd.f32 %v498, %v446
    %v500 = vadd.f32 %v499, %v451
    %v501 = vadd.f32 %v500, %v454
    %v502 = vadd.f32 %v501, %v459
    %v503 = vadd.f32 %v502, %v462
    %v504 = vadd.f32 %v503, %v467
    %v505 = vadd.f32 %v504, %v470
    %v506 = vadd.f32 %v505, %v475
    %v507 = vadd.f32 %v506, %v478
    %v508 = vadd.f32 %v507, %v483
    %v509 = vadd.f32 %v508, %v486
    %v510 = vadd.f32 %v509, %v491
    %v511 = vadd.f32 %v510, %v494
    %v512 = vrot.slane %v511, 4
    %v513 = vadd.f32 %v511, %v512
    %v514 = vrot.slane %v513, 2
    %v515 = vadd.f32 %v513, %v514
    %v516 = vrot.slane %v515, 1
    %v517 = vadd.f32 %v515, %v516
    %v518 = vrcp.pop 128.0
    %v519 = vmul.f32 %v517, %v518
    %v520 = vsub.f32 %v435, %v519
    %v521 = vsub.f32 %v438, %v519
    %v522 = vsub.f32 %v443, %v519
    %v523 = vsub.f32 %v446, %v519
    %v524 = vsub.f32 %v451, %v519
    %v525 = vsub.f32 %v454, %v519
    %v526 = vsub.f32 %v459, %v519
    %v527 = vsub.f32 %v462, %v519
    %v528 = vsub.f32 %v467, %v519
    %v529 = vsub.f32 %v470, %v519
    %v530 = vsub.f32 %v475, %v519
    %v531 = vsub.f32 %v478, %v519
    %v532 = vsub.f32 %v483, %v519
    %v533 = vsub.f32 %v486, %v519
    %v534 = vsub.f32 %v491, %v519
    %v535 = vsub.f32 %v494, %v519
    %v536 = vmul.f32 %v520, %v520
    %v537 = vmul.f32 %v521, %v521
    %v538 = vmul.f32 %v522, %v522
    %v539 = vmul.f32 %v523, %v523
    %v540 = vmul.f32 %v524, %v524
    %v541 = vmul.f32 %v525, %v525
    %v542 = vmul.f32 %v526, %v526
    %v543 = vmul.f32 %v527, %v527
    %v544 = vmul.f32 %v528, %v528
    %v545 = vmul.f32 %v529, %v529
    %v546 = vmul.f32 %v530, %v530
    %v547 = vmul.f32 %v531, %v531
    %v548 = vmul.f32 %v532, %v532
    %v549 = vmul.f32 %v533, %v533
    %v550 = vmul.f32 %v534, %v534
    %v551 = vmul.f32 %v535, %v535
    %v552 = vadd.f32 %v536, %v537
    %v553 = vadd.f32 %v552, %v538
    %v554 = vadd.f32 %v553, %v539
    %v555 = vadd.f32 %v554, %v540
    %v556 = vadd.f32 %v555, %v541
    %v557 = vadd.f32 %v556, %v542
    %v558 = vadd.f32 %v557, %v543
    %v559 = vadd.f32 %v558, %v544
    %v560 = vadd.f32 %v559, %v545
    %v561 = vadd.f32 %v560, %v546
    %v562 = vadd.f32 %v561, %v547
    %v563 = vadd.f32 %v562, %v548
    %v564 = vadd.f32 %v563, %v549
    %v565 = vadd.f32 %v564, %v550
    %v566 = vadd.f32 %v565, %v551
    %v567 = vrot.slane %v566, 4
    %v568 = vadd.f32 %v566, %v567
    %v569 = vrot.slane %v568, 2
    %v570 = vadd.f32 %v568, %v569
    %v571 = vrot.slane %v570, 1
    %v572 = vadd.f32 %v570, %v571
    %v573 = vmul.f32 %v572, %v518
    %v574 = vadd.f32 %v573, 1e-05
    %v575 = vrsqrt.pop %v574
    %v576 = vmul.f32 %v520, %v575
    %v577 = vmul.f32 %v521, %v575
    %v578 = vmul.f32 %v522, %v575
    %v579 = vmul.f32 %v523, %v575
    %v580 = vmul.f32 %v524, %v575
    %v581 = vmul.f32 %v525, %v575
    %v582 = vmul.f32 %v526, %v575
    %v583 = vmul.f32 %v527, %v575
    %v584 = vmul.f32 %v528, %v575
    %v585 = vmul.f32 %v529, %v575
    %v586 = vmul.f32 %v530, %v575
    %v587 = vmul.f32 %v531, %v575
    %v588 = vmul.f32 %v532, %v575
    %v589 = vmul.f32 %v533, %v575
    %v590 = vmul.f32 %v534, %v575
    %v591 = vmul.f32 %v535, %v575
    %v592 = vld [vmem:[%s9] sm:$0x1]
    %v594 = vlaneseq
    %v595 = vshrl.u32 %v594, 7
    %v596 = vsub.s32 0, %v595
    %v597 = vrot.slane %v592, %v596
    %v599 = vmul.f32 %v576, %v597
    %v600 = vmul.f32 %v577, %v597
    %v601 = vmul.f32 %v578, %v597
    %v602 = vmul.f32 %v579, %v597
    %v603 = vmul.f32 %v580, %v597
    %v604 = vmul.f32 %v581, %v597
    %v605 = vmul.f32 %v582, %v597
    %v606 = vmul.f32 %v583, %v597
    %v607 = vmul.f32 %v584, %v597
    %v608 = vmul.f32 %v585, %v597
    %v609 = vmul.f32 %v586, %v597
    %v610 = vmul.f32 %v587, %v597
    %v611 = vmul.f32 %v588, %v597
    %v612 = vmul.f32 %v589, %v597
    %v613 = vmul.f32 %v590, %v597
    %v614 = vmul.f32 %v591, %v597
    %v615 = vld [vmem:[%s10] sm:$0x1]
    %v617 = vlaneseq
    %v618 = vshrl.u32 %v617, 7
    %v619 = vsub.s32 0, %v618
    %v620 = vrot.slane %v615, %v619
    %v622 = vadd.f32 %v599, %v620
    %v623 = vadd.f32 %v600, %v620
    %v624 = vadd.f32 %v601, %v620
    %v625 = vadd.f32 %v602, %v620
    %v626 = vadd.f32 %v603, %v620
    %v627 = vadd.f32 %v604, %v620
    %v628 = vadd.f32 %v605, %v620
    %v629 = vadd.f32 %v606, %v620
    %v630 = vadd.f32 %v607, %v620
    %v631 = vadd.f32 %v608, %v620
    %v632 = vadd.f32 %v609, %v620
    %v633 = vadd.f32 %v610, %v620
    %v634 = vadd.f32 %v611, %v620
    %v635 = vadd.f32 %v612, %v620
    %v636 = vadd.f32 %v613, %v620
    %v637 = vadd.f32 %v614, %v620
    %v638 = vmax.f32 %v622, 0.0
    %v639 = vmax.f32 %v623, 0.0
    %v640 = vmax.f32 %v624, 0.0
    %v641 = vmax.f32 %v625, 0.0
    %v642 = vmax.f32 %v626, 0.0
    %v643 = vmax.f32 %v627, 0.0
    %v644 = vmax.f32 %v628, 0.0
    %v645 = vmax.f32 %v629, 0.0
    %v646 = vmax.f32 %v630, 0.0
    %v647 = vmax.f32 %v631, 0.0
    %v648 = vmax.f32 %v632, 0.0
    %v649 = vmax.f32 %v633, 0.0
    %v650 = vmax.f32 %v634, 0.0
    %v651 = vmax.f32 %v635, 0.0
    %v652 = vmax.f32 %v636, 0.0
    %v653 = vmax.f32 %v637, 0.0
    %654 = vst [vmem:[#allocation2] sm:$0xff] 0.0
    %655 = vst [vmem:[#allocation2 + $0x8] sm:$0x3] 0.0
    %656 = vst [vmem:[#allocation2 + $0xa0] sm:$0xff] 0.0
    %657 = vst [vmem:[#allocation2 + $0xa8] sm:$0x3] 0.0
    %s658 = scalar_lea.vmem [#allocation2], 144
    %659 = vst [vmem:[%s658] sm:$0xff] 0.0
    %660 = vst [vmem:[%s658 + $0x8] sm:$0x3] 0.0
    %661 = vst [vmem:[%s658 + $0xa0] sm:$0xff] 0.0
    %662 = vst [vmem:[%s658 + $0xa8] sm:$0x3] 0.0
    %s663 = scalar_lea.vmem [#allocation2], 16
    %664 = vst [vmem:[%s663] sm:$0x1] 0.0
    %665 = vst [vmem:[%s663 + $0x10] sm:$0x1] 0.0
    %666 = vst [vmem:[%s663 + $0x20] sm:$0x1] 0.0
    %667 = vst [vmem:[%s663 + $0x30] sm:$0x1] 0.0
    %668 = vst [vmem:[%s663 + $0x40] sm:$0x1] 0.0
    %669 = vst [vmem:[%s663 + $0x50] sm:$0x1] 0.0
    %670 = vst [vmem:[%s663 + $0x60] sm:$0x1] 0.0
    %671 = vst [vmem:[%s663 + $0x70] sm:$0x1] 0.0
    %672 = vst [vmem:[%s663 + $0xa0] sm:$0x1] 0.0
    %673 = vst [vmem:[%s663 + $0xb0] sm:$0x1] 0.0
    %674 = vst [vmem:[%s663 + $0xc0] sm:$0x1] 0.0
    %675 = vst [vmem:[%s663 + $0xd0] sm:$0x1] 0.0
    %676 = vst [vmem:[%s663 + $0xe0] sm:$0x1] 0.0
    %677 = vst [vmem:[%s663 + $0xf0] sm:$0x1] 0.0
    %678 = vst [vmem:[%s663 + $0x100] sm:$0x1] 0.0
    %679 = vst [vmem:[%s663 + $0x110] sm:$0x1] 0.0
    %680 = vst [vmem:[%s663 + $0x9] sm:$0x1] 0.0
    %681 = vst [vmem:[%s663 + $0x19] sm:$0x1] 0.0
    %682 = vst [vmem:[%s663 + $0x29] sm:$0x1] 0.0
    %683 = vst [vmem:[%s663 + $0x39] sm:$0x1] 0.0
    %684 = vst [vmem:[%s663 + $0x49] sm:$0x1] 0.0
    %685 = vst [vmem:[%s663 + $0x59] sm:$0x1] 0.0
    %686 = vst [vmem:[%s663 + $0x69] sm:$0x1] 0.0
    %687 = vst [vmem:[%s663 + $0x79] sm:$0x1] 0.0
    %688 = vst [vmem:[%s663 + $0xa9] sm:$0x1] 0.0
    %689 = vst [vmem:[%s663 + $0xb9] sm:$0x1] 0.0
    %690 = vst [vmem:[%s663 + $0xc9] sm:$0x1] 0.0
    %691 = vst [vmem:[%s663 + $0xd9] sm:$0x1] 0.0
    %692 = vst [vmem:[%s663 + $0xe9] sm:$0x1] 0.0
    %693 = vst [vmem:[%s663 + $0xf9] sm:$0x1] 0.0
    %694 = vst [vmem:[%s663 + $0x109] sm:$0x1] 0.0
    %695 = vst [vmem:[%s663 + $0x119] sm:$0x1] 0.0
    %696 = vst [vmem:[%s663 + $0x1] sm:$0xff] %v638
    %697 = vst [vmem:[%s663 + $0x11] sm:$0xff] %v639
    %698 = vst [vmem:[%s663 + $0x21] sm:$0xff] %v640
    %699 = vst [vmem:[%s663 + $0x31] sm:$0xff] %v641
    %700 = vst [vmem:[%s663 + $0x41] sm:$0xff] %v642
    %701 = vst [vmem:[%s663 + $0x51] sm:$0xff] %v643
    %702 = vst [vmem:[%s663 + $0x61] sm:$0xff] %v644
    %703 = vst [vmem:[%s663 + $0x71] sm:$0xff] %v645
    %704 = vst [vmem:[%s663 + $0xa1] sm:$0xff] %v646
    %705 = vst [vmem:[%s663 + $0xb1] sm:$0xff] %v647
    %706 = vst [vmem:[%s663 + $0xc1] sm:$0xff] %v648
    %707 = vst [vmem:[%s663 + $0xd1] sm:$0xff] %v649
    %708 = vst [vmem:[%s663 + $0xe1] sm:$0xff] %v650
    %709 = vst [vmem:[%s663 + $0xf1] sm:$0xff] %v651
    %710 = vst [vmem:[%s663 + $0x101] sm:$0xff] %v652
    %711 = vst [vmem:[%s663 + $0x111] sm:$0xff] %v653
    %v712 = vld [vmem:[#allocation2] sm:$0xff]
    %v713 = vld [vmem:[#allocation2 + $0x10] sm:$0xff]
    %v714 = vld [vmem:[#allocation2 + $0x20] sm:$0xff]
    %v715 = vld [vmem:[#allocation2 + $0x30] sm:$0xff]
    %v716 = vld [vmem:[#allocation2 + $0x40] sm:$0xff]
    %v717 = vld [vmem:[#allocation2 + $0x50] sm:$0xff]
    %v718 = vld [vmem:[#allocation2 + $0x60] sm:$0xff]
    %v719 = vld [vmem:[#allocation2 + $0x70] sm:$0xff]
    %v720 = vld [vmem:[#allocation2 + $0xa0] sm:$0xff]
    %v721 = vld [vmem:[#allocation2 + $0xb0] sm:$0xff]
    %v722 = vld [vmem:[#allocation2 + $0xc0] sm:$0xff]
    %v723 = vld [vmem:[#allocation2 + $0xd0] sm:$0xff]
    %v724 = vld [vmem:[#allocation2 + $0xe0] sm:$0xff]
    %v725 = vld [vmem:[#allocation2 + $0xf0] sm:$0xff]
    %v726 = vld [vmem:[#allocation2 + $0x100] sm:$0xff]
    %v727 = vld [vmem:[#allocation2 + $0x110] sm:$0xff]
    %v728 = vpack.c.bf16 %v713, %v712
    %v729 = vpack.c.bf16 %v715, %v714
    %v730 = vpack.c.bf16 %v717, %v716
    %v731 = vpack.c.bf16 %v719, %v718
    %v732 = vpack.c.bf16 %v721, %v720
    %v733 = vpack.c.bf16 %v723, %v722
    %v734 = vpack.c.bf16 %v725, %v724
    %v735 = vpack.c.bf16 %v727, %v726
    %736 = vst [vmem:[#allocation3] sm:$0xff] %v728
    %737 = vst [vmem:[#allocation3 + $0x48] sm:$0xff] %v729
    %738 = vst [vmem:[#allocation3 + $0x90] sm:$0xff] %v730
    %739 = vst [vmem:[#allocation3 + $0xd8] sm:$0xff] %v731
    %740 = vst [vmem:[#allocation3 + $0x120] sm:$0xff] %v732
    %741 = vst [vmem:[#allocation3 + $0x168] sm:$0xff] %v733
    %742 = vst [vmem:[#allocation3 + $0x1b0] sm:$0xff] %v734
    %743 = vst [vmem:[#allocation3 + $0x1f8] sm:$0xff] %v735
    %v744 = vld [vmem:[#allocation2 + $0x1] sm:$0xff]
    %v745 = vld [vmem:[#allocation2 + $0x11] sm:$0xff]
    %v746 = vld [vmem:[#allocation2 + $0x21] sm:$0xff]
    %v747 = vld [vmem:[#allocation2 + $0x31] sm:$0xff]
    %v748 = vld [vmem:[#allocation2 + $0x41] sm:$0xff]
    %v749 = vld [vmem:[#allocation2 + $0x51] sm:$0xff]
    %v750 = vld [vmem:[#allocation2 + $0x61] sm:$0xff]
    %v751 = vld [vmem:[#allocation2 + $0x71] sm:$0xff]
    %v752 = vld [vmem:[#allocation2 + $0xa1] sm:$0xff]
    %v753 = vld [vmem:[#allocation2 + $0xb1] sm:$0xff]
    %v754 = vld [vmem:[#allocation2 + $0xc1] sm:$0xff]
    %v755 = vld [vmem:[#allocation2 + $0xd1] sm:$0xff]
    %v756 = vld [vmem:[#allocation2 + $0xe1] sm:$0xff]
    %v757 = vld [vmem:[#allocation2 + $0xf1] sm:$0xff]
    %v758 = vld [vmem:[#allocation2 + $0x101] sm:$0xff]
    %v759 = vld [vmem:[#allocation2 + $0x111] sm:$0xff]
    %v760 = vpack.c.bf16 %v745, %v744
    %v761 = vpack.c.bf16 %v747, %v746
    %v762 = vpack.c.bf16 %v749, %v748
    %v763 = vpack.c.bf16 %v751, %v750
    %v764 = vpack.c.bf16 %v753, %v752
    %v765 = vpack.c.bf16 %v755, %v754
    %v766 = vpack.c.bf16 %v757, %v756
    %v767 = vpack.c.bf16 %v759, %v758
    %768 = vst [vmem:[#allocation3 + $0x8] sm:$0xff] %v760
    %769 = vst [vmem:[#allocation3 + $0x50] sm:$0xff] %v761
    %770 = vst [vmem:[#allocation3 + $0x98] sm:$0xff] %v762
    %771 = vst [vmem:[#allocation3 + $0xe0] sm:$0xff] %v763
    %772 = vst [vmem:[#allocation3 + $0x128] sm:$0xff] %v764
    %773 = vst [vmem:[#allocation3 + $0x170] sm:$0xff] %v765
    %774 = vst [vmem:[#allocation3 + $0x1b8] sm:$0xff] %v766
    %775 = vst [vmem:[#allocation3 + $0x200] sm:$0xff] %v767
    %v776 = vld [vmem:[#allocation2 + $0x2] sm:$0xff]
    %v777 = vld [vmem:[#allocation2 + $0x12] sm:$0xff]
    %v778 = vld [vmem:[#allocation2 + $0x22] sm:$0xff]
    %v779 = vld [vmem:[#allocation2 + $0x32] sm:$0xff]
    %v780 = vld [vmem:[#allocation2 + $0x42] sm:$0xff]
    %v781 = vld [vmem:[#allocation2 + $0x52] sm:$0xff]
    %v782 = vld [vmem:[#allocation2 + $0x62] sm:$0xff]
    %v783 = vld [vmem:[#allocation2 + $0x72] sm:$0xff]
    %v784 = vld [vmem:[#allocation2 + $0xa2] sm:$0xff]
    %v785 = vld [vmem:[#allocation2 + $0xb2] sm:$0xff]
    %v786 = vld [vmem:[#allocation2 + $0xc2] sm:$0xff]
    %v787 = vld [vmem:[#allocation2 + $0xd2] sm:$0xff]
    %v788 = vld [vmem:[#allocation2 + $0xe2] sm:$0xff]
    %v789 = vld [vmem:[#allocation2 + $0xf2] sm:$0xff]
    %v790 = vld [vmem:[#allocation2 + $0x102] sm:$0xff]
    %v791 = vld [vmem:[#allocation2 + $0x112] sm:$0xff]
    %v792 = vpack.c.bf16 %v777, %v776
    %v793 = vpack.c.bf16 %v779, %v778
    %v794 = vpack.c.bf16 %v781, %v780
    %v795 = vpack.c.bf16 %v783, %v782
    %v796 = vpack.c.bf16 %v785, %v784
    %v797 = vpack.c.bf16 %v787, %v786
    %v798 = vpack.c.bf16 %v789, %v788
    %v799 = vpack.c.bf16 %v791, %v790
    %800 = vst [vmem:[#allocation3 + $0x10] sm:$0xff] %v792
    %801 = vst [vmem:[#allocation3 + $0x58] sm:$0xff] %v793
    %802 = vst [vmem:[#allocation3 + $0xa0] sm:$0xff] %v794
    %803 = vst [vmem:[#allocation3 + $0xe8] sm:$0xff] %v795
    %804 = vst [vmem:[#allocation3 + $0x130] sm:$0xff] %v796
    %805 = vst [vmem:[#allocation3 + $0x178] sm:$0xff] %v797
    %806 = vst [vmem:[#allocation3 + $0x1c0] sm:$0xff] %v798
    %807 = vst [vmem:[#allocation3 + $0x208] sm:$0xff] %v799
    %v808 = vld [vmem:[%s663] sm:$0xff]
    %v809 = vld [vmem:[%s663 + $0x10] sm:$0xff]
    %v810 = vld [vmem:[%s663 + $0x20] sm:$0xff]
    %v811 = vld [vmem:[%s663 + $0x30] sm:$0xff]
    %v812 = vld [vmem:[%s663 + $0x40] sm:$0xff]
    %v813 = vld [vmem:[%s663 + $0x50] sm:$0xff]
    %v814 = vld [vmem:[%s663 + $0x60] sm:$0xff]
    %v815 = vld [vmem:[%s663 + $0x70] sm:$0xff]
    %v816 = vld [vmem:[%s663 + $0xa0] sm:$0xff]
    %v817 = vld [vmem:[%s663 + $0xb0] sm:$0xff]
    %v818 = vld [vmem:[%s663 + $0xc0] sm:$0xff]
    %v819 = vld [vmem:[%s663 + $0xd0] sm:$0xff]
    %v820 = vld [vmem:[%s663 + $0xe0] sm:$0xff]
    %v821 = vld [vmem:[%s663 + $0xf0] sm:$0xff]
    %v822 = vld [vmem:[%s663 + $0x100] sm:$0xff]
    %v823 = vld [vmem:[%s663 + $0x110] sm:$0xff]
    %v824 = vpack.c.bf16 %v809, %v808
    %v825 = vpack.c.bf16 %v811, %v810
    %v826 = vpack.c.bf16 %v813, %v812
    %v827 = vpack.c.bf16 %v815, %v814
    %v828 = vpack.c.bf16 %v817, %v816
    %v829 = vpack.c.bf16 %v819, %v818
    %v830 = vpack.c.bf16 %v821, %v820
    %v831 = vpack.c.bf16 %v823, %v822
    %832 = vst [vmem:[#allocation3 + $0x18] sm:$0xff] %v824
    %833 = vst [vmem:[#allocation3 + $0x60] sm:$0xff] %v825
    %834 = vst [vmem:[#allocation3 + $0xa8] sm:$0xff] %v826
    %835 = vst [vmem:[#allocation3 + $0xf0] sm:$0xff] %v827
    %836 = vst [vmem:[#allocation3 + $0x138] sm:$0xff] %v828
    %837 = vst [vmem:[#allocation3 + $0x180] sm:$0xff] %v829
    %838 = vst [vmem:[#allocation3 + $0x1c8] sm:$0xff] %v830
    %839 = vst [vmem:[#allocation3 + $0x210] sm:$0xff] %v831
    %v840 = vld [vmem:[%s663 + $0x1] sm:$0xff]
    %v841 = vld [vmem:[%s663 + $0x11] sm:$0xff]
    %v842 = vld [vmem:[%s663 + $0x21] sm:$0xff]
    %v843 = vld [vmem:[%s663 + $0x31] sm:$0xff]
    %v844 = vld [vmem:[%s663 + $0x41] sm:$0xff]
    %v845 = vld [vmem:[%s663 + $0x51] sm:$0xff]
    %v846 = vld [vmem:[%s663 + $0x61] sm:$0xff]
    %v847 = vld [vmem:[%s663 + $0x71] sm:$0xff]
    %v848 = vld [vmem:[%s663 + $0xa1] sm:$0xff]
    %v849 = vld [vmem:[%s663 + $0xb1] sm:$0xff]
    %v850 = vld [vmem:[%s663 + $0xc1] sm:$0xff]
    %v851 = vld [vmem:[%s663 + $0xd1] sm:$0xff]
    %v852 = vld [vmem:[%s663 + $0xe1] sm:$0xff]
    %v853 = vld [vmem:[%s663 + $0xf1] sm:$0xff]
    %v854 = vld [vmem:[%s663 + $0x101] sm:$0xff]
    %v855 = vld [vmem:[%s663 + $0x111] sm:$0xff]
    %v856 = vpack.c.bf16 %v841, %v840
    %v857 = vpack.c.bf16 %v843, %v842
    %v858 = vpack.c.bf16 %v845, %v844
    %v859 = vpack.c.bf16 %v847, %v846
    %v860 = vpack.c.bf16 %v849, %v848
    %v861 = vpack.c.bf16 %v851, %v850
    %v862 = vpack.c.bf16 %v853, %v852
    %v863 = vpack.c.bf16 %v855, %v854
    %864 = vst [vmem:[#allocation3 + $0x20] sm:$0xff] %v856
    %865 = vst [vmem:[#allocation3 + $0x68] sm:$0xff] %v857
    %866 = vst [vmem:[#allocation3 + $0xb0] sm:$0xff] %v858
    %867 = vst [vmem:[#allocation3 + $0xf8] sm:$0xff] %v859
    %868 = vst [vmem:[#allocation3 + $0x140] sm:$0xff] %v860
    %869 = vst [vmem:[#allocation3 + $0x188] sm:$0xff] %v861
    %870 = vst [vmem:[#allocation3 + $0x1d0] sm:$0xff] %v862
    %871 = vst [vmem:[#allocation3 + $0x218] sm:$0xff] %v863
    %v872 = vld [vmem:[%s663 + $0x2] sm:$0xff]
    %v873 = vld [vmem:[%s663 + $0x12] sm:$0xff]
    %v874 = vld [vmem:[%s663 + $0x22] sm:$0xff]
    %v875 = vld [vmem:[%s663 + $0x32] sm:$0xff]
    %v876 = vld [vmem:[%s663 + $0x42] sm:$0xff]
    %v877 = vld [vmem:[%s663 + $0x52] sm:$0xff]
    %v878 = vld [vmem:[%s663 + $0x62] sm:$0xff]
    %v879 = vld [vmem:[%s663 + $0x72] sm:$0xff]
    %v880 = vld [vmem:[%s663 + $0xa2] sm:$0xff]
    %v881 = vld [vmem:[%s663 + $0xb2] sm:$0xff]
    %v882 = vld [vmem:[%s663 + $0xc2] sm:$0xff]
    %v883 = vld [vmem:[%s663 + $0xd2] sm:$0xff]
    %v884 = vld [vmem:[%s663 + $0xe2] sm:$0xff]
    %v885 = vld [vmem:[%s663 + $0xf2] sm:$0xff]
    %v886 = vld [vmem:[%s663 + $0x102] sm:$0xff]
    %v887 = vld [vmem:[%s663 + $0x112] sm:$0xff]
    %v888 = vpack.c.bf16 %v873, %v872
    %v889 = vpack.c.bf16 %v875, %v874
    %v890 = vpack.c.bf16 %v877, %v876
    %v891 = vpack.c.bf16 %v879, %v878
    %v892 = vpack.c.bf16 %v881, %v880
    %v893 = vpack.c.bf16 %v883, %v882
    %v894 = vpack.c.bf16 %v885, %v884
    %v895 = vpack.c.bf16 %v887, %v886
    %896 = vst [vmem:[#allocation3 + $0x28] sm:$0xff] %v888
    %897 = vst [vmem:[#allocation3 + $0x70] sm:$0xff] %v889
    %898 = vst [vmem:[#allocation3 + $0xb8] sm:$0xff] %v890
    %899 = vst [vmem:[#allocation3 + $0x100] sm:$0xff] %v891
    %900 = vst [vmem:[#allocation3 + $0x148] sm:$0xff] %v892
    %901 = vst [vmem:[#allocation3 + $0x190] sm:$0xff] %v893
    %902 = vst [vmem:[#allocation3 + $0x1d8] sm:$0xff] %v894
    %903 = vst [vmem:[#allocation3 + $0x220] sm:$0xff] %v895
    %s904 = scalar_lea.vmem [#allocation2], 32
    %v905 = vld [vmem:[%s904] sm:$0xff]
    %v906 = vld [vmem:[%s904 + $0x10] sm:$0xff]
    %v907 = vld [vmem:[%s904 + $0x20] sm:$0xff]
    %v908 = vld [vmem:[%s904 + $0x30] sm:$0xff]
    %v909 = vld [vmem:[%s904 + $0x40] sm:$0xff]
    %v910 = vld [vmem:[%s904 + $0x50] sm:$0xff]
    %v911 = vld [vmem:[%s904 + $0x60] sm:$0xff]
    %v912 = vld [vmem:[%s904 + $0x70] sm:$0xff]
    %v913 = vld [vmem:[%s904 + $0xa0] sm:$0xff]
    %v914 = vld [vmem:[%s904 + $0xb0] sm:$0xff]
    %v915 = vld [vmem:[%s904 + $0xc0] sm:$0xff]
    %v916 = vld [vmem:[%s904 + $0xd0] sm:$0xff]
    %v917 = vld [vmem:[%s904 + $0xe0] sm:$0xff]
    %v918 = vld [vmem:[%s904 + $0xf0] sm:$0xff]
    %v919 = vld [vmem:[%s904 + $0x100] sm:$0xff]
    %v920 = vld [vmem:[%s904 + $0x110] sm:$0xff]
    %v921 = vpack.c.bf16 %v906, %v905
    %v922 = vpack.c.bf16 %v908, %v907
    %v923 = vpack.c.bf16 %v910, %v909
    %v924 = vpack.c.bf16 %v912, %v911
    %v925 = vpack.c.bf16 %v914, %v913
    %v926 = vpack.c.bf16 %v916, %v915
    %v927 = vpack.c.bf16 %v918, %v917
    %v928 = vpack.c.bf16 %v920, %v919
    %929 = vst [vmem:[#allocation3 + $0x30] sm:$0xff] %v921
    %930 = vst [vmem:[#allocation3 + $0x78] sm:$0xff] %v922
    %931 = vst [vmem:[#allocation3 + $0xc0] sm:$0xff] %v923
    %932 = vst [vmem:[#allocation3 + $0x108] sm:$0xff] %v924
    %933 = vst [vmem:[#allocation3 + $0x150] sm:$0xff] %v925
    %934 = vst [vmem:[#allocation3 + $0x198] sm:$0xff] %v926
    %935 = vst [vmem:[#allocation3 + $0x1e0] sm:$0xff] %v927
    %936 = vst [vmem:[#allocation3 + $0x228] sm:$0xff] %v928
    %v937 = vld [vmem:[%s904 + $0x1] sm:$0xff]
    %v938 = vld [vmem:[%s904 + $0x11] sm:$0xff]
    %v939 = vld [vmem:[%s904 + $0x21] sm:$0xff]
    %v940 = vld [vmem:[%s904 + $0x31] sm:$0xff]
    %v941 = vld [vmem:[%s904 + $0x41] sm:$0xff]
    %v942 = vld [vmem:[%s904 + $0x51] sm:$0xff]
    %v943 = vld [vmem:[%s904 + $0x61] sm:$0xff]
    %v944 = vld [vmem:[%s904 + $0x71] sm:$0xff]
    %v945 = vld [vmem:[%s904 + $0xa1] sm:$0xff]
    %v946 = vld [vmem:[%s904 + $0xb1] sm:$0xff]
    %v947 = vld [vmem:[%s904 + $0xc1] sm:$0xff]
    %v948 = vld [vmem:[%s904 + $0xd1] sm:$0xff]
    %v949 = vld [vmem:[%s904 + $0xe1] sm:$0xff]
    %v950 = vld [vmem:[%s904 + $0xf1] sm:$0xff]
    %v951 = vld [vmem:[%s904 + $0x101] sm:$0xff]
    %v952 = vld [vmem:[%s904 + $0x111] sm:$0xff]
    %v953 = vpack.c.bf16 %v938, %v937
    %v954 = vpack.c.bf16 %v940, %v939
    %v955 = vpack.c.bf16 %v942, %v941
    %v956 = vpack.c.bf16 %v944, %v943
    %v957 = vpack.c.bf16 %v946, %v945
    %v958 = vpack.c.bf16 %v948, %v947
    %v959 = vpack.c.bf16 %v950, %v949
    %v960 = vpack.c.bf16 %v952, %v951
    %961 = vst [vmem:[#allocation3 + $0x38] sm:$0xff] %v953
    %962 = vst [vmem:[#allocation3 + $0x80] sm:$0xff] %v954
    %963 = vst [vmem:[#allocation3 + $0xc8] sm:$0xff] %v955
    %964 = vst [vmem:[#allocation3 + $0x110] sm:$0xff] %v956
    %965 = vst [vmem:[#allocation3 + $0x158] sm:$0xff] %v957
    %966 = vst [vmem:[#allocation3 + $0x1a0] sm:$0xff] %v958
    %967 = vst [vmem:[#allocation3 + $0x1e8] sm:$0xff] %v959
    %968 = vst [vmem:[#allocation3 + $0x230] sm:$0xff] %v960
    %v969 = vld [vmem:[%s904 + $0x2] sm:$0xff]
    %v970 = vld [vmem:[%s904 + $0x12] sm:$0xff]
    %v971 = vld [vmem:[%s904 + $0x22] sm:$0xff]
    %v972 = vld [vmem:[%s904 + $0x32] sm:$0xff]
    %v973 = vld [vmem:[%s904 + $0x42] sm:$0xff]
    %v974 = vld [vmem:[%s904 + $0x52] sm:$0xff]
    %v975 = vld [vmem:[%s904 + $0x62] sm:$0xff]
    %v976 = vld [vmem:[%s904 + $0x72] sm:$0xff]
    %v977 = vld [vmem:[%s904 + $0xa2] sm:$0xff]
    %v978 = vld [vmem:[%s904 + $0xb2] sm:$0xff]
    %v979 = vld [vmem:[%s904 + $0xc2] sm:$0xff]
    %v980 = vld [vmem:[%s904 + $0xd2] sm:$0xff]
    %v981 = vld [vmem:[%s904 + $0xe2] sm:$0xff]
    %v982 = vld [vmem:[%s904 + $0xf2] sm:$0xff]
    %v983 = vld [vmem:[%s904 + $0x102] sm:$0xff]
    %v984 = vld [vmem:[%s904 + $0x112] sm:$0xff]
    %v985 = vpack.c.bf16 %v970, %v969
    %v986 = vpack.c.bf16 %v972, %v971
    %v987 = vpack.c.bf16 %v974, %v973
    %v988 = vpack.c.bf16 %v976, %v975
    %v989 = vpack.c.bf16 %v978, %v977
    %v990 = vpack.c.bf16 %v980, %v979
    %v991 = vpack.c.bf16 %v982, %v981
    %v992 = vpack.c.bf16 %v984, %v983
    %993 = vst [vmem:[#allocation3 + $0x40] sm:$0xff] %v985
    %994 = vst [vmem:[#allocation3 + $0x88] sm:$0xff] %v986
    %995 = vst [vmem:[#allocation3 + $0xd0] sm:$0xff] %v987
    %996 = vst [vmem:[#allocation3 + $0x118] sm:$0xff] %v988
    %997 = vst [vmem:[#allocation3 + $0x160] sm:$0xff] %v989
    %998 = vst [vmem:[#allocation3 + $0x1a8] sm:$0xff] %v990
    %999 = vst [vmem:[#allocation3 + $0x1f0] sm:$0xff] %v991
    %1000 = vst [vmem:[#allocation3 + $0x238] sm:$0xff] %v992
    %v1001 = vld [vmem:[#allocation3] sm:$0xff]
    %v1002 = vld [vmem:[#allocation3 + $0x8] sm:$0xff]
    %v1003 = vld [vmem:[#allocation3 + $0x10] sm:$0xff]
    %v1004 = vld [vmem:[#allocation3 + $0x18] sm:$0xff]
    %v1005 = vld [vmem:[#allocation3 + $0x20] sm:$0xff]
    %v1006 = vld [vmem:[#allocation3 + $0x28] sm:$0xff]
    %v1007 = vld [vmem:[#allocation3 + $0x30] sm:$0xff]
    %v1008 = vld [vmem:[#allocation3 + $0x38] sm:$0xff]
    %v1009 = vld [vmem:[#allocation3 + $0x40] sm:$0xff]
    %v1010 = vld [vmem:[#allocation3 + $0x48] sm:$0xff]
    %v1011 = vld [vmem:[#allocation3 + $0x50] sm:$0xff]
    %v1012 = vld [vmem:[#allocation3 + $0x58] sm:$0xff]
    %v1013 = vld [vmem:[#allocation3 + $0x60] sm:$0xff]
    %v1014 = vld [vmem:[#allocation3 + $0x68] sm:$0xff]
    %v1015 = vld [vmem:[#allocation3 + $0x70] sm:$0xff]
    %v1016 = vld [vmem:[#allocation3 + $0x78] sm:$0xff]
    %v1017 = vld [vmem:[#allocation3 + $0x80] sm:$0xff]
    %v1018 = vld [vmem:[#allocation3 + $0x88] sm:$0xff]
    %v1019 = vld [vmem:[#allocation3 + $0x90] sm:$0xff]
    %v1020 = vld [vmem:[#allocation3 + $0x98] sm:$0xff]
    %v1021 = vld [vmem:[#allocation3 + $0xa0] sm:$0xff]
    %v1022 = vld [vmem:[#allocation3 + $0xa8] sm:$0xff]
    %v1023 = vld [vmem:[#allocation3 + $0xb0] sm:$0xff]
    %v1024 = vld [vmem:[#allocation3 + $0xb8] sm:$0xff]
    %v1025 = vld [vmem:[#allocation3 + $0xc0] sm:$0xff]
    %v1026 = vld [vmem:[#allocation3 + $0xc8] sm:$0xff]
    %v1027 = vld [vmem:[#allocation3 + $0xd0] sm:$0xff]
    %v1028 = vld [vmem:[#allocation3 + $0xd8] sm:$0xff]
    %v1029 = vld [vmem:[#allocation3 + $0xe0] sm:$0xff]
    %v1030 = vld [vmem:[#allocation3 + $0xe8] sm:$0xff]
    %v1031 = vld [vmem:[#allocation3 + $0xf0] sm:$0xff]
    %v1032 = vld [vmem:[#allocation3 + $0xf8] sm:$0xff]
    %v1033 = vld [vmem:[#allocation3 + $0x100] sm:$0xff]
    %v1034 = vld [vmem:[#allocation3 + $0x108] sm:$0xff]
    %v1035 = vld [vmem:[#allocation3 + $0x110] sm:$0xff]
    %v1036 = vld [vmem:[#allocation3 + $0x118] sm:$0xff]
    %v1037 = vld [vmem:[#allocation3 + $0x120] sm:$0xff]
    %v1038 = vld [vmem:[#allocation3 + $0x128] sm:$0xff]
    %v1039 = vld [vmem:[#allocation3 + $0x130] sm:$0xff]
    %v1040 = vld [vmem:[#allocation3 + $0x138] sm:$0xff]
    %v1041 = vld [vmem:[#allocation3 + $0x140] sm:$0xff]
    %v1042 = vld [vmem:[#allocation3 + $0x148] sm:$0xff]
    %v1043 = vld [vmem:[#allocation3 + $0x150] sm:$0xff]
    %v1044 = vld [vmem:[#allocation3 + $0x158] sm:$0xff]
    %v1045 = vld [vmem:[#allocation3 + $0x160] sm:$0xff]
    %v1046 = vld [vmem:[#allocation3 + $0x168] sm:$0xff]
    %v1047 = vld [vmem:[#allocation3 + $0x170] sm:$0xff]
    %v1048 = vld [vmem:[#allocation3 + $0x178] sm:$0xff]
    %v1049 = vld [vmem:[#allocation3 + $0x180] sm:$0xff]
    %v1050 = vld [vmem:[#allocation3 + $0x188] sm:$0xff]
    %v1051 = vld [vmem:[#allocation3 + $0x190] sm:$0xff]
    %v1052 = vld [vmem:[#allocation3 + $0x198] sm:$0xff]
    %v1053 = vld [vmem:[#allocation3 + $0x1a0] sm:$0xff]
    %v1054 = vld [vmem:[#allocation3 + $0x1a8] sm:$0xff]
    %v1055 = vld [vmem:[#allocation3 + $0x1b0] sm:$0xff]
    %v1056 = vld [vmem:[#allocation3 + $0x1b8] sm:$0xff]
    %v1057 = vld [vmem:[#allocation3 + $0x1c0] sm:$0xff]
    %v1058 = vld [vmem:[#allocation3 + $0x1c8] sm:$0xff]
    %v1059 = vld [vmem:[#allocation3 + $0x1d0] sm:$0xff]
    %v1060 = vld [vmem:[#allocation3 + $0x1d8] sm:$0xff]
    %v1061 = vld [vmem:[#allocation3 + $0x1e0] sm:$0xff]
    %v1062 = vld [vmem:[#allocation3 + $0x1e8] sm:$0xff]
    %v1063 = vld [vmem:[#allocation3 + $0x1f0] sm:$0xff]
    %v1064 = vld [vmem:[#allocation3 + $0x1f8] sm:$0xff]
    %v1065 = vld [vmem:[#allocation3 + $0x200] sm:$0xff]
    %v1066 = vld [vmem:[#allocation3 + $0x208] sm:$0xff]
    %v1067 = vld [vmem:[#allocation3 + $0x210] sm:$0xff]
    %v1068 = vld [vmem:[#allocation3 + $0x218] sm:$0xff]
    %v1069 = vld [vmem:[#allocation3 + $0x220] sm:$0xff]
    %v1070 = vld [vmem:[#allocation3 + $0x228] sm:$0xff]
    %v1071 = vld [vmem:[#allocation3 + $0x230] sm:$0xff]
    %v1072 = vld [vmem:[#allocation3 + $0x238] sm:$0xff]
    %v1073 = vld [vmem:[#allocation9] sm:$0xf]
    %v1074 = vld [vmem:[#allocation9 + $0x4] sm:$0xf]
    %v1075 = vld [vmem:[#allocation9 + $0x8] sm:$0xf]
    %v1076 = vld [vmem:[#allocation9 + $0xc] sm:$0xf]
    %v1077 = vld [vmem:[#allocation9 + $0x10] sm:$0xf]
    %v1078 = vld [vmem:[#allocation9 + $0x14] sm:$0xf]
    %v1079 = vld [vmem:[#allocation9 + $0x18] sm:$0xf]
    %v1080 = vld [vmem:[#allocation9 + $0x1c] sm:$0xf]
    %v1081 = vld [vmem:[#allocation9 + $0x20] sm:$0xf]
    %v1082 = vld [vmem:[#allocation9 + $0x24] sm:$0xf]
    %v1083 = vld [vmem:[#allocation9 + $0x28] sm:$0xf]
    %v1084 = vld [vmem:[#allocation9 + $0x2c] sm:$0xf]
    %v1085 = vld [vmem:[#allocation9 + $0x30] sm:$0xf]
    %v1086 = vld [vmem:[#allocation9 + $0x34] sm:$0xf]
    %v1087 = vld [vmem:[#allocation9 + $0x38] sm:$0xf]
    %v1088 = vld [vmem:[#allocation9 + $0x3c] sm:$0xf]
    %v1089 = vld [vmem:[#allocation9 + $0x40] sm:$0xf]
    %v1090 = vld [vmem:[#allocation9 + $0x44] sm:$0xf]
    %v1091 = vld [vmem:[#allocation9 + $0x48] sm:$0xf]
    %v1092 = vld [vmem:[#allocation9 + $0x4c] sm:$0xf]
    %v1093 = vld [vmem:[#allocation9 + $0x50] sm:$0xf]
    %v1094 = vld [vmem:[#allocation9 + $0x54] sm:$0xf]
    %v1095 = vld [vmem:[#allocation9 + $0x58] sm:$0xf]
    %v1096 = vld [vmem:[#allocation9 + $0x5c] sm:$0xf]
    %v1097 = vld [vmem:[#allocation9 + $0x60] sm:$0xf]
    %v1098 = vld [vmem:[#allocation9 + $0x64] sm:$0xf]
    %v1099 = vld [vmem:[#allocation9 + $0x68] sm:$0xf]
    %v1100 = vld [vmem:[#allocation9 + $0x6c] sm:$0xf]
    %v1101 = vld [vmem:[#allocation9 + $0x70] sm:$0xf]
    %v1102 = vld [vmem:[#allocation9 + $0x74] sm:$0xf]
    %v1103 = vld [vmem:[#allocation9 + $0x78] sm:$0xf]
    %v1104 = vld [vmem:[#allocation9 + $0x7c] sm:$0xf]
    %v1105 = vld [vmem:[#allocation9 + $0x80] sm:$0xf]
    %v1106 = vld [vmem:[#allocation9 + $0x84] sm:$0xf]
    %v1107 = vld [vmem:[#allocation9 + $0x88] sm:$0xf]
    %v1108 = vld [vmem:[#allocation9 + $0x8c] sm:$0xf]
    %v1109 = vld [vmem:[#allocation9 + $0x90] sm:$0xf]
    %v1110 = vld [vmem:[#allocation9 + $0x94] sm:$0xf]
    %v1111 = vld [vmem:[#allocation9 + $0x98] sm:$0xf]
    %v1112 = vld [vmem:[#allocation9 + $0x9c] sm:$0xf]
    %v1113 = vld [vmem:[#allocation9 + $0xa0] sm:$0xf]
    %v1114 = vld [vmem:[#allocation9 + $0xa4] sm:$0xf]
    %v1115 = vld [vmem:[#allocation9 + $0xa8] sm:$0xf]
    %v1116 = vld [vmem:[#allocation9 + $0xac] sm:$0xf]
    %v1117 = vld [vmem:[#allocation9 + $0xb0] sm:$0xf]
    %v1118 = vld [vmem:[#allocation9 + $0xb4] sm:$0xf]
    %v1119 = vld [vmem:[#allocation9 + $0xb8] sm:$0xf]
    %v1120 = vld [vmem:[#allocation9 + $0xbc] sm:$0xf]
    %v1121 = vld [vmem:[#allocation9 + $0xc0] sm:$0xf]
    %v1122 = vld [vmem:[#allocation9 + $0xc4] sm:$0xf]
    %v1123 = vld [vmem:[#allocation9 + $0xc8] sm:$0xf]
    %v1124 = vld [vmem:[#allocation9 + $0xcc] sm:$0xf]
    %v1125 = vld [vmem:[#allocation9 + $0xd0] sm:$0xf]
    %v1126 = vld [vmem:[#allocation9 + $0xd4] sm:$0xf]
    %v1127 = vld [vmem:[#allocation9 + $0xd8] sm:$0xf]
    %v1128 = vld [vmem:[#allocation9 + $0xdc] sm:$0xf]
    %v1129 = vld [vmem:[#allocation9 + $0xe0] sm:$0xf]
    %v1130 = vld [vmem:[#allocation9 + $0xe4] sm:$0xf]
    %v1131 = vld [vmem:[#allocation9 + $0xe8] sm:$0xf]
    %v1132 = vld [vmem:[#allocation9 + $0xec] sm:$0xf]
    %v1133 = vld [vmem:[#allocation9 + $0xf0] sm:$0xf]
    %v1134 = vld [vmem:[#allocation9 + $0xf4] sm:$0xf]
    %v1135 = vld [vmem:[#allocation9 + $0xf8] sm:$0xf]
    %v1136 = vld [vmem:[#allocation9 + $0xfc] sm:$0xf]
    %v1137 = vld [vmem:[#allocation9 + $0x100] sm:$0xf]
    %v1138 = vld [vmem:[#allocation9 + $0x104] sm:$0xf]
    %v1139 = vld [vmem:[#allocation9 + $0x108] sm:$0xf]
    %v1140 = vld [vmem:[#allocation9 + $0x10c] sm:$0xf]
    %v1141 = vld [vmem:[#allocation9 + $0x110] sm:$0xf]
    %v1142 = vld [vmem:[#allocation9 + $0x114] sm:$0xf]
    %v1143 = vld [vmem:[#allocation9 + $0x118] sm:$0xf]
    %v1144 = vld [vmem:[#allocation9 + $0x11c] sm:$0xf]
    %v1145 = vld [vmem:[#allocation9 + $0x120] sm:$0xf]
    %v1146 = vld [vmem:[#allocation9 + $0x124] sm:$0xf]
    %v1147 = vld [vmem:[#allocation9 + $0x128] sm:$0xf]
    %v1148 = vld [vmem:[#allocation9 + $0x12c] sm:$0xf]
    %v1149 = vld [vmem:[#allocation9 + $0x130] sm:$0xf]
    %v1150 = vld [vmem:[#allocation9 + $0x134] sm:$0xf]
    %v1151 = vld [vmem:[#allocation9 + $0x138] sm:$0xf]
    %v1152 = vld [vmem:[#allocation9 + $0x13c] sm:$0xf]
    %v1153 = vld [vmem:[#allocation9 + $0x140] sm:$0xf]
    %v1154 = vld [vmem:[#allocation9 + $0x144] sm:$0xf]
    %v1155 = vld [vmem:[#allocation9 + $0x148] sm:$0xf]
    %v1156 = vld [vmem:[#allocation9 + $0x14c] sm:$0xf]
    %v1157 = vld [vmem:[#allocation9 + $0x150] sm:$0xf]
    %v1158 = vld [vmem:[#allocation9 + $0x154] sm:$0xf]
    %v1159 = vld [vmem:[#allocation9 + $0x158] sm:$0xf]
    %v1160 = vld [vmem:[#allocation9 + $0x15c] sm:$0xf]
    %v1161 = vld [vmem:[#allocation9 + $0x160] sm:$0xf]
    %v1162 = vld [vmem:[#allocation9 + $0x164] sm:$0xf]
    %v1163 = vld [vmem:[#allocation9 + $0x168] sm:$0xf]
    %v1164 = vld [vmem:[#allocation9 + $0x16c] sm:$0xf]
    %v1165 = vld [vmem:[#allocation9 + $0x170] sm:$0xf]
    %v1166 = vld [vmem:[#allocation9 + $0x174] sm:$0xf]
    %v1167 = vld [vmem:[#allocation9 + $0x178] sm:$0xf]
    %v1168 = vld [vmem:[#allocation9 + $0x17c] sm:$0xf]
    %v1169 = vld [vmem:[#allocation9 + $0x180] sm:$0xf]
    %v1170 = vld [vmem:[#allocation9 + $0x184] sm:$0xf]
    %v1171 = vld [vmem:[#allocation9 + $0x188] sm:$0xf]
    %v1172 = vld [vmem:[#allocation9 + $0x18c] sm:$0xf]
    %v1173 = vld [vmem:[#allocation9 + $0x190] sm:$0xf]
    %v1174 = vld [vmem:[#allocation9 + $0x194] sm:$0xf]
    %v1175 = vld [vmem:[#allocation9 + $0x198] sm:$0xf]
    %v1176 = vld [vmem:[#allocation9 + $0x19c] sm:$0xf]
    %v1177 = vld [vmem:[#allocation9 + $0x1a0] sm:$0xf]
    %v1178 = vld [vmem:[#allocation9 + $0x1a4] sm:$0xf]
    %v1179 = vld [vmem:[#allocation9 + $0x1a8] sm:$0xf]
    %v1180 = vld [vmem:[#allocation9 + $0x1ac] sm:$0xf]
    %v1181 = vld [vmem:[#allocation9 + $0x1b0] sm:$0xf]
    %v1182 = vld [vmem:[#allocation9 + $0x1b4] sm:$0xf]
    %v1183 = vld [vmem:[#allocation9 + $0x1b8] sm:$0xf]
    %v1184 = vld [vmem:[#allocation9 + $0x1bc] sm:$0xf]
    %v1185 = vld [vmem:[#allocation9 + $0x1c0] sm:$0xf]
    %v1186 = vld [vmem:[#allocation9 + $0x1c4] sm:$0xf]
    %v1187 = vld [vmem:[#allocation9 + $0x1c8] sm:$0xf]
    %v1188 = vld [vmem:[#allocation9 + $0x1cc] sm:$0xf]
    %v1189 = vld [vmem:[#allocation9 + $0x1d0] sm:$0xf]
    %v1190 = vld [vmem:[#allocation9 + $0x1d4] sm:$0xf]
    %v1191 = vld [vmem:[#allocation9 + $0x1d8] sm:$0xf]
    %v1192 = vld [vmem:[#allocation9 + $0x1dc] sm:$0xf]
    %v1193 = vld [vmem:[#allocation9 + $0x1e0] sm:$0xf]
    %v1194 = vld [vmem:[#allocation9 + $0x1e4] sm:$0xf]
    %v1195 = vld [vmem:[#allocation9 + $0x1e8] sm:$0xf]
    %v1196 = vld [vmem:[#allocation9 + $0x1ec] sm:$0xf]
    %v1197 = vld [vmem:[#allocation9 + $0x1f0] sm:$0xf]
    %v1198 = vld [vmem:[#allocation9 + $0x1f4] sm:$0xf]
    %v1199 = vld [vmem:[#allocation9 + $0x1f8] sm:$0xf]
    %v1200 = vld [vmem:[#allocation9 + $0x1fc] sm:$0xf]
    %v1201 = vld [vmem:[#allocation9 + $0x200] sm:$0xf]
    %v1202 = vld [vmem:[#allocation9 + $0x204] sm:$0xf]
    %v1203 = vld [vmem:[#allocation9 + $0x208] sm:$0xf]
    %v1204 = vld [vmem:[#allocation9 + $0x20c] sm:$0xf]
    %v1205 = vld [vmem:[#allocation9 + $0x210] sm:$0xf]
    %v1206 = vld [vmem:[#allocation9 + $0x214] sm:$0xf]
    %v1207 = vld [vmem:[#allocation9 + $0x218] sm:$0xf]
    %v1208 = vld [vmem:[#allocation9 + $0x21c] sm:$0xf]
    %v1209 = vld [vmem:[#allocation9 + $0x220] sm:$0xf]
    %v1210 = vld [vmem:[#allocation9 + $0x224] sm:$0xf]
    %v1211 = vld [vmem:[#allocation9 + $0x228] sm:$0xf]
    %v1212 = vld [vmem:[#allocation9 + $0x22c] sm:$0xf]
    %v1213 = vld [vmem:[#allocation9 + $0x230] sm:$0xf]
    %v1214 = vld [vmem:[#allocation9 + $0x234] sm:$0xf]
    %v1215 = vld [vmem:[#allocation9 + $0x238] sm:$0xf]
    %v1216 = vld [vmem:[#allocation9 + $0x23c] sm:$0xf]
    %v1217 = vld [vmem:[%s4] sm:$0x1]
    %v1219 = vlaneseq
    %v1220 = vshrl.u32 %v1219, 7
    %v1221 = vsub.s32 0, %v1220
    %v1222 = vrot.slane %v1217, %v1221
    %v1368 = vunpack.c.l.b16 %v1073
    %v1369 = vunpack.c.l.b16 %v1074
    %v1370 = vunpack.c.l.b16 %v1075
    %v1371 = vunpack.c.l.b16 %v1076
    %v1372 = vunpack.c.l.b16 %v1077
    %v1373 = vunpack.c.l.b16 %v1078
    %v1374 = vunpack.c.l.b16 %v1079
    %v1375 = vunpack.c.l.b16 %v1080
    %v1376 = vunpack.c.l.b16 %v1081
    %v1377 = vunpack.c.l.b16 %v1082
    %v1378 = vunpack.c.l.b16 %v1083
    %v1379 = vunpack.c.l.b16 %v1084
    %v1380 = vunpack.c.l.b16 %v1085
    %v1381 = vunpack.c.l.b16 %v1086
    %v1382 = vunpack.c.l.b16 %v1087
    %v1383 = vunpack.c.l.b16 %v1088
    %v1384 = vunpack.c.l.b16 %v1089
    %v1385 = vunpack.c.l.b16 %v1090
    %v1386 = vunpack.c.l.b16 %v1091
    %v1387 = vunpack.c.l.b16 %v1092
    %v1388 = vunpack.c.l.b16 %v1093
    %v1389 = vunpack.c.l.b16 %v1094
    %v1390 = vunpack.c.l.b16 %v1095
    %v1391 = vunpack.c.l.b16 %v1096
    %v1392 = vunpack.c.l.b16 %v1097
    %v1393 = vunpack.c.l.b16 %v1098
    %v1394 = vunpack.c.l.b16 %v1099
    %v1395 = vunpack.c.l.b16 %v1100
    %v1396 = vunpack.c.l.b16 %v1101
    %v1397 = vunpack.c.l.b16 %v1102
    %v1398 = vunpack.c.l.b16 %v1103
    %v1399 = vunpack.c.l.b16 %v1104
    %v1400 = vunpack.c.l.b16 %v1105
    %v1401 = vunpack.c.l.b16 %v1106
    %v1402 = vunpack.c.l.b16 %v1107
    %v1403 = vunpack.c.l.b16 %v1108
    %v1404 = vunpack.c.l.b16 %v1109
    %v1405 = vunpack.c.l.b16 %v1110
    %v1406 = vunpack.c.l.b16 %v1111
    %v1407 = vunpack.c.l.b16 %v1112
    %v1408 = vunpack.c.l.b16 %v1113
    %v1409 = vunpack.c.l.b16 %v1114
    %v1410 = vunpack.c.l.b16 %v1115
    %v1411 = vunpack.c.l.b16 %v1116
    %v1412 = vunpack.c.l.b16 %v1117
    %v1413 = vunpack.c.l.b16 %v1118
    %v1414 = vunpack.c.l.b16 %v1119
    %v1415 = vunpack.c.l.b16 %v1120
    %v1416 = vunpack.c.l.b16 %v1121
    %v1417 = vunpack.c.l.b16 %v1122
    %v1418 = vunpack.c.l.b16 %v1123
    %v1419 = vunpack.c.l.b16 %v1124
    %v1420 = vunpack.c.l.b16 %v1125
    %v1421 = vunpack.c.l.b16 %v1126
    %v1422 = vunpack.c.l.b16 %v1127
    %v1423 = vunpack.c.l.b16 %v1128
    %v1424 = vunpack.c.l.b16 %v1129
    %v1425 = vunpack.c.l.b16 %v1130
    %v1426 = vunpack.c.l.b16 %v1131
    %v1427 = vunpack.c.l.b16 %v1132
    %v1428 = vunpack.c.l.b16 %v1133
    %v1429 = vunpack.c.l.b16 %v1134
    %v1430 = vunpack.c.l.b16 %v1135
    %v1431 = vunpack.c.l.b16 %v1136
    %v1432 = vunpack.c.l.b16 %v1137
    %v1433 = vunpack.c.l.b16 %v1138
    %v1434 = vunpack.c.l.b16 %v1139
    %v1435 = vunpack.c.l.b16 %v1140
    %v1436 = vunpack.c.l.b16 %v1141
    %v1437 = vunpack.c.l.b16 %v1142
    %v1438 = vunpack.c.l.b16 %v1143
    %v1439 = vunpack.c.l.b16 %v1144
    %v1440 = vunpack.c.l.b16 %v1145
    %v1441 = vunpack.c.l.b16 %v1146
    %v1442 = vunpack.c.l.b16 %v1147
    %v1443 = vunpack.c.l.b16 %v1148
    %v1444 = vunpack.c.l.b16 %v1149
    %v1445 = vunpack.c.l.b16 %v1150
    %v1446 = vunpack.c.l.b16 %v1151
    %v1447 = vunpack.c.l.b16 %v1152
    %v1448 = vunpack.c.l.b16 %v1153
    %v1449 = vunpack.c.l.b16 %v1154
    %v1450 = vunpack.c.l.b16 %v1155
    %v1451 = vunpack.c.l.b16 %v1156
    %v1452 = vunpack.c.l.b16 %v1157
    %v1453 = vunpack.c.l.b16 %v1158
    %v1454 = vunpack.c.l.b16 %v1159
    %v1455 = vunpack.c.l.b16 %v1160
    %v1456 = vunpack.c.l.b16 %v1161
    %v1457 = vunpack.c.l.b16 %v1162
    %v1458 = vunpack.c.l.b16 %v1163
    %v1459 = vunpack.c.l.b16 %v1164
    %v1460 = vunpack.c.l.b16 %v1165
    %v1461 = vunpack.c.l.b16 %v1166
    %v1462 = vunpack.c.l.b16 %v1167
    %v1463 = vunpack.c.l.b16 %v1168
    %v1464 = vunpack.c.l.b16 %v1169
    %v1465 = vunpack.c.l.b16 %v1170
    %v1466 = vunpack.c.l.b16 %v1171
    %v1467 = vunpack.c.l.b16 %v1172
    %v1468 = vunpack.c.l.b16 %v1173
    %v1469 = vunpack.c.l.b16 %v1174
    %v1470 = vunpack.c.l.b16 %v1175
    %v1471 = vunpack.c.l.b16 %v1176
    %v1472 = vunpack.c.l.b16 %v1177
    %v1473 = vunpack.c.l.b16 %v1178
    %v1474 = vunpack.c.l.b16 %v1179
    %v1475 = vunpack.c.l.b16 %v1180
    %v1476 = vunpack.c.l.b16 %v1181
    %v1477 = vunpack.c.l.b16 %v1182
    %v1478 = vunpack.c.l.b16 %v1183
    %v1479 = vunpack.c.l.b16 %v1184
    %v1480 = vunpack.c.l.b16 %v1185
    %v1481 = vunpack.c.l.b16 %v1186
    %v1482 = vunpack.c.l.b16 %v1187
    %v1483 = vunpack.c.l.b16 %v1188
    %v1484 = vunpack.c.l.b16 %v1189
    %v1485 = vunpack.c.l.b16 %v1190
    %v1486 = vunpack.c.l.b16 %v1191
    %v1487 = vunpack.c.l.b16 %v1192
    %v1488 = vunpack.c.l.b16 %v1193
    %v1489 = vunpack.c.l.b16 %v1194
    %v1490 = vunpack.c.l.b16 %v1195
    %v1491 = vunpack.c.l.b16 %v1196
    %v1492 = vunpack.c.l.b16 %v1197
    %v1493 = vunpack.c.l.b16 %v1198
    %v1494 = vunpack.c.l.b16 %v1199
    %v1495 = vunpack.c.l.b16 %v1200
    %v1496 = vunpack.c.l.b16 %v1201
    %v1497 = vunpack.c.l.b16 %v1202
    %v1498 = vunpack.c.l.b16 %v1203
    %v1499 = vunpack.c.l.b16 %v1204
    %v1500 = vunpack.c.l.b16 %v1205
    %v1501 = vunpack.c.l.b16 %v1206
    %v1502 = vunpack.c.l.b16 %v1207
    %v1503 = vunpack.c.l.b16 %v1208
    %v1504 = vunpack.c.l.b16 %v1209
    %v1505 = vunpack.c.l.b16 %v1210
    %v1506 = vunpack.c.l.b16 %v1211
    %v1507 = vunpack.c.l.b16 %v1212
    %v1508 = vunpack.c.l.b16 %v1213
    %v1509 = vunpack.c.l.b16 %v1214
    %v1510 = vunpack.c.l.b16 %v1215
    %v1511 = vunpack.c.l.b16 %v1216
    %v1512 = vpack.c.b16 %v1369, %v1368
    %v1513 = vpack.c.b16 %v1371, %v1370
    %v1514 = vpack.c.b16 %v1373, %v1372
    %v1515 = vpack.c.b16 %v1375, %v1374
    %v1516 = vpack.c.b16 %v1377, %v1376
    %v1517 = vpack.c.b16 %v1379, %v1378
    %v1518 = vpack.c.b16 %v1381, %v1380
    %v1519 = vpack.c.b16 %v1383, %v1382
    %v1520 = vpack.c.b16 %v1385, %v1384
    %v1521 = vpack.c.b16 %v1387, %v1386
    %v1522 = vpack.c.b16 %v1389, %v1388
    %v1523 = vpack.c.b16 %v1391, %v1390
    %v1524 = vpack.c.b16 %v1393, %v1392
    %v1525 = vpack.c.b16 %v1395, %v1394
    %v1526 = vpack.c.b16 %v1397, %v1396
    %v1527 = vpack.c.b16 %v1399, %v1398
    %v1528 = vpack.c.b16 %v1401, %v1400
    %v1529 = vpack.c.b16 %v1403, %v1402
    %v1530 = vpack.c.b16 %v1405, %v1404
    %v1531 = vpack.c.b16 %v1407, %v1406
    %v1532 = vpack.c.b16 %v1409, %v1408
    %v1533 = vpack.c.b16 %v1411, %v1410
    %v1534 = vpack.c.b16 %v1413, %v1412
    %v1535 = vpack.c.b16 %v1415, %v1414
    %v1536 = vpack.c.b16 %v1417, %v1416
    %v1537 = vpack.c.b16 %v1419, %v1418
    %v1538 = vpack.c.b16 %v1421, %v1420
    %v1539 = vpack.c.b16 %v1423, %v1422
    %v1540 = vpack.c.b16 %v1425, %v1424
    %v1541 = vpack.c.b16 %v1427, %v1426
    %v1542 = vpack.c.b16 %v1429, %v1428
    %v1543 = vpack.c.b16 %v1431, %v1430
    %v1544 = vpack.c.b16 %v1433, %v1432
    %v1545 = vpack.c.b16 %v1435, %v1434
    %v1546 = vpack.c.b16 %v1437, %v1436
    %v1547 = vpack.c.b16 %v1439, %v1438
    %v1548 = vpack.c.b16 %v1441, %v1440
    %v1549 = vpack.c.b16 %v1443, %v1442
    %v1550 = vpack.c.b16 %v1445, %v1444
    %v1551 = vpack.c.b16 %v1447, %v1446
    %v1552 = vpack.c.b16 %v1449, %v1448
    %v1553 = vpack.c.b16 %v1451, %v1450
    %v1554 = vpack.c.b16 %v1453, %v1452
    %v1555 = vpack.c.b16 %v1455, %v1454
    %v1556 = vpack.c.b16 %v1457, %v1456
    %v1557 = vpack.c.b16 %v1459, %v1458
    %v1558 = vpack.c.b16 %v1461, %v1460
    %v1559 = vpack.c.b16 %v1463, %v1462
    %v1560 = vpack.c.b16 %v1465, %v1464
    %v1561 = vpack.c.b16 %v1467, %v1466
    %v1562 = vpack.c.b16 %v1469, %v1468
    %v1563 = vpack.c.b16 %v1471, %v1470
    %v1564 = vpack.c.b16 %v1473, %v1472
    %v1565 = vpack.c.b16 %v1475, %v1474
    %v1566 = vpack.c.b16 %v1477, %v1476
    %v1567 = vpack.c.b16 %v1479, %v1478
    %v1568 = vpack.c.b16 %v1481, %v1480
    %v1569 = vpack.c.b16 %v1483, %v1482
    %v1570 = vpack.c.b16 %v1485, %v1484
    %v1571 = vpack.c.b16 %v1487, %v1486
    %v1572 = vpack.c.b16 %v1489, %v1488
    %v1573 = vpack.c.b16 %v1491, %v1490
    %v1574 = vpack.c.b16 %v1493, %v1492
    %v1575 = vpack.c.b16 %v1495, %v1494
    %v1576 = vpack.c.b16 %v1497, %v1496
    %v1577 = vpack.c.b16 %v1499, %v1498
    %v1578 = vpack.c.b16 %v1501, %v1500
    %v1579 = vpack.c.b16 %v1503, %v1502
    %v1580 = vpack.c.b16 %v1505, %v1504
    %v1581 = vpack.c.b16 %v1507, %v1506
    %v1582 = vpack.c.b16 %v1509, %v1508
    %v1583 = vpack.c.b16 %v1511, %v1510
    %1656 = vmatprep.subr.bf16.mxu0 0
    %1657 = vmatpush1.bf16.msra.mxu0 %v1512
    %1658 = vmatprep.subr.bf16.mxu0 0
    %1659 = vmatpush1.bf16.msra.mxu0 %v1513
    %1660 = vmatprep.subr.bf16.mxu0 0
    %1661 = vmatpush1.bf16.msra.mxu0 %v1514
    %1662 = vmatprep.subr.bf16.mxu0 0
    %1663 = vmatpush1.bf16.msra.mxu0 %v1515
    %1664 = vmatprep.subr.bf16.mxu0 0
    %1665 = vmatpush1.bf16.msra.mxu0 %v1516
    %1666 = vmatprep.subr.bf16.mxu0 0
    %1667 = vmatpush1.bf16.msra.mxu0 %v1517
    %1668 = vmatprep.subr.bf16.mxu0 0
    %1669 = vmatpush1.bf16.msra.mxu0 %v1518
    %1670 = vmatprep.subr.bf16.mxu0 0
    %1671 = vmatpush1.bf16.msra.mxu0 %v1519
    %1672 = vmatprep.subr.bf16.mxu0 0
    %1673 = vmatpush1.bf16.msra.mxu0 %v1520
    %1674 = vmatprep.subr.bf16.mxu0 0
    %1675 = vmatpush1.bf16.msra.mxu0 %v1521
    %1676 = vmatprep.subr.bf16.mxu0 0
    %1677 = vmatpush1.bf16.msra.mxu0 %v1522
    %1678 = vmatprep.subr.bf16.mxu0 0
    %1679 = vmatpush1.bf16.msra.mxu0 %v1523
    %1680 = vmatprep.subr.bf16.mxu0 0
    %1681 = vmatpush1.bf16.msra.mxu0 %v1524
    %1682 = vmatprep.subr.bf16.mxu0 0
    %1683 = vmatpush1.bf16.msra.mxu0 %v1525
    %1684 = vmatprep.subr.bf16.mxu0 0
    %1685 = vmatpush1.bf16.msra.mxu0 %v1526
    %1686 = vmatprep.subr.bf16.mxu0 0
    %1687 = vmatpush1.bf16.msra.mxu0 %v1527
    %1688 = vmatprep.mubr.bf16.mxu0 %v1002
    %1689 = vmatmul.mubr.bf16.gmra.mrb[0].mxu0 %v1001
    %v1690 = vpop.f32.mrb[0].mxu0
    %v1691 = vadd.f32 %v1222, %v1690
    %v1692 = vpop.f32.mrb[0].mxu0
    %v1693 = vpop.f32.mrb[0].mxu0
    %v1694 = vadd.f32 %v1222, %v1693
    %v1695 = vpop.f32.mrb[0].mxu0
    %1696 = vmatprep.mubr.bf16.mxu0 %v1011
    %1697 = vmatmul.mubr.bf16.gmra.mrb[0].mxu0 %v1010
    %v1698 = vpop.f32.mrb[0].mxu0
    %v1699 = vadd.f32 %v1222, %v1698
    %v1700 = vpop.f32.mrb[0].mxu0
    %v1701 = vpop.f32.mrb[0].mxu0
    %v1702 = vadd.f32 %v1222, %v1701
    %v1703 = vpop.f32.mrb[0].mxu0
    %1704 = vmatprep.mubr.bf16.mxu0 %v1020
    %1705 = vmatmul.mubr.bf16.gmra.mrb[0].mxu0 %v1019
    %v1706 = vpop.f32.mrb[0].mxu0
    %v1707 = vadd.f32 %v1222, %v1706
    %v1708 = vpop.f32.mrb[0].mxu0
    %v1709 = vpop.f32.mrb[0].mxu0
    %v1710 = vadd.f32 %v1222, %v1709
    %v1711 = vpop.f32.mrb[0].mxu0
    %1712 = vmatprep.mubr.bf16.mxu0 %v1029
    %1713 = vmatmul.mubr.bf16.gmra.mrb[0].mxu0 %v1028
    %v1714 = vpop.f32.mrb[0].mxu0
    %v1715 = vadd.f32 %v1222, %v1714
    %v1716 = vpop.f32.mrb[0].mxu0
    %v1717 = vpop.f32.mrb[0].mxu0
    %v1718 = vadd.f32 %v1222, %v1717
    %v1719 = vpop.f32.mrb[0].mxu0
    %1720 = vmatprep.mubr.bf16.mxu0 %v1038
    %1721 = vmatmul.mubr.bf16.gmra.mrb[0].mxu0 %v1037
    %v1722 = vpop.f32.mrb[0].mxu0
    %v1723 = vadd.f32 %v1222, %v1722
    %v1724 = vpop.f32.mrb[0].mxu0
    %v1725 = vpop.f32.mrb[0].mxu0
    %v1726 = vadd.f32 %v1222, %v1725
    %v1727 = vpop.f32.mrb[0].mxu0
    %1728 = vmatprep.mubr.bf16.mxu0 %v1047
    %1729 = vmatmul.mubr.bf16.gmra.mrb[0].mxu0 %v1046
    %v1730 = vpop.f32.mrb[0].mxu0
    %v1731 = vadd.f32 %v1222, %v1730
    %v1732 = vpop.f32.mrb[0].mxu0
    %v1733 = vpop.f32.mrb[0].mxu0
    %v1734 = vadd.f32 %v1222, %v1733
    %v1735 = vpop.f32.mrb[0].mxu0
    %1736 = vmatprep.mubr.bf16.mxu0 %v1056
    %1737 = vmatmul.mubr.bf16.gmra.mrb[0].mxu0 %v1055
    %v1738 = vpop.f32.mrb[0].mxu0
    %v1739 = vadd.f32 %v1222, %v1738
    %v1740 = vpop.f32.mrb[0].mxu0
    %v1741 = vpop.f32.mrb[0].mxu0
    %v1742 = vadd.f32 %v1222, %v1741
    %v1743 = vpop.f32.mrb[0].mxu0
    %1744 = vmatprep.mubr.bf16.mxu0 %v1065
    %1745 = vmatmul.mubr.bf16.gmra.mrb[0].mxu0 %v1064
    %v1746 = vpop.f32.mrb[0].mxu0
    %v1747 = vadd.f32 %v1222, %v1746
    %v1748 = vpop.f32.mrb[0].mxu0
    %v1749 = vpop.f32.mrb[0].mxu0
    %v1750 = vadd.f32 %v1222, %v1749
    %v1751 = vpop.f32.mrb[0].mxu0
    %1752 = vdwg.mxu0
    %1753 = vmatprep.subr.bf16.mxu0 0
    %1754 = vmatpush1.bf16.msra.mxu0 %v1528
    %1755 = vmatprep.subr.bf16.mxu0 0
    %1756 = vmatpush1.bf16.msra.mxu0 %v1529
    %1757 = vmatprep.subr.bf16.mxu0 0
    %1758 = vmatpush1.bf16.msra.mxu0 %v1530
    %1759 = vmatprep.subr.bf16.mxu0 0
    %1760 = vmatpush1.bf16.msra.mxu0 %v1531
    %1761 = vmatprep.subr.bf16.mxu0 0
    %1762 = vmatpush1.bf16.msra.mxu0 %v1532
    %1763 = vmatprep.subr.bf16.mxu0 0
    %1764 = vmatpush1.bf16.msra.mxu0 %v1533
    %1765 = vmatprep.subr.bf16.mxu0 0
    %1766 = vmatpush1.bf16.msra.mxu0 %v1534
    %1767 = vmatprep.subr.bf16.mxu0 0
    %1768 = vmatpush1.bf16.msra.mxu0 %v1535
    %1769 = vmatprep.subr.bf16.mxu0 0
    %1770 = vmatpush1.bf16.msra.mxu0 %v1536
    %1771 = vmatprep.subr.bf16.mxu0 0
    %1772 = vmatpush1.bf16.msra.mxu0 %v1537
    %1773 = vmatprep.subr.bf16.mxu0 0
    %1774 = vmatpush1.bf16.msra.mxu0 %v1538
    %1775 = vmatprep.subr.bf16.mxu0 0
    %1776 = vmatpush1.bf16.msra.mxu0 %v1539
    %1777 = vmatprep.subr.bf16.mxu0 0
    %1778 = vmatpush1.bf16.msra.mxu0 %v1540
    %1779 = vmatprep.subr.bf16.mxu0 0
    %1780 = vmatpush1.bf16.msra.mxu0 %v1541
    %1781 = vmatprep.subr.bf16.mxu0 0
    %1782 = vmatpush1.bf16.msra.mxu0 %v1542
    %1783 = vmatprep.subr.bf16.mxu0 0
    %1784 = vmatpush1.bf16.msra.mxu0 %v1543
    %1785 = vmatprep.mubr.bf16.mxu0 %v1004
    %1786 = vmatmul.mubr.bf16.gmra.mrb[0].mxu0 %v1003
    %v1787 = vpop.f32.mrb[0].mxu0
    %v1788 = vadd.f32 %v1691, %v1787
    %v1789 = vpop.f32.mrb[0].mxu0
    %v1790 = vpop.f32.mrb[0].mxu0
    %v1791 = vadd.f32 %v1694, %v1790
    %v1792 = vpop.f32.mrb[0].mxu0
    %1793 = vmatprep.mubr.bf16.mxu0 %v1013
    %1794 = vmatmul.mubr.bf16.gmra.mrb[0].mxu0 %v1012
    %v1795 = vpop.f32.mrb[0].mxu0
    %v1796 = vadd.f32 %v1699, %v1795
    %v1797 = vpop.f32.mrb[0].mxu0
    %v1798 = vpop.f32.mrb[0].mxu0
    %v1799 = vadd.f32 %v1702, %v1798
    %v1800 = vpop.f32.mrb[0].mxu0
    %1801 = vmatprep.mubr.bf16.mxu0 %v1022
    %1802 = vmatmul.mubr.bf16.gmra.mrb[0].mxu0 %v1021
    %v1803 = vpop.f32.mrb[0].mxu0
    %v1804 = vadd.f32 %v1707, %v1803
    %v1805 = vpop.f32.mrb[0].mxu0
    %v1806 = vpop.f32.mrb[0].mxu0
    %v1807 = vadd.f32 %v1710, %v1806
    %v1808 = vpop.f32.mrb[0].mxu0
    %1809 = vmatprep.mubr.bf16.mxu0 %v1031
    %1810 = vmatmul.mubr.bf16.gmra.mrb[0].mxu0 %v1030
    %v1811 = vpop.f32.mrb[0].mxu0
    %v1812 = vadd.f32 %v1715, %v1811
    %v1813 = vpop.f32.mrb[0].mxu0
    %v1814 = vpop.f32.mrb[0].mxu0
    %v1815 = vadd.f32 %v1718, %v1814
    %v1816 = vpop.f32.mrb[0].mxu0
    %1817 = vmatprep.mubr.bf16.mxu0 %v1040
    %1818 = vmatmul.mubr.bf16.gmra.mrb[0].mxu0 %v1039
    %v1819 = vpop.f32.mrb[0].mxu0
    %v1820 = vadd.f32 %v1723, %v1819
    %v1821 = vpop.f32.mrb[0].mxu0
    %v1822 = vpop.f32.mrb[0].mxu0
    %v1823 = vadd.f32 %v1726, %v1822
    %v1824 = vpop.f32.mrb[0].mxu0
    %1825 = vmatprep.mubr.bf16.mxu0 %v1049
    %1826 = vmatmul.mubr.bf16.gmra.mrb[0].mxu0 %v1048
    %v1827 = vpop.f32.mrb[0].mxu0
    %v1828 = vadd.f32 %v1731, %v1827
    %v1829 = vpop.f32.mrb[0].mxu0
    %v1830 = vpop.f32.mrb[0].mxu0
    %v1831 = vadd.f32 %v1734, %v1830
    %v1832 = vpop.f32.mrb[0].mxu0
    %1833 = vmatprep.mubr.bf16.mxu0 %v1058
    %1834 = vmatmul.mubr.bf16.gmra.mrb[0].mxu0 %v1057
    %v1835 = vpop.f32.mrb[0].mxu0
    %v1836 = vadd.f32 %v1739, %v1835
    %v1837 = vpop.f32.mrb[0].mxu0
    %v1838 = vpop.f32.mrb[0].mxu0
    %v1839 = vadd.f32 %v1742, %v1838
    %v1840 = vpop.f32.mrb[0].mxu0
    %1841 = vmatprep.mubr.bf16.mxu0 %v1067
    %1842 = vmatmul.mubr.bf16.gmra.mrb[0].mxu0 %v1066
    %v1843 = vpop.f32.mrb[0].mxu0
    %v1844 = vadd.f32 %v1747, %v1843
    %v1845 = vpop.f32.mrb[0].mxu0
    %v1846 = vpop.f32.mrb[0].mxu0
    %v1847 = vadd.f32 %v1750, %v1846
    %v1848 = vpop.f32.mrb[0].mxu0
    %1849 = vdwg.mxu0
    %1850 = vmatprep.subr.bf16.mxu0 0
    %1851 = vmatpush1.bf16.msra.mxu0 %v1544
    %1852 = vmatprep.subr.bf16.mxu0 0
    %1853 = vmatpush1.bf16.msra.mxu0 %v1545
    %1854 = vmatprep.subr.bf16.mxu0 0
    %1855 = vmatpush1.bf16.msra.mxu0 %v1546
    %1856 = vmatprep.subr.bf16.mxu0 0
    %1857 = vmatpush1.bf16.msra.mxu0 %v1547
    %1858 = vmatprep.subr.bf16.mxu0 0
    %1859 = vmatpush1.bf16.msra.mxu0 %v1548
    %1860 = vmatprep.subr.bf16.mxu0 0
    %1861 = vmatpush1.bf16.msra.mxu0 %v1549
    %1862 = vmatprep.subr.bf16.mxu0 0
    %1863 = vmatpush1.bf16.msra.mxu0 %v1550
    %1864 = vmatprep.subr.bf16.mxu0 0
    %1865 = vmatpush1.bf16.msra.mxu0 %v1551
    %1866 = vmatprep.subr.bf16.mxu0 0
    %1867 = vmatpush1.bf16.msra.mxu0 %v1552
    %1868 = vmatprep.subr.bf16.mxu0 0
    %1869 = vmatpush1.bf16.msra.mxu0 %v1553
    %1870 = vmatprep.subr.bf16.mxu0 0
    %1871 = vmatpush1.bf16.msra.mxu0 %v1554
    %1872 = vmatprep.subr.bf16.mxu0 0
    %1873 = vmatpush1.bf16.msra.mxu0 %v1555
    %1874 = vmatprep.subr.bf16.mxu0 0
    %1875 = vmatpush1.bf16.msra.mxu0 %v1556
    %1876 = vmatprep.subr.bf16.mxu0 0
    %1877 = vmatpush1.bf16.msra.mxu0 %v1557
    %1878 = vmatprep.subr.bf16.mxu0 0
    %1879 = vmatpush1.bf16.msra.mxu0 %v1558
    %1880 = vmatprep.subr.bf16.mxu0 0
    %1881 = vmatpush1.bf16.msra.mxu0 %v1559
    %1882 = vmatprep.mubr.bf16.mxu0 %v1006
    %1883 = vmatmul.mubr.bf16.gmra.mrb[0].mxu0 %v1005
    %v1884 = vpop.f32.mrb[0].mxu0
    %v1885 = vadd.f32 %v1788, %v1884
    %v1886 = vpop.f32.mrb[0].mxu0
    %v1887 = vpop.f32.mrb[0].mxu0
    %v1888 = vadd.f32 %v1791, %v1887
    %v1889 = vpop.f32.mrb[0].mxu0
    %1890 = vmatprep.mubr.bf16.mxu0 %v1015
    %1891 = vmatmul.mubr.bf16.gmra.mrb[0].mxu0 %v1014
    %v1892 = vpop.f32.mrb[0].mxu0
    %v1893 = vadd.f32 %v1796, %v1892
    %v1894 = vpop.f32.mrb[0].mxu0
    %v1895 = vpop.f32.mrb[0].mxu0
    %v1896 = vadd.f32 %v1799, %v1895
    %v1897 = vpop.f32.mrb[0].mxu0
    %1898 = vmatprep.mubr.bf16.mxu0 %v1024
    %1899 = vmatmul.mubr.bf16.gmra.mrb[0].mxu0 %v1023
    %v1900 = vpop.f32.mrb[0].mxu0
    %v1901 = vadd.f32 %v1804, %v1900
    %v1902 = vpop.f32.mrb[0].mxu0
    %v1903 = vpop.f32.mrb[0].mxu0
    %v1904 = vadd.f32 %v1807, %v1903
    %v1905 = vpop.f32.mrb[0].mxu0
    %1906 = vmatprep.mubr.bf16.mxu0 %v1033
    %1907 = vmatmul.mubr.bf16.gmra.mrb[0].mxu0 %v1032
    %v1908 = vpop.f32.mrb[0].mxu0
    %v1909 = vadd.f32 %v1812, %v1908
    %v1910 = vpop.f32.mrb[0].mxu0
    %v1911 = vpop.f32.mrb[0].mxu0
    %v1912 = vadd.f32 %v1815, %v1911
    %v1913 = vpop.f32.mrb[0].mxu0
    %1914 = vmatprep.mubr.bf16.mxu0 %v1042
    %1915 = vmatmul.mubr.bf16.gmra.mrb[0].mxu0 %v1041
    %v1916 = vpop.f32.mrb[0].mxu0
    %v1917 = vadd.f32 %v1820, %v1916
    %v1918 = vpop.f32.mrb[0].mxu0
    %v1919 = vpop.f32.mrb[0].mxu0
    %v1920 = vadd.f32 %v1823, %v1919
    %v1921 = vpop.f32.mrb[0].mxu0
    %1922 = vmatprep.mubr.bf16.mxu0 %v1051
    %1923 = vmatmul.mubr.bf16.gmra.mrb[0].mxu0 %v1050
    %v1924 = vpop.f32.mrb[0].mxu0
    %v1925 = vadd.f32 %v1828, %v1924
    %v1926 = vpop.f32.mrb[0].mxu0
    %v1927 = vpop.f32.mrb[0].mxu0
    %v1928 = vadd.f32 %v1831, %v1927
    %v1929 = vpop.f32.mrb[0].mxu0
    %1930 = vmatprep.mubr.bf16.mxu0 %v1060
    %1931 = vmatmul.mubr.bf16.gmra.mrb[0].mxu0 %v1059
    %v1932 = vpop.f32.mrb[0].mxu0
    %v1933 = vadd.f32 %v1836, %v1932
    %v1934 = vpop.f32.mrb[0].mxu0
    %v1935 = vpop.f32.mrb[0].mxu0
    %v1936 = vadd.f32 %v1839, %v1935
    %v1937 = vpop.f32.mrb[0].mxu0
    %1938 = vmatprep.mubr.bf16.mxu0 %v1069
    %1939 = vmatmul.mubr.bf16.gmra.mrb[0].mxu0 %v1068
    %v1940 = vpop.f32.mrb[0].mxu0
    %v1941 = vadd.f32 %v1844, %v1940
    %v1942 = vpop.f32.mrb[0].mxu0
    %v1943 = vpop.f32.mrb[0].mxu0
    %v1944 = vadd.f32 %v1847, %v1943
    %v1945 = vpop.f32.mrb[0].mxu0
    %1946 = vdwg.mxu0
    %1947 = vmatprep.subr.bf16.mxu0 0
    %1948 = vmatpush1.bf16.msra.mxu0 %v1560
    %1949 = vmatprep.subr.bf16.mxu0 0
    %1950 = vmatpush1.bf16.msra.mxu0 %v1561
    %1951 = vmatprep.subr.bf16.mxu0 0
    %1952 = vmatpush1.bf16.msra.mxu0 %v1562
    %1953 = vmatprep.subr.bf16.mxu0 0
    %1954 = vmatpush1.bf16.msra.mxu0 %v1563
    %1955 = vmatprep.subr.bf16.mxu0 0
    %1956 = vmatpush1.bf16.msra.mxu0 %v1564
    %1957 = vmatprep.subr.bf16.mxu0 0
    %1958 = vmatpush1.bf16.msra.mxu0 %v1565
    %1959 = vmatprep.subr.bf16.mxu0 0
    %1960 = vmatpush1.bf16.msra.mxu0 %v1566
    %1961 = vmatprep.subr.bf16.mxu0 0
    %1962 = vmatpush1.bf16.msra.mxu0 %v1567
    %1963 = vmatprep.subr.bf16.mxu0 0
    %1964 = vmatpush1.bf16.msra.mxu0 %v1568
    %1965 = vmatprep.subr.bf16.mxu0 0
    %1966 = vmatpush1.bf16.msra.mxu0 %v1569
    %1967 = vmatprep.subr.bf16.mxu0 0
    %1968 = vmatpush1.bf16.msra.mxu0 %v1570
    %1969 = vmatprep.subr.bf16.mxu0 0
    %1970 = vmatpush1.bf16.msra.mxu0 %v1571
    %1971 = vmatprep.subr.bf16.mxu0 0
    %1972 = vmatpush1.bf16.msra.mxu0 %v1572
    %1973 = vmatprep.subr.bf16.mxu0 0
    %1974 = vmatpush1.bf16.msra.mxu0 %v1573
    %1975 = vmatprep.subr.bf16.mxu0 0
    %1976 = vmatpush1.bf16.msra.mxu0 %v1574
    %1977 = vmatprep.subr.bf16.mxu0 0
    %1978 = vmatpush1.bf16.msra.mxu0 %v1575
    %1979 = vmatprep.mubr.bf16.mxu0 %v1008
    %1980 = vmatmul.mubr.bf16.gmra.mrb[0].mxu0 %v1007
    %v1981 = vpop.f32.mrb[0].mxu0
    %v1982 = vadd.f32 %v1885, %v1981
    %v1983 = vpop.f32.mrb[0].mxu0
    %v1984 = vpop.f32.mrb[0].mxu0
    %v1985 = vadd.f32 %v1888, %v1984
    %v1986 = vpop.f32.mrb[0].mxu0
    %1987 = vmatprep.mubr.bf16.mxu0 %v1017
    %1988 = vmatmul.mubr.bf16.gmra.mrb[0].mxu0 %v1016
    %v1989 = vpop.f32.mrb[0].mxu0
    %v1990 = vadd.f32 %v1893, %v1989
    %v1991 = vpop.f32.mrb[0].mxu0
    %v1992 = vpop.f32.mrb[0].mxu0
    %v1993 = vadd.f32 %v1896, %v1992
    %v1994 = vpop.f32.mrb[0].mxu0
    %1995 = vmatprep.mubr.bf16.mxu0 %v1026
    %1996 = vmatmul.mubr.bf16.gmra.mrb[0].mxu0 %v1025
    %v1997 = vpop.f32.mrb[0].mxu0
    %v1998 = vadd.f32 %v1901, %v1997
    %v1999 = vpop.f32.mrb[0].mxu0
    %v2000 = vpop.f32.mrb[0].mxu0
    %v2001 = vadd.f32 %v1904, %v2000
    %v2002 = vpop.f32.mrb[0].mxu0
    %2003 = vmatprep.mubr.bf16.mxu0 %v1035
    %2004 = vmatmul.mubr.bf16.gmra.mrb[0].mxu0 %v1034
    %v2005 = vpop.f32.mrb[0].mxu0
    %v2006 = vadd.f32 %v1909, %v2005
    %v2007 = vpop.f32.mrb[0].mxu0
    %v2008 = vpop.f32.mrb[0].mxu0
    %v2009 = vadd.f32 %v1912, %v2008
    %v2010 = vpop.f32.mrb[0].mxu0
    %2011 = vmatprep.mubr.bf16.mxu0 %v1044
    %2012 = vmatmul.mubr.bf16.gmra.mrb[0].mxu0 %v1043
    %v2013 = vpop.f32.mrb[0].mxu0
    %v2014 = vadd.f32 %v1917, %v2013
    %v2015 = vpop.f32.mrb[0].mxu0
    %v2016 = vpop.f32.mrb[0].mxu0
    %v2017 = vadd.f32 %v1920, %v2016
    %v2018 = vpop.f32.mrb[0].mxu0
    %2019 = vmatprep.mubr.bf16.mxu0 %v1053
    %2020 = vmatmul.mubr.bf16.gmra.mrb[0].mxu0 %v1052
    %v2021 = vpop.f32.mrb[0].mxu0
    %v2022 = vadd.f32 %v1925, %v2021
    %v2023 = vpop.f32.mrb[0].mxu0
    %v2024 = vpop.f32.mrb[0].mxu0
    %v2025 = vadd.f32 %v1928, %v2024
    %v2026 = vpop.f32.mrb[0].mxu0
    %2027 = vmatprep.mubr.bf16.mxu0 %v1062
    %2028 = vmatmul.mubr.bf16.gmra.mrb[0].mxu0 %v1061
    %v2029 = vpop.f32.mrb[0].mxu0
    %v2030 = vadd.f32 %v1933, %v2029
    %v2031 = vpop.f32.mrb[0].mxu0
    %v2032 = vpop.f32.mrb[0].mxu0
    %v2033 = vadd.f32 %v1936, %v2032
    %v2034 = vpop.f32.mrb[0].mxu0
    %2035 = vmatprep.mubr.bf16.mxu0 %v1071
    %2036 = vmatmul.mubr.bf16.gmra.mrb[0].mxu0 %v1070
    %v2037 = vpop.f32.mrb[0].mxu0
    %v2038 = vadd.f32 %v1941, %v2037
    %v2039 = vpop.f32.mrb[0].mxu0
    %v2040 = vpop.f32.mrb[0].mxu0
    %v2041 = vadd.f32 %v1944, %v2040
    %v2042 = vpop.f32.mrb[0].mxu0
    %2043 = vdwg.mxu0
    %2044 = vmatprep.subr.bf16.mxu0 0
    %2045 = vmatpush1.bf16.msra.mxu0 %v1576
    %2046 = vmatprep.subr.bf16.mxu0 0
    %2047 = vmatpush1.bf16.msra.mxu0 %v1577
    %2048 = vmatprep.subr.bf16.mxu0 0
    %2049 = vmatpush1.bf16.msra.mxu0 %v1578
    %2050 = vmatprep.subr.bf16.mxu0 0
    %2051 = vmatpush1.bf16.msra.mxu0 %v1579
    %2052 = vmatprep.subr.bf16.mxu0 0
    %2053 = vmatpush1.bf16.msra.mxu0 %v1580
    %2054 = vmatprep.subr.bf16.mxu0 0
    %2055 = vmatpush1.bf16.msra.mxu0 %v1581
    %2056 = vmatprep.subr.bf16.mxu0 0
    %2057 = vmatpush1.bf16.msra.mxu0 %v1582
    %2058 = vmatprep.subr.bf16.mxu0 0
    %2059 = vmatpush1.bf16.msra.mxu0 %v1583
    %2060 = vmatprep.subr.bf16.mxu0 0
    %2061 = vmatpush1.bf16.msra.mxu0 0
    %2062 = vmatprep.subr.bf16.mxu0 0
    %2063 = vmatpush1.bf16.msra.mxu0 0
    %2064 = vmatprep.subr.bf16.mxu0 0
    %2065 = vmatpush1.bf16.msra.mxu0 0
    %2066 = vmatprep.subr.bf16.mxu0 0
    %2067 = vmatpush1.bf16.msra.mxu0 0
    %2068 = vmatprep.subr.bf16.mxu0 0
    %2069 = vmatpush1.bf16.msra.mxu0 0
    %2070 = vmatprep.subr.bf16.mxu0 0
    %2071 = vmatpush1.bf16.msra.mxu0 0
    %2072 = vmatprep.subr.bf16.mxu0 0
    %2073 = vmatpush1.bf16.msra.mxu0 0
    %2074 = vmatprep.subr.bf16.mxu0 0
    %2075 = vmatpush1.bf16.msra.mxu0 0
    %2076 = vmatprep.mubr.bf16.mxu0 0
    %2077 = vmatmul.mubr.bf16.gmra.mrb[0].mxu0 %v1009
    %v2078 = vpop.f32.mrb[0].mxu0
    %v2079 = vadd.f32 %v1982, %v2078
    %v2080 = vpop.f32.mrb[0].mxu0
    %v2081 = vpop.f32.mrb[0].mxu0
    %v2082 = vadd.f32 %v1985, %v2081
    %v2083 = vpop.f32.mrb[0].mxu0
    %2084 = vmatprep.mubr.bf16.mxu0 0
    %2085 = vmatmul.mubr.bf16.gmra.mrb[0].mxu0 %v1018
    %v2086 = vpop.f32.mrb[0].mxu0
    %v2087 = vadd.f32 %v1990, %v2086
    %v2088 = vpop.f32.mrb[0].mxu0
    %v2089 = vpop.f32.mrb[0].mxu0
    %v2090 = vadd.f32 %v1993, %v2089
    %v2091 = vpop.f32.mrb[0].mxu0
    %2092 = vmatprep.mubr.bf16.mxu0 0
    %2093 = vmatmul.mubr.bf16.gmra.mrb[0].mxu0 %v1027
    %v2094 = vpop.f32.mrb[0].mxu0
    %v2095 = vadd.f32 %v1998, %v2094
    %v2096 = vpop.f32.mrb[0].mxu0
    %v2097 = vpop.f32.mrb[0].mxu0
    %v2098 = vadd.f32 %v2001, %v2097
    %v2099 = vpop.f32.mrb[0].mxu0
    %2100 = vmatprep.mubr.bf16.mxu0 0
    %2101 = vmatmul.mubr.bf16.gmra.mrb[0].mxu0 %v1036
    %v2102 = vpop.f32.mrb[0].mxu0
    %v2103 = vadd.f32 %v2006, %v2102
    %v2104 = vpop.f32.mrb[0].mxu0
    %v2105 = vpop.f32.mrb[0].mxu0
    %v2106 = vadd.f32 %v2009, %v2105
    %v2107 = vpop.f32.mrb[0].mxu0
    %2108 = vmatprep.mubr.bf16.mxu0 0
    %2109 = vmatmul.mubr.bf16.gmra.mrb[0].mxu0 %v1045
    %v2110 = vpop.f32.mrb[0].mxu0
    %v2111 = vadd.f32 %v2014, %v2110
    %v2112 = vpop.f32.mrb[0].mxu0
    %v2113 = vpop.f32.mrb[0].mxu0
    %v2114 = vadd.f32 %v2017, %v2113
    %v2115 = vpop.f32.mrb[0].mxu0
    %2116 = vmatprep.mubr.bf16.mxu0 0
    %2117 = vmatmul.mubr.bf16.gmra.mrb[0].mxu0 %v1054
    %v2118 = vpop.f32.mrb[0].mxu0
    %v2119 = vadd.f32 %v2022, %v2118
    %v2120 = vpop.f32.mrb[0].mxu0
    %v2121 = vpop.f32.mrb[0].mxu0
    %v2122 = vadd.f32 %v2025, %v2121
    %v2123 = vpop.f32.mrb[0].mxu0
    %2124 = vmatprep.mubr.bf16.mxu0 0
    %2125 = vmatmul.mubr.bf16.gmra.mrb[0].mxu0 %v1063
    %v2126 = vpop.f32.mrb[0].mxu0
    %v2127 = vadd.f32 %v2030, %v2126
    %v2128 = vpop.f32.mrb[0].mxu0
    %v2129 = vpop.f32.mrb[0].mxu0
    %v2130 = vadd.f32 %v2033, %v2129
    %v2131 = vpop.f32.mrb[0].mxu0
    %2132 = vmatprep.mubr.bf16.mxu0 0
    %2133 = vmatmul.mubr.bf16.gmra.mrb[0].mxu0 %v1072
    %v2134 = vpop.f32.mrb[0].mxu0
    %v2135 = vadd.f32 %v2038, %v2134
    %v2136 = vpop.f32.mrb[0].mxu0
    %v2137 = vpop.f32.mrb[0].mxu0
    %v2138 = vadd.f32 %v2041, %v2137
    %v2139 = vpop.f32.mrb[0].mxu0
    %2140 = vdwg.mxu0
    %v2141 = vadd.f32 %v2079, %v2082
    %v2142 = vadd.f32 %v2141, %v2087
    %v2143 = vadd.f32 %v2142, %v2090
    %v2144 = vadd.f32 %v2143, %v2095
    %v2145 = vadd.f32 %v2144, %v2098
    %v2146 = vadd.f32 %v2145, %v2103
    %v2147 = vadd.f32 %v2146, %v2106
    %v2148 = vadd.f32 %v2147, %v2111
    %v2149 = vadd.f32 %v2148, %v2114
    %v2150 = vadd.f32 %v2149, %v2119
    %v2151 = vadd.f32 %v2150, %v2122
    %v2152 = vadd.f32 %v2151, %v2127
    %v2153 = vadd.f32 %v2152, %v2130
    %v2154 = vadd.f32 %v2153, %v2135
    %v2155 = vadd.f32 %v2154, %v2138
    %v2156 = vrot.slane %v2155, 4
    %v2157 = vadd.f32 %v2155, %v2156
    %v2158 = vrot.slane %v2157, 2
    %v2159 = vadd.f32 %v2157, %v2158
    %v2160 = vrot.slane %v2159, 1
    %v2161 = vadd.f32 %v2159, %v2160
    %v2162 = vmul.f32 %v2161, %v518
    %v2163 = vsub.f32 %v2079, %v2162
    %v2164 = vsub.f32 %v2082, %v2162
    %v2165 = vsub.f32 %v2087, %v2162
    %v2166 = vsub.f32 %v2090, %v2162
    %v2167 = vsub.f32 %v2095, %v2162
    %v2168 = vsub.f32 %v2098, %v2162
    %v2169 = vsub.f32 %v2103, %v2162
    %v2170 = vsub.f32 %v2106, %v2162
    %v2171 = vsub.f32 %v2111, %v2162
    %v2172 = vsub.f32 %v2114, %v2162
    %v2173 = vsub.f32 %v2119, %v2162
    %v2174 = vsub.f32 %v2122, %v2162
    %v2175 = vsub.f32 %v2127, %v2162
    %v2176 = vsub.f32 %v2130, %v2162
    %v2177 = vsub.f32 %v2135, %v2162
    %v2178 = vsub.f32 %v2138, %v2162
    %v2179 = vmul.f32 %v2163, %v2163
    %v2180 = vmul.f32 %v2164, %v2164
    %v2181 = vmul.f32 %v2165, %v2165
    %v2182 = vmul.f32 %v2166, %v2166
    %v2183 = vmul.f32 %v2167, %v2167
    %v2184 = vmul.f32 %v2168, %v2168
    %v2185 = vmul.f32 %v2169, %v2169
    %v2186 = vmul.f32 %v2170, %v2170
    %v2187 = vmul.f32 %v2171, %v2171
    %v2188 = vmul.f32 %v2172, %v2172
    %v2189 = vmul.f32 %v2173, %v2173
    %v2190 = vmul.f32 %v2174, %v2174
    %v2191 = vmul.f32 %v2175, %v2175
    %v2192 = vmul.f32 %v2176, %v2176
    %v2193 = vmul.f32 %v2177, %v2177
    %v2194 = vmul.f32 %v2178, %v2178
    %v2195 = vadd.f32 %v2179, %v2180
    %v2196 = vadd.f32 %v2195, %v2181
    %v2197 = vadd.f32 %v2196, %v2182
    %v2198 = vadd.f32 %v2197, %v2183
    %v2199 = vadd.f32 %v2198, %v2184
    %v2200 = vadd.f32 %v2199, %v2185
    %v2201 = vadd.f32 %v2200, %v2186
    %v2202 = vadd.f32 %v2201, %v2187
    %v2203 = vadd.f32 %v2202, %v2188
    %v2204 = vadd.f32 %v2203, %v2189
    %v2205 = vadd.f32 %v2204, %v2190
    %v2206 = vadd.f32 %v2205, %v2191
    %v2207 = vadd.f32 %v2206, %v2192
    %v2208 = vadd.f32 %v2207, %v2193
    %v2209 = vadd.f32 %v2208, %v2194
    %v2210 = vrot.slane %v2209, 4
    %v2211 = vadd.f32 %v2209, %v2210
    %v2212 = vrot.slane %v2211, 2
    %v2213 = vadd.f32 %v2211, %v2212
    %v2214 = vrot.slane %v2213, 1
    %v2215 = vadd.f32 %v2213, %v2214
    %v2216 = vmul.f32 %v2215, %v518
    %v2217 = vadd.f32 %v2216, 1e-05
    %v2218 = vrsqrt.pop %v2217
    %v2219 = vmul.f32 %v2163, %v2218
    %v2220 = vmul.f32 %v2164, %v2218
    %v2221 = vmul.f32 %v2165, %v2218
    %v2222 = vmul.f32 %v2166, %v2218
    %v2223 = vmul.f32 %v2167, %v2218
    %v2224 = vmul.f32 %v2168, %v2218
    %v2225 = vmul.f32 %v2169, %v2218
    %v2226 = vmul.f32 %v2170, %v2218
    %v2227 = vmul.f32 %v2171, %v2218
    %v2228 = vmul.f32 %v2172, %v2218
    %v2229 = vmul.f32 %v2173, %v2218
    %v2230 = vmul.f32 %v2174, %v2218
    %v2231 = vmul.f32 %v2175, %v2218
    %v2232 = vmul.f32 %v2176, %v2218
    %v2233 = vmul.f32 %v2177, %v2218
    %v2234 = vmul.f32 %v2178, %v2218
    %v2235 = vld [vmem:[%s11] sm:$0x1]
    %v2237 = vlaneseq
    %v2238 = vshrl.u32 %v2237, 7
    %v2239 = vsub.s32 0, %v2238
    %v2240 = vrot.slane %v2235, %v2239
    %v2242 = vmul.f32 %v2219, %v2240
    %v2243 = vmul.f32 %v2220, %v2240
    %v2244 = vmul.f32 %v2221, %v2240
    %v2245 = vmul.f32 %v2222, %v2240
    %v2246 = vmul.f32 %v2223, %v2240
    %v2247 = vmul.f32 %v2224, %v2240
    %v2248 = vmul.f32 %v2225, %v2240
    %v2249 = vmul.f32 %v2226, %v2240
    %v2250 = vmul.f32 %v2227, %v2240
    %v2251 = vmul.f32 %v2228, %v2240
    %v2252 = vmul.f32 %v2229, %v2240
    %v2253 = vmul.f32 %v2230, %v2240
    %v2254 = vmul.f32 %v2231, %v2240
    %v2255 = vmul.f32 %v2232, %v2240
    %v2256 = vmul.f32 %v2233, %v2240
    %v2257 = vmul.f32 %v2234, %v2240
    %v2258 = vld [vmem:[%s12] sm:$0x1]
    %v2260 = vlaneseq
    %v2261 = vshrl.u32 %v2260, 7
    %v2262 = vsub.s32 0, %v2261
    %v2263 = vrot.slane %v2258, %v2262
    %v2265 = vadd.f32 %v2242, %v2263
    %v2266 = vadd.f32 %v2243, %v2263
    %v2267 = vadd.f32 %v2244, %v2263
    %v2268 = vadd.f32 %v2245, %v2263
    %v2269 = vadd.f32 %v2246, %v2263
    %v2270 = vadd.f32 %v2247, %v2263
    %v2271 = vadd.f32 %v2248, %v2263
    %v2272 = vadd.f32 %v2249, %v2263
    %v2273 = vadd.f32 %v2250, %v2263
    %v2274 = vadd.f32 %v2251, %v2263
    %v2275 = vadd.f32 %v2252, %v2263
    %v2276 = vadd.f32 %v2253, %v2263
    %v2277 = vadd.f32 %v2254, %v2263
    %v2278 = vadd.f32 %v2255, %v2263
    %v2279 = vadd.f32 %v2256, %v2263
    %v2280 = vadd.f32 %v2257, %v2263
    %v2281 = vmax.f32 %v2265, 0.0
    %v2282 = vmax.f32 %v2266, 0.0
    %v2283 = vmax.f32 %v2267, 0.0
    %v2284 = vmax.f32 %v2268, 0.0
    %v2285 = vmax.f32 %v2269, 0.0
    %v2286 = vmax.f32 %v2270, 0.0
    %v2287 = vmax.f32 %v2271, 0.0
    %v2288 = vmax.f32 %v2272, 0.0
    %v2289 = vmax.f32 %v2273, 0.0
    %v2290 = vmax.f32 %v2274, 0.0
    %v2291 = vmax.f32 %v2275, 0.0
    %v2292 = vmax.f32 %v2276, 0.0
    %v2293 = vmax.f32 %v2277, 0.0
    %v2294 = vmax.f32 %v2278, 0.0
    %v2295 = vmax.f32 %v2279, 0.0
    %v2296 = vmax.f32 %v2280, 0.0
    %v2297 = vpack.c.bf16 %v2282, %v2281
    %v2298 = vpack.c.bf16 %v2284, %v2283
    %v2299 = vpack.c.bf16 %v2286, %v2285
    %v2300 = vpack.c.bf16 %v2288, %v2287
    %v2301 = vpack.c.bf16 %v2290, %v2289
    %v2302 = vpack.c.bf16 %v2292, %v2291
    %v2303 = vpack.c.bf16 %v2294, %v2293
    %v2304 = vpack.c.bf16 %v2296, %v2295
    %v2305 = vld [vmem:[#allocation10] sm:$0xf]
    %v2306 = vld [vmem:[#allocation10 + $0x4] sm:$0xf]
    %v2307 = vld [vmem:[#allocation10 + $0x8] sm:$0xf]
    %v2308 = vld [vmem:[#allocation10 + $0xc] sm:$0xf]
    %v2309 = vld [vmem:[#allocation10 + $0x10] sm:$0xf]
    %v2310 = vld [vmem:[#allocation10 + $0x14] sm:$0xf]
    %v2311 = vld [vmem:[#allocation10 + $0x18] sm:$0xf]
    %v2312 = vld [vmem:[#allocation10 + $0x1c] sm:$0xf]
    %v2313 = vld [vmem:[#allocation10 + $0x20] sm:$0xf]
    %v2314 = vld [vmem:[#allocation10 + $0x24] sm:$0xf]
    %v2315 = vld [vmem:[#allocation10 + $0x28] sm:$0xf]
    %v2316 = vld [vmem:[#allocation10 + $0x2c] sm:$0xf]
    %v2317 = vld [vmem:[#allocation10 + $0x30] sm:$0xf]
    %v2318 = vld [vmem:[#allocation10 + $0x34] sm:$0xf]
    %v2319 = vld [vmem:[#allocation10 + $0x38] sm:$0xf]
    %v2320 = vld [vmem:[#allocation10 + $0x3c] sm:$0xf]
    %v2321 = vld [vmem:[%s6] sm:$0x1]
    %v2323 = vlaneseq
    %v2324 = vshrl.u32 %v2323, 7
    %v2325 = vsub.s32 0, %v2324
    %v2326 = vrot.slane %v2321, %v2325
    %v2344 = vunpack.c.l.b16 %v2305
    %v2345 = vunpack.c.l.b16 %v2306
    %v2346 = vunpack.c.l.b16 %v2307
    %v2347 = vunpack.c.l.b16 %v2308
    %v2348 = vunpack.c.l.b16 %v2309
    %v2349 = vunpack.c.l.b16 %v2310
    %v2350 = vunpack.c.l.b16 %v2311
    %v2351 = vunpack.c.l.b16 %v2312
    %v2352 = vunpack.c.l.b16 %v2313
    %v2353 = vunpack.c.l.b16 %v2314
    %v2354 = vunpack.c.l.b16 %v2315
    %v2355 = vunpack.c.l.b16 %v2316
    %v2356 = vunpack.c.l.b16 %v2317
    %v2357 = vunpack.c.l.b16 %v2318
    %v2358 = vunpack.c.l.b16 %v2319
    %v2359 = vunpack.c.l.b16 %v2320
    %v2360 = vpack.c.b16 %v2345, %v2344
    %v2361 = vpack.c.b16 %v2347, %v2346
    %v2362 = vpack.c.b16 %v2349, %v2348
    %v2363 = vpack.c.b16 %v2351, %v2350
    %v2364 = vpack.c.b16 %v2353, %v2352
    %v2365 = vpack.c.b16 %v2355, %v2354
    %v2366 = vpack.c.b16 %v2357, %v2356
    %v2367 = vpack.c.b16 %v2359, %v2358
    %2376 = vmatprep.subr.bf16.mxu0 0
    %2377 = vmatpush1.bf16.msra.mxu0 %v2360
    %2378 = vmatprep.subr.bf16.mxu0 0
    %2379 = vmatpush1.bf16.msra.mxu0 %v2361
    %2380 = vmatprep.subr.bf16.mxu0 0
    %2381 = vmatpush1.bf16.msra.mxu0 %v2362
    %2382 = vmatprep.subr.bf16.mxu0 0
    %2383 = vmatpush1.bf16.msra.mxu0 %v2363
    %2384 = vmatprep.subr.bf16.mxu0 0
    %2385 = vmatpush1.bf16.msra.mxu0 %v2364
    %2386 = vmatprep.subr.bf16.mxu0 0
    %2387 = vmatpush1.bf16.msra.mxu0 %v2365
    %2388 = vmatprep.subr.bf16.mxu0 0
    %2389 = vmatpush1.bf16.msra.mxu0 %v2366
    %2390 = vmatprep.subr.bf16.mxu0 0
    %2391 = vmatpush1.bf16.msra.mxu0 %v2367
    %2392 = vmatprep.subr.bf16.mxu0 0
    %2393 = vmatpush1.bf16.msra.mxu0 0
    %2394 = vmatprep.subr.bf16.mxu0 0
    %2395 = vmatpush1.bf16.msra.mxu0 0
    %2396 = vmatprep.subr.bf16.mxu0 0
    %2397 = vmatpush1.bf16.msra.mxu0 0
    %2398 = vmatprep.subr.bf16.mxu0 0
    %2399 = vmatpush1.bf16.msra.mxu0 0
    %2400 = vmatprep.subr.bf16.mxu0 0
    %2401 = vmatpush1.bf16.msra.mxu0 0
    %2402 = vmatprep.subr.bf16.mxu0 0
    %2403 = vmatpush1.bf16.msra.mxu0 0
    %2404 = vmatprep.subr.bf16.mxu0 0
    %2405 = vmatpush1.bf16.msra.mxu0 0
    %2406 = vmatprep.subr.bf16.mxu0 0
    %2407 = vmatpush1.bf16.msra.mxu0 0
    %2408 = vmatprep.mubr.bf16.mxu0 0
    %2409 = vmatmul.mubr.bf16.gmra.mrb[0].mxu0 %v2297
    %v2410 = vpop.f32.mrb[0].mxu0
    %v2411 = vadd.f32 %v2326, %v2410
    %v2412 = vpop.f32.mrb[0].mxu0
    %v2413 = vpop.f32.mrb[0].mxu0
    %v2414 = vadd.f32 %v2326, %v2413
    %v2415 = vpop.f32.mrb[0].mxu0
    %2416 = vmatprep.mubr.bf16.mxu0 0
    %2417 = vmatmul.mubr.bf16.gmra.mrb[0].mxu0 %v2298
    %v2418 = vpop.f32.mrb[0].mxu0
    %v2419 = vadd.f32 %v2326, %v2418
    %v2420 = vpop.f32.mrb[0].mxu0
    %v2421 = vpop.f32.mrb[0].mxu0
    %v2422 = vadd.f32 %v2326, %v2421
    %v2423 = vpop.f32.mrb[0].mxu0
    %2424 = vmatprep.mubr.bf16.mxu0 0
    %2425 = vmatmul.mubr.bf16.gmra.mrb[0].mxu0 %v2299
    %v2426 = vpop.f32.mrb[0].mxu0
    %v2427 = vadd.f32 %v2326, %v2426
    %v2428 = vpop.f32.mrb[0].mxu0
    %v2429 = vpop.f32.mrb[0].mxu0
    %v2430 = vadd.f32 %v2326, %v2429
    %v2431 = vpop.f32.mrb[0].mxu0
    %2432 = vmatprep.mubr.bf16.mxu0 0
    %2433 = vmatmul.mubr.bf16.gmra.mrb[0].mxu0 %v2300
    %v2434 = vpop.f32.mrb[0].mxu0
    %v2435 = vadd.f32 %v2326, %v2434
    %v2436 = vpop.f32.mrb[0].mxu0
    %v2437 = vpop.f32.mrb[0].mxu0
    %v2438 = vadd.f32 %v2326, %v2437
    %v2439 = vpop.f32.mrb[0].mxu0
    %2440 = vmatprep.mubr.bf16.mxu0 0
    %2441 = vmatmul.mubr.bf16.gmra.mrb[0].mxu0 %v2301
    %v2442 = vpop.f32.mrb[0].mxu0
    %v2443 = vadd.f32 %v2326, %v2442
    %v2444 = vpop.f32.mrb[0].mxu0
    %v2445 = vpop.f32.mrb[0].mxu0
    %v2446 = vadd.f32 %v2326, %v2445
    %v2447 = vpop.f32.mrb[0].mxu0
    %2448 = vmatprep.mubr.bf16.mxu0 0
    %2449 = vmatmul.mubr.bf16.gmra.mrb[0].mxu0 %v2302
    %v2450 = vpop.f32.mrb[0].mxu0
    %v2451 = vadd.f32 %v2326, %v2450
    %v2452 = vpop.f32.mrb[0].mxu0
    %v2453 = vpop.f32.mrb[0].mxu0
    %v2454 = vadd.f32 %v2326, %v2453
    %v2455 = vpop.f32.mrb[0].mxu0
    %2456 = vmatprep.mubr.bf16.mxu0 0
    %2457 = vmatmul.mubr.bf16.gmra.mrb[0].mxu0 %v2303
    %v2458 = vpop.f32.mrb[0].mxu0
    %v2459 = vadd.f32 %v2326, %v2458
    %v2460 = vpop.f32.mrb[0].mxu0
    %v2461 = vpop.f32.mrb[0].mxu0
    %v2462 = vadd.f32 %v2326, %v2461
    %v2463 = vpop.f32.mrb[0].mxu0
    %2464 = vmatprep.mubr.bf16.mxu0 0
    %2465 = vmatmul.mubr.bf16.gmra.mrb[0].mxu0 %v2304
    %v2466 = vpop.f32.mrb[0].mxu0
    %v2467 = vadd.f32 %v2326, %v2466
    %v2468 = vpop.f32.mrb[0].mxu0
    %v2469 = vpop.f32.mrb[0].mxu0
    %v2470 = vadd.f32 %v2326, %v2469
    %v2471 = vpop.f32.mrb[0].mxu0
    %2472 = vdwg.mxu0
    %v2473 = vadd.f32 %v2411, %v2414
    %v2474 = vadd.f32 %v2473, %v2419
    %v2475 = vadd.f32 %v2474, %v2422
    %v2476 = vadd.f32 %v2475, %v2427
    %v2477 = vadd.f32 %v2476, %v2430
    %v2478 = vadd.f32 %v2477, %v2435
    %v2479 = vadd.f32 %v2478, %v2438
    %v2480 = vadd.f32 %v2479, %v2443
    %v2481 = vadd.f32 %v2480, %v2446
    %v2482 = vadd.f32 %v2481, %v2451
    %v2483 = vadd.f32 %v2482, %v2454
    %v2484 = vadd.f32 %v2483, %v2459
    %v2485 = vadd.f32 %v2484, %v2462
    %v2486 = vadd.f32 %v2485, %v2467
    %v2487 = vadd.f32 %v2486, %v2470
    %v2488 = vrot.slane %v2487, 4
    %v2489 = vadd.f32 %v2487, %v2488
    %v2490 = vrot.slane %v2489, 2
    %v2491 = vadd.f32 %v2489, %v2490
    %v2492 = vrot.slane %v2491, 1
    %v2493 = vadd.f32 %v2491, %v2492
    %v2494 = vmul.f32 %v2493, %v518
    %v2495 = vsub.f32 %v2411, %v2494
    %v2496 = vsub.f32 %v2414, %v2494
    %v2497 = vsub.f32 %v2419, %v2494
    %v2498 = vsub.f32 %v2422, %v2494
    %v2499 = vsub.f32 %v2427, %v2494
    %v2500 = vsub.f32 %v2430, %v2494
    %v2501 = vsub.f32 %v2435, %v2494
    %v2502 = vsub.f32 %v2438, %v2494
    %v2503 = vsub.f32 %v2443, %v2494
    %v2504 = vsub.f32 %v2446, %v2494
    %v2505 = vsub.f32 %v2451, %v2494
    %v2506 = vsub.f32 %v2454, %v2494
    %v2507 = vsub.f32 %v2459, %v2494
    %v2508 = vsub.f32 %v2462, %v2494
    %v2509 = vsub.f32 %v2467, %v2494
    %v2510 = vsub.f32 %v2470, %v2494
    %v2511 = vmul.f32 %v2495, %v2495
    %v2512 = vmul.f32 %v2496, %v2496
    %v2513 = vmul.f32 %v2497, %v2497
    %v2514 = vmul.f32 %v2498, %v2498
    %v2515 = vmul.f32 %v2499, %v2499
    %v2516 = vmul.f32 %v2500, %v2500
    %v2517 = vmul.f32 %v2501, %v2501
    %v2518 = vmul.f32 %v2502, %v2502
    %v2519 = vmul.f32 %v2503, %v2503
    %v2520 = vmul.f32 %v2504, %v2504
    %v2521 = vmul.f32 %v2505, %v2505
    %v2522 = vmul.f32 %v2506, %v2506
    %v2523 = vmul.f32 %v2507, %v2507
    %v2524 = vmul.f32 %v2508, %v2508
    %v2525 = vmul.f32 %v2509, %v2509
    %v2526 = vmul.f32 %v2510, %v2510
    %v2527 = vadd.f32 %v2511, %v2512
    %v2528 = vadd.f32 %v2527, %v2513
    %v2529 = vadd.f32 %v2528, %v2514
    %v2530 = vadd.f32 %v2529, %v2515
    %v2531 = vadd.f32 %v2530, %v2516
    %v2532 = vadd.f32 %v2531, %v2517
    %v2533 = vadd.f32 %v2532, %v2518
    %v2534 = vadd.f32 %v2533, %v2519
    %v2535 = vadd.f32 %v2534, %v2520
    %v2536 = vadd.f32 %v2535, %v2521
    %v2537 = vadd.f32 %v2536, %v2522
    %v2538 = vadd.f32 %v2537, %v2523
    %v2539 = vadd.f32 %v2538, %v2524
    %v2540 = vadd.f32 %v2539, %v2525
    %v2541 = vadd.f32 %v2540, %v2526
    %v2542 = vrot.slane %v2541, 4
    %v2543 = vadd.f32 %v2541, %v2542
    %v2544 = vrot.slane %v2543, 2
    %v2545 = vadd.f32 %v2543, %v2544
    %v2546 = vrot.slane %v2545, 1
    %v2547 = vadd.f32 %v2545, %v2546
    %v2548 = vmul.f32 %v2547, %v518
    %v2549 = vadd.f32 %v2548, 1e-05
    %v2550 = vrsqrt.pop %v2549
    %v2551 = vmul.f32 %v2495, %v2550
    %v2552 = vmul.f32 %v2496, %v2550
    %v2553 = vmul.f32 %v2497, %v2550
    %v2554 = vmul.f32 %v2498, %v2550
    %v2555 = vmul.f32 %v2499, %v2550
    %v2556 = vmul.f32 %v2500, %v2550
    %v2557 = vmul.f32 %v2501, %v2550
    %v2558 = vmul.f32 %v2502, %v2550
    %v2559 = vmul.f32 %v2503, %v2550
    %v2560 = vmul.f32 %v2504, %v2550
    %v2561 = vmul.f32 %v2505, %v2550
    %v2562 = vmul.f32 %v2506, %v2550
    %v2563 = vmul.f32 %v2507, %v2550
    %v2564 = vmul.f32 %v2508, %v2550
    %v2565 = vmul.f32 %v2509, %v2550
    %v2566 = vmul.f32 %v2510, %v2550
    %v2567 = vld [vmem:[%s13] sm:$0x1]
    %v2569 = vlaneseq
    %v2570 = vshrl.u32 %v2569, 7
    %v2571 = vsub.s32 0, %v2570
    %v2572 = vrot.slane %v2567, %v2571
    %v2574 = vmul.f32 %v2551, %v2572
    %v2575 = vmul.f32 %v2552, %v2572
    %v2576 = vmul.f32 %v2553, %v2572
    %v2577 = vmul.f32 %v2554, %v2572
    %v2578 = vmul.f32 %v2555, %v2572
    %v2579 = vmul.f32 %v2556, %v2572
    %v2580 = vmul.f32 %v2557, %v2572
    %v2581 = vmul.f32 %v2558, %v2572
    %v2582 = vmul.f32 %v2559, %v2572
    %v2583 = vmul.f32 %v2560, %v2572
    %v2584 = vmul.f32 %v2561, %v2572
    %v2585 = vmul.f32 %v2562, %v2572
    %v2586 = vmul.f32 %v2563, %v2572
    %v2587 = vmul.f32 %v2564, %v2572
    %v2588 = vmul.f32 %v2565, %v2572
    %v2589 = vmul.f32 %v2566, %v2572
    %v2590 = vld [vmem:[%s14] sm:$0x1]
    %v2592 = vlaneseq
    %v2593 = vshrl.u32 %v2592, 7
    %v2594 = vsub.s32 0, %v2593
    %v2595 = vrot.slane %v2590, %v2594
    %v2597 = vadd.f32 %v2574, %v2595
    %v2598 = vadd.f32 %v2575, %v2595
    %v2599 = vadd.f32 %v2576, %v2595
    %v2600 = vadd.f32 %v2577, %v2595
    %v2601 = vadd.f32 %v2578, %v2595
    %v2602 = vadd.f32 %v2579, %v2595
    %v2603 = vadd.f32 %v2580, %v2595
    %v2604 = vadd.f32 %v2581, %v2595
    %v2605 = vadd.f32 %v2582, %v2595
    %v2606 = vadd.f32 %v2583, %v2595
    %v2607 = vadd.f32 %v2584, %v2595
    %v2608 = vadd.f32 %v2585, %v2595
    %v2609 = vadd.f32 %v2586, %v2595
    %v2610 = vadd.f32 %v2587, %v2595
    %v2611 = vadd.f32 %v2588, %v2595
    %v2612 = vadd.f32 %v2589, %v2595
    %v2613 = vld [vmem:[#allocation12] sm:$0xf]
    %v2614 = vld [vmem:[#allocation12 + $0x4] sm:$0xf]
    %v2615 = vld [vmem:[#allocation12 + $0x8] sm:$0xf]
    %v2616 = vld [vmem:[#allocation12 + $0xc] sm:$0xf]
    %v2617 = vld [vmem:[#allocation12 + $0x10] sm:$0xf]
    %v2618 = vld [vmem:[#allocation12 + $0x14] sm:$0xf]
    %v2619 = vld [vmem:[#allocation12 + $0x18] sm:$0xf]
    %v2620 = vld [vmem:[#allocation12 + $0x1c] sm:$0xf]
    %v2621 = vld [vmem:[#allocation12 + $0x20] sm:$0xf]
    %v2622 = vld [vmem:[#allocation12 + $0x24] sm:$0xf]
    %v2623 = vld [vmem:[#allocation12 + $0x28] sm:$0xf]
    %v2624 = vld [vmem:[#allocation12 + $0x2c] sm:$0xf]
    %v2625 = vld [vmem:[#allocation12 + $0x30] sm:$0xf]
    %v2626 = vld [vmem:[#allocation12 + $0x34] sm:$0xf]
    %v2627 = vld [vmem:[#allocation12 + $0x38] sm:$0xf]
    %v2628 = vld [vmem:[#allocation12 + $0x3c] sm:$0xf]
    %v2629 = vld [vmem:[%s8] sm:$0x1]
    %v2631 = vlaneseq
    %v2632 = vshrl.u32 %v2631, 7
    %v2633 = vsub.s32 0, %v2632
    %v2634 = vrot.slane %v2629, %v2633
    %v2652 = vunpack.c.l.b16 %v2613
    %v2653 = vunpack.c.l.b16 %v2614
    %v2654 = vunpack.c.l.b16 %v2615
    %v2655 = vunpack.c.l.b16 %v2616
    %v2656 = vunpack.c.l.b16 %v2617
    %v2657 = vunpack.c.l.b16 %v2618
    %v2658 = vunpack.c.l.b16 %v2619
    %v2659 = vunpack.c.l.b16 %v2620
    %v2660 = vunpack.c.l.b16 %v2621
    %v2661 = vunpack.c.l.b16 %v2622
    %v2662 = vunpack.c.l.b16 %v2623
    %v2663 = vunpack.c.l.b16 %v2624
    %v2664 = vunpack.c.l.b16 %v2625
    %v2665 = vunpack.c.l.b16 %v2626
    %v2666 = vunpack.c.l.b16 %v2627
    %v2667 = vunpack.c.l.b16 %v2628
    %v2668 = vpack.c.b16 %v2653, %v2652
    %v2669 = vpack.c.b16 %v2655, %v2654
    %v2670 = vpack.c.b16 %v2657, %v2656
    %v2671 = vpack.c.b16 %v2659, %v2658
    %v2672 = vpack.c.b16 %v2661, %v2660
    %v2673 = vpack.c.b16 %v2663, %v2662
    %v2674 = vpack.c.b16 %v2665, %v2664
    %v2675 = vpack.c.b16 %v2667, %v2666
    %2684 = vmatprep.subr.bf16.mxu0 0
    %2685 = vmatpush1.bf16.msra.mxu0 %v2668
    %2686 = vmatprep.subr.bf16.mxu0 0
    %2687 = vmatpush1.bf16.msra.mxu0 %v2669
    %2688 = vmatprep.subr.bf16.mxu0 0
    %2689 = vmatpush1.bf16.msra.mxu0 %v2670
    %2690 = vmatprep.subr.bf16.mxu0 0
    %2691 = vmatpush1.bf16.msra.mxu0 %v2671
    %2692 = vmatprep.subr.bf16.mxu0 0
    %2693 = vmatpush1.bf16.msra.mxu0 %v2672
    %2694 = vmatprep.subr.bf16.mxu0 0
    %2695 = vmatpush1.bf16.msra.mxu0 %v2673
    %2696 = vmatprep.subr.bf16.mxu0 0
    %2697 = vmatpush1.bf16.msra.mxu0 %v2674
    %2698 = vmatprep.subr.bf16.mxu0 0
    %2699 = vmatpush1.bf16.msra.mxu0 %v2675
    %2700 = vmatprep.subr.bf16.mxu0 0
    %2701 = vmatpush1.bf16.msra.mxu0 0
    %2702 = vmatprep.subr.bf16.mxu0 0
    %2703 = vmatpush1.bf16.msra.mxu0 0
    %2704 = vmatprep.subr.bf16.mxu0 0
    %2705 = vmatpush1.bf16.msra.mxu0 0
    %2706 = vmatprep.subr.bf16.mxu0 0
    %2707 = vmatpush1.bf16.msra.mxu0 0
    %2708 = vmatprep.subr.bf16.mxu0 0
    %2709 = vmatpush1.bf16.msra.mxu0 0
    %2710 = vmatprep.subr.bf16.mxu0 0
    %2711 = vmatpush1.bf16.msra.mxu0 0
    %2712 = vmatprep.subr.bf16.mxu0 0
    %2713 = vmatpush1.bf16.msra.mxu0 0
    %2714 = vmatprep.subr.bf16.mxu0 0
    %2715 = vmatpush1.bf16.msra.mxu0 0
    %2716 = vmatprep.mubr.bf16.mxu0 0
    %2717 = vmatmul.mubr.bf16.gmra.mrb[0].mxu0 %v321
    %v2718 = vpop.f32.mrb[0].mxu0
    %v2719 = vadd.f32 %v2634, %v2718
    %v2720 = vpop.f32.mrb[0].mxu0
    %v2721 = vpop.f32.mrb[0].mxu0
    %v2722 = vadd.f32 %v2634, %v2721
    %v2723 = vpop.f32.mrb[0].mxu0
    %2724 = vmatprep.mubr.bf16.mxu0 0
    %2725 = vmatmul.mubr.bf16.gmra.mrb[0].mxu0 %v322
    %v2726 = vpop.f32.mrb[0].mxu0
    %v2727 = vadd.f32 %v2634, %v2726
    %v2728 = vpop.f32.mrb[0].mxu0
    %v2729 = vpop.f32.mrb[0].mxu0
    %v2730 = vadd.f32 %v2634, %v2729
    %v2731 = vpop.f32.mrb[0].mxu0
    %2732 = vmatprep.mubr.bf16.mxu0 0
    %2733 = vmatmul.mubr.bf16.gmra.mrb[0].mxu0 %v323
    %v2734 = vpop.f32.mrb[0].mxu0
    %v2735 = vadd.f32 %v2634, %v2734
    %v2736 = vpop.f32.mrb[0].mxu0
    %v2737 = vpop.f32.mrb[0].mxu0
    %v2738 = vadd.f32 %v2634, %v2737
    %v2739 = vpop.f32.mrb[0].mxu0
    %2740 = vmatprep.mubr.bf16.mxu0 0
    %2741 = vmatmul.mubr.bf16.gmra.mrb[0].mxu0 %v324
    %v2742 = vpop.f32.mrb[0].mxu0
    %v2743 = vadd.f32 %v2634, %v2742
    %v2744 = vpop.f32.mrb[0].mxu0
    %v2745 = vpop.f32.mrb[0].mxu0
    %v2746 = vadd.f32 %v2634, %v2745
    %v2747 = vpop.f32.mrb[0].mxu0
    %2748 = vmatprep.mubr.bf16.mxu0 0
    %2749 = vmatmul.mubr.bf16.gmra.mrb[0].mxu0 %v325
    %v2750 = vpop.f32.mrb[0].mxu0
    %v2751 = vadd.f32 %v2634, %v2750
    %v2752 = vpop.f32.mrb[0].mxu0
    %v2753 = vpop.f32.mrb[0].mxu0
    %v2754 = vadd.f32 %v2634, %v2753
    %v2755 = vpop.f32.mrb[0].mxu0
    %2756 = vmatprep.mubr.bf16.mxu0 0
    %2757 = vmatmul.mubr.bf16.gmra.mrb[0].mxu0 %v326
    %v2758 = vpop.f32.mrb[0].mxu0
    %v2759 = vadd.f32 %v2634, %v2758
    %v2760 = vpop.f32.mrb[0].mxu0
    %v2761 = vpop.f32.mrb[0].mxu0
    %v2762 = vadd.f32 %v2634, %v2761
    %v2763 = vpop.f32.mrb[0].mxu0
    %2764 = vmatprep.mubr.bf16.mxu0 0
    %2765 = vmatmul.mubr.bf16.gmra.mrb[0].mxu0 %v327
    %v2766 = vpop.f32.mrb[0].mxu0
    %v2767 = vadd.f32 %v2634, %v2766
    %v2768 = vpop.f32.mrb[0].mxu0
    %v2769 = vpop.f32.mrb[0].mxu0
    %v2770 = vadd.f32 %v2634, %v2769
    %v2771 = vpop.f32.mrb[0].mxu0
    %2772 = vmatprep.mubr.bf16.mxu0 0
    %2773 = vmatmul.mubr.bf16.gmra.mrb[0].mxu0 %v328
    %v2774 = vpop.f32.mrb[0].mxu0
    %v2775 = vadd.f32 %v2634, %v2774
    %v2776 = vpop.f32.mrb[0].mxu0
    %v2777 = vpop.f32.mrb[0].mxu0
    %v2778 = vadd.f32 %v2634, %v2777
    %v2779 = vpop.f32.mrb[0].mxu0
    %2780 = vdwg.mxu0
    %v2781 = vadd.f32 %v2719, %v2722
    %v2782 = vadd.f32 %v2781, %v2727
    %v2783 = vadd.f32 %v2782, %v2730
    %v2784 = vadd.f32 %v2783, %v2735
    %v2785 = vadd.f32 %v2784, %v2738
    %v2786 = vadd.f32 %v2785, %v2743
    %v2787 = vadd.f32 %v2786, %v2746
    %v2788 = vadd.f32 %v2787, %v2751
    %v2789 = vadd.f32 %v2788, %v2754
    %v2790 = vadd.f32 %v2789, %v2759
    %v2791 = vadd.f32 %v2790, %v2762
    %v2792 = vadd.f32 %v2791, %v2767
    %v2793 = vadd.f32 %v2792, %v2770
    %v2794 = vadd.f32 %v2793, %v2775
    %v2795 = vadd.f32 %v2794, %v2778
    %v2796 = vrot.slane %v2795, 4
    %v2797 = vadd.f32 %v2795, %v2796
    %v2798 = vrot.slane %v2797, 2
    %v2799 = vadd.f32 %v2797, %v2798
    %v2800 = vrot.slane %v2799, 1
    %v2801 = vadd.f32 %v2799, %v2800
    %v2802 = vmul.f32 %v2801, %v518
    %v2803 = vsub.f32 %v2719, %v2802
    %v2804 = vsub.f32 %v2722, %v2802
    %v2805 = vsub.f32 %v2727, %v2802
    %v2806 = vsub.f32 %v2730, %v2802
    %v2807 = vsub.f32 %v2735, %v2802
    %v2808 = vsub.f32 %v2738, %v2802
    %v2809 = vsub.f32 %v2743, %v2802
    %v2810 = vsub.f32 %v2746, %v2802
    %v2811 = vsub.f32 %v2751, %v2802
    %v2812 = vsub.f32 %v2754, %v2802
    %v2813 = vsub.f32 %v2759, %v2802
    %v2814 = vsub.f32 %v2762, %v2802
    %v2815 = vsub.f32 %v2767, %v2802
    %v2816 = vsub.f32 %v2770, %v2802
    %v2817 = vsub.f32 %v2775, %v2802
    %v2818 = vsub.f32 %v2778, %v2802
    %v2819 = vmul.f32 %v2803, %v2803
    %v2820 = vmul.f32 %v2804, %v2804
    %v2821 = vmul.f32 %v2805, %v2805
    %v2822 = vmul.f32 %v2806, %v2806
    %v2823 = vmul.f32 %v2807, %v2807
    %v2824 = vmul.f32 %v2808, %v2808
    %v2825 = vmul.f32 %v2809, %v2809
    %v2826 = vmul.f32 %v2810, %v2810
    %v2827 = vmul.f32 %v2811, %v2811
    %v2828 = vmul.f32 %v2812, %v2812
    %v2829 = vmul.f32 %v2813, %v2813
    %v2830 = vmul.f32 %v2814, %v2814
    %v2831 = vmul.f32 %v2815, %v2815
    %v2832 = vmul.f32 %v2816, %v2816
    %v2833 = vmul.f32 %v2817, %v2817
    %v2834 = vmul.f32 %v2818, %v2818
    %v2835 = vadd.f32 %v2819, %v2820
    %v2836 = vadd.f32 %v2835, %v2821
    %v2837 = vadd.f32 %v2836, %v2822
    %v2838 = vadd.f32 %v2837, %v2823
    %v2839 = vadd.f32 %v2838, %v2824
    %v2840 = vadd.f32 %v2839, %v2825
    %v2841 = vadd.f32 %v2840, %v2826
    %v2842 = vadd.f32 %v2841, %v2827
    %v2843 = vadd.f32 %v2842, %v2828
    %v2844 = vadd.f32 %v2843, %v2829
    %v2845 = vadd.f32 %v2844, %v2830
    %v2846 = vadd.f32 %v2845, %v2831
    %v2847 = vadd.f32 %v2846, %v2832
    %v2848 = vadd.f32 %v2847, %v2833
    %v2849 = vadd.f32 %v2848, %v2834
    %v2850 = vrot.slane %v2849, 4
    %v2851 = vadd.f32 %v2849, %v2850
    %v2852 = vrot.slane %v2851, 2
    %v2853 = vadd.f32 %v2851, %v2852
    %v2854 = vrot.slane %v2853, 1
    %v2855 = vadd.f32 %v2853, %v2854
    %v2856 = vmul.f32 %v2855, %v518
    %v2857 = vadd.f32 %v2856, 1e-05
    %v2858 = vrsqrt.pop %v2857
    %v2859 = vmul.f32 %v2803, %v2858
    %v2860 = vmul.f32 %v2804, %v2858
    %v2861 = vmul.f32 %v2805, %v2858
    %v2862 = vmul.f32 %v2806, %v2858
    %v2863 = vmul.f32 %v2807, %v2858
    %v2864 = vmul.f32 %v2808, %v2858
    %v2865 = vmul.f32 %v2809, %v2858
    %v2866 = vmul.f32 %v2810, %v2858
    %v2867 = vmul.f32 %v2811, %v2858
    %v2868 = vmul.f32 %v2812, %v2858
    %v2869 = vmul.f32 %v2813, %v2858
    %v2870 = vmul.f32 %v2814, %v2858
    %v2871 = vmul.f32 %v2815, %v2858
    %v2872 = vmul.f32 %v2816, %v2858
    %v2873 = vmul.f32 %v2817, %v2858
    %v2874 = vmul.f32 %v2818, %v2858
    %v2875 = vld [vmem:[%s15] sm:$0x1]
    %v2877 = vlaneseq
    %v2878 = vshrl.u32 %v2877, 7
    %v2879 = vsub.s32 0, %v2878
    %v2880 = vrot.slane %v2875, %v2879
    %v2882 = vmul.f32 %v2859, %v2880
    %v2883 = vmul.f32 %v2860, %v2880
    %v2884 = vmul.f32 %v2861, %v2880
    %v2885 = vmul.f32 %v2862, %v2880
    %v2886 = vmul.f32 %v2863, %v2880
    %v2887 = vmul.f32 %v2864, %v2880
    %v2888 = vmul.f32 %v2865, %v2880
    %v2889 = vmul.f32 %v2866, %v2880
    %v2890 = vmul.f32 %v2867, %v2880
    %v2891 = vmul.f32 %v2868, %v2880
    %v2892 = vmul.f32 %v2869, %v2880
    %v2893 = vmul.f32 %v2870, %v2880
    %v2894 = vmul.f32 %v2871, %v2880
    %v2895 = vmul.f32 %v2872, %v2880
    %v2896 = vmul.f32 %v2873, %v2880
    %v2897 = vmul.f32 %v2874, %v2880
    %v2898 = vld [vmem:[%s16] sm:$0x1]
    %v2900 = vlaneseq
    %v2901 = vshrl.u32 %v2900, 7
    %v2902 = vsub.s32 0, %v2901
    %v2903 = vrot.slane %v2898, %v2902
    %v2905 = vadd.f32 %v2882, %v2903
    %v2906 = vadd.f32 %v2883, %v2903
    %v2907 = vadd.f32 %v2884, %v2903
    %v2908 = vadd.f32 %v2885, %v2903
    %v2909 = vadd.f32 %v2886, %v2903
    %v2910 = vadd.f32 %v2887, %v2903
    %v2911 = vadd.f32 %v2888, %v2903
    %v2912 = vadd.f32 %v2889, %v2903
    %v2913 = vadd.f32 %v2890, %v2903
    %v2914 = vadd.f32 %v2891, %v2903
    %v2915 = vadd.f32 %v2892, %v2903
    %v2916 = vadd.f32 %v2893, %v2903
    %v2917 = vadd.f32 %v2894, %v2903
    %v2918 = vadd.f32 %v2895, %v2903
    %v2919 = vadd.f32 %v2896, %v2903
    %v2920 = vadd.f32 %v2897, %v2903
    %v2921 = vadd.f32 %v2597, %v2905
    %v2922 = vadd.f32 %v2598, %v2906
    %v2923 = vadd.f32 %v2599, %v2907
    %v2924 = vadd.f32 %v2600, %v2908
    %v2925 = vadd.f32 %v2601, %v2909
    %v2926 = vadd.f32 %v2602, %v2910
    %v2927 = vadd.f32 %v2603, %v2911
    %v2928 = vadd.f32 %v2604, %v2912
    %v2929 = vadd.f32 %v2605, %v2913
    %v2930 = vadd.f32 %v2606, %v2914
    %v2931 = vadd.f32 %v2607, %v2915
    %v2932 = vadd.f32 %v2608, %v2916
    %v2933 = vadd.f32 %v2609, %v2917
    %v2934 = vadd.f32 %v2610, %v2918
    %v2935 = vadd.f32 %v2611, %v2919
    %v2936 = vadd.f32 %v2612, %v2920
    %v2937 = vmax.f32 %v2921, 0.0
    %v2938 = vmax.f32 %v2922, 0.0
    %v2939 = vmax.f32 %v2923, 0.0
    %v2940 = vmax.f32 %v2924, 0.0
    %v2941 = vmax.f32 %v2925, 0.0
    %v2942 = vmax.f32 %v2926, 0.0
    %v2943 = vmax.f32 %v2927, 0.0
    %v2944 = vmax.f32 %v2928, 0.0
    %v2945 = vmax.f32 %v2929, 0.0
    %v2946 = vmax.f32 %v2930, 0.0
    %v2947 = vmax.f32 %v2931, 0.0
    %v2948 = vmax.f32 %v2932, 0.0
    %v2949 = vmax.f32 %v2933, 0.0
    %v2950 = vmax.f32 %v2934, 0.0
    %v2951 = vmax.f32 %v2935, 0.0
    %v2952 = vmax.f32 %v2936, 0.0
    %2953 = vst [vmem:[#allocation13] sm:$0xff] %v2937
    %2954 = vst [vmem:[#allocation13 + $0x8] sm:$0xff] %v2938
    %2955 = vst [vmem:[#allocation13 + $0x10] sm:$0xff] %v2939
    %2956 = vst [vmem:[#allocation13 + $0x18] sm:$0xff] %v2940
    %2957 = vst [vmem:[#allocation13 + $0x20] sm:$0xff] %v2941
    %2958 = vst [vmem:[#allocation13 + $0x28] sm:$0xff] %v2942
    %2959 = vst [vmem:[#allocation13 + $0x30] sm:$0xff] %v2943
    %2960 = vst [vmem:[#allocation13 + $0x38] sm:$0xff] %v2944
    %2961 = vst [vmem:[#allocation13 + $0x40] sm:$0xff] %v2945
    %2962 = vst [vmem:[#allocation13 + $0x48] sm:$0xff] %v2946
    %2963 = vst [vmem:[#allocation13 + $0x50] sm:$0xff] %v2947
    %2964 = vst [vmem:[#allocation13 + $0x58] sm:$0xff] %v2948
    %2965 = vst [vmem:[#allocation13 + $0x60] sm:$0xff] %v2949
    %2966 = vst [vmem:[#allocation13 + $0x68] sm:$0xff] %v2950
    %2967 = vst [vmem:[#allocation13 + $0x70] sm:$0xff] %v2951
    %2968 = vst [vmem:[#allocation13 + $0x78] sm:$0xff] %v2952
    // Predicated region
    $region90: #{tpu_custom_call.1} parent=1 // pred_check
      _
    $region91: #{tpu_custom_call.1} parent=1 // pred_check_branch
      %2970 = sbr.rel (0) target = $region93
    $region92: #{tpu_custom_call.1} parent=1 // pred_region
      %s2972 = ssub.s32 2048, 2048
      %2973 = vsyncadd [#allocation6], %s2972
      %s2974 = sshll.u32 [#allocation13], 4
      %s2975 = int_to_ptr.vmem [resolvable:$true] %s2974
      %2980 = dma.vmem_to_hbm [thread:$0]  %s2975, 2048, %s17, [#allocation6], 128, 128, 8
    $region93: #{tpu_custom_call.1} parent=1 // pred_fallthru
      _
    // Predicated region
    $region94: #{tpu_custom_call.1} parent=1 // pred_check
      _
    $region95: #{tpu_custom_call.1} parent=1 // pred_check_branch
      %2982 = sbr.rel (0) target = $region97
    $region96: #{tpu_custom_call.1} parent=1 // pred_region
      %2983 = dma.done [#allocation6], 2048
    $region97: #{tpu_custom_call.1} parent=1 // pred_fallthru
      _
    %2984 = vsyncpa [#allocation5], 1
    %2985 = vsyncpa [#allocation8], 1
    %2986 = vsyncpa [#allocation11], 1
    %2987 = vsyncpa [#allocation6], 1

</llo_original>
